<compile_context>
chip_gen: v7x
topology: tpu7x:2x2x1
jax: 0.10.0
libtpu: 0.0.40
codegen_flags: <defaults>
</compile_context>

<pallas_src>
import functools

import jax
import jax.numpy as jnp
from jax import lax
from jax.experimental import pallas as pl
from jax.experimental.pallas import tpu as pltpu

HID = 32          # hid_dim
N_HEADS = 4       # n_heads
PF = 64           # pf_dim
EPS = 1e-5        # nn.LayerNorm default eps
NEG = -1e10       # masked_fill value


# ------------------------------ kernel ------------------------------------- #
def _layernorm(y, g, b):
    mean = jnp.mean(y, axis=-1, keepdims=True)
    var = jnp.mean((y - mean) ** 2, axis=-1, keepdims=True)   # biased, like torch
    return (y - mean) * lax.rsqrt(var + EPS) * g + b


def _attention(q, k, v, mask_add, wo, bo, *, n_heads):
    """q,k,v: (R, H) with R = B*S; mask_add: (R, R) additive block-diag mask."""
    R, H = q.shape
    hd = H // n_heads
    inv_scale = jnp.float32(1.0 / (hd ** 0.5))
    ctx_heads = []
    # Static unroll over heads with contiguous hd-wide column slices — no
    # (L, nh, hd) reshape/transpose round-trips (avoids XLU relayouts).
    for h in range(n_heads):
        lo = h * hd
        qh = q[:, lo:lo + hd]
        kh = k[:, lo:lo + hd]
        vh = v[:, lo:lo + hd]
        e = lax.dot_general(qh, kh, (((1,), (1,)), ((), ())),
                            preferred_element_type=jnp.float32)   # (R, R)
        e = e * inv_scale + mask_add
        e = e - jnp.max(e, axis=-1, keepdims=True)
        p = jnp.exp(e)
        inv_den = pl.reciprocal(jnp.sum(p, axis=-1, keepdims=True), approx=False)
        a = p * inv_den                                           # softmax (dropout=id)
        ctx_heads.append(jnp.dot(a, vh, preferred_element_type=jnp.float32))
    ctx = jnp.concatenate(ctx_heads, axis=-1)                     # (R, H)
    return jnp.dot(ctx, wo, preferred_element_type=jnp.float32) + bo


def decoder_layer_kernel(x_ref, kv_ref, smask_ref, cmask_ref,
                         wqkv_s_ref, bqkv_s_ref, wkv_e_ref, bkv_e_ref,
                         w3_ref, b6_ref, w1_ref, b1_ref, w2_ref,
                         o_ref, *, n_heads):
    """One stream (B batch rows): LN(x+SA(x)) -> LN(.+EA(., kv)) -> LN(.+FFN(.))."""
    _, B, S, H = x_ref.shape
    R = B * S

    # (B, S, H) -> (B*S, H): leading-dim collapse, layout-preserving (S % 8 == 0).
    x = x_ref[0].reshape(R, H)
    kv = kv_ref[0].reshape(R, H)

    wo_s = w3_ref[0]
    wq_e = w3_ref[1]
    wo_e = w3_ref[2]
    bo_s = b6_ref[0]
    bq_e = b6_ref[1]
    bo_e = b6_ref[2]
    b2 = b6_ref[3]
    ln_g = b6_ref[4]
    ln_b = b6_ref[5]

    # Block-diagonal additive mask over the batched (B*S, B*S) score matrix:
    # (mask-1)*1e10 on the in-batch diagonal blocks, -1e10 everywhere else.
    def block_diag_additive(m_ref):
        madd = (m_ref[0] - 1.0) * jnp.float32(1e10)        # (B, S, S)
        neg = jnp.full((S, S), jnp.float32(NEG))
        rows = []
        for bi in range(B):
            row = [madd[bi] if bj == bi else neg for bj in range(B)]
            rows.append(jnp.concatenate(row, axis=1))
        return jnp.concatenate(rows, axis=0)               # (R, R)

    smask = block_diag_additive(smask_ref)
    cmask = block_diag_additive(cmask_ref)

    # Cross-attn K/V depend only on the ORIGINAL other stream -> compute up
    # front (one fused (R,H)@(H,2H) dot), off the LN->attn critical path.
    kv_e = jnp.dot(kv, wkv_e_ref[...], preferred_element_type=jnp.float32) + bkv_e_ref[0]
    k_e = kv_e[:, :H]
    v_e = kv_e[:, H:]

    # ---- self-attention sublayer (fused QKV projection) ----
    qkv = jnp.dot(x, wqkv_s_ref[...], preferred_element_type=jnp.float32) + bqkv_s_ref[0]
    sa = _attention(qkv[:, :H], qkv[:, H:2 * H], qkv[:, 2 * H:],
                    smask, wo_s, bo_s, n_heads=n_heads)
    y = _layernorm(x + sa, ln_g, ln_b)

    # ---- cross-attention sublayer (kv = original other stream) ----
    q_e = jnp.dot(y, wq_e, preferred_element_type=jnp.float32) + bq_e
    ea = _attention(q_e, k_e, v_e, cmask, wo_e, bo_e, n_heads=n_heads)
    y = _layernorm(y + ea, ln_g, ln_b)

    # ---- position-wise FFN (Conv1d kernel=1 == per-token matmul) ----
    h1 = jnp.maximum(
        jnp.dot(y, w1_ref[...], preferred_element_type=jnp.float32) + b1_ref[0], 0.0)
    ff = jnp.dot(h1, w2_ref[...], preferred_element_type=jnp.float32) + b2
    y = _layernorm(y + ff, ln_g, ln_b)

    o_ref[0] = y.reshape(B, S, H)


# ------------------------------ wrapper ------------------------------------ #
def pack_params(params):
    """Hoisted out of the per-call path: pack weights/biases into few operands."""
    sa, ea, pf, (ln_w, ln_b) = params
    wq_s, bq_s, wk_s, bk_s, wv_s, bv_s, wo_s, bo_s = sa
    wq_e, bq_e, wk_e, bk_e, wv_e, bv_e, wo_e, bo_e = ea
    w1, b1, w2, b2 = pf
    wqkv_s = jnp.concatenate([wq_s, wk_s, wv_s], axis=1)          # (H, 3H)
    bqkv_s = jnp.concatenate([bq_s, bk_s, bv_s], axis=1)          # (1, 3H)
    wkv_e = jnp.concatenate([wk_e, wv_e], axis=1)                 # (H, 2H)
    bkv_e = jnp.concatenate([bk_e, bv_e], axis=1)                 # (1, 2H)
    w3 = jnp.stack([wo_s, wq_e, wo_e], axis=0)                    # (3, H, H)
    b6 = jnp.concatenate([bo_s, bq_e, bo_e, b2, ln_w, ln_b], axis=0)   # (6, H)
    return (wqkv_s, bqkv_s, wkv_e, bkv_e, w3, b6, w1, b1, w2)


@jax.jit
def decoder_layer(trg, src, trg_mask, src_mask, packed):
    """Pallas implementation of DecoderLayer.forward (dropout = identity)."""
    wqkv_s, bqkv_s, wkv_e, bkv_e, w3, b6, w1, b1, w2 = packed

    trg = trg.astype(jnp.float32)
    src = src.astype(jnp.float32)
    B, S, H = trg.shape
    P = w1.shape[1]

    # Stack the two independent streams: index 0 = trg path, 1 = src path.
    # Cross kv / cross mask are the SAME operands with a swapped index_map.
    x = jnp.stack([trg, src], axis=0)                                      # (2, B, S, H)
    masks = jnp.stack([trg_mask[:, 0].astype(jnp.float32),
                       src_mask[:, 0].astype(jnp.float32)], axis=0)        # (2, B, S, S)

    kernel = functools.partial(decoder_layer_kernel, n_heads=N_HEADS)

    def fixed(shape):
        return pl.BlockSpec(shape, lambda i: (0,) * len(shape))

    out = pl.pallas_call(
        kernel,
        out_shape=jax.ShapeDtypeStruct((2, B, S, H), jnp.float32),
        grid=(2,),
        in_specs=[
            pl.BlockSpec((1, B, S, H), lambda i: (i, 0, 0, 0)),        # own stream
            pl.BlockSpec((1, B, S, H), lambda i: (1 - i, 0, 0, 0)),    # cross kv (same array)
            pl.BlockSpec((1, B, S, S), lambda i: (i, 0, 0, 0)),        # self mask
            pl.BlockSpec((1, B, S, S), lambda i: (1 - i, 0, 0, 0)),    # cross mask (same array)
            fixed((H, 3 * H)),                                          # fused self QKV weight
            fixed((1, 3 * H)),                                          # fused self QKV bias
            fixed((H, 2 * H)),                                          # fused cross K/V weight
            fixed((1, 2 * H)),                                          # fused cross K/V bias
            fixed((3, H, H)),                                           # wo_s, wq_e, wo_e
            fixed((6, H)),                                              # bo_s,bq_e,bo_e,b2,ln_w,ln_b
            fixed((H, P)),                                              # ffn w1
            fixed((1, P)),                                              # ffn b1
            fixed((P, H)),                                              # ffn w2
        ],
        out_specs=pl.BlockSpec((1, B, S, H), lambda i: (i, 0, 0, 0)),
        compiler_params=pltpu.CompilerParams(
            dimension_semantics=("parallel",)),
    )(x, x, masks, masks, wqkv_s, bqkv_s, wkv_e, bkv_e, w3, b6, w1, b1, w2)

    return out[0], out[1]


# -------------------------- pure-JAX reference ----------------------------- #
def _ref_attn(q, kv, mask, p, n_heads=N_HEADS):
    wq, bq, wk, bk, wv, bv, wo, bo = p
    B, Lq, H = q.shape
    Lk = kv.shape[1]
    hd = H // n_heads
    Q = (q @ wq + bq).reshape(B, Lq, n_heads, hd).transpose(0, 2, 1, 3)
    K = (kv @ wk + bk).reshape(B, Lk, n_heads, hd).transpose(0, 2, 1, 3)
    V = (kv @ wv + bv).reshape(B, Lk, n_heads, hd).transpose(0, 2, 1, 3)
    e = jnp.einsum('bhqd,bhkd->bhqk', Q, K) / jnp.sqrt(jnp.float32(hd))
    e = jnp.where(mask == 0, NEG, e)
    a = jax.nn.softmax(e, axis=-1)
    c = jnp.einsum('bhqk,bhkd->bhqd', a, V).transpose(0, 2, 1, 3).reshape(B, Lq, H)
    return c @ wo + bo


def _ref_ln(y, g, b):
    mean = jnp.mean(y, axis=-1, keepdims=True)
    var = jnp.mean((y - mean) ** 2, axis=-1, keepdims=True)
    return (y - mean) / jnp.sqrt(var + EPS) * g + b


def _ref_decoder(trg, src, trg_mask, src_mask, params):
    sa, ea, pf, (ln_w, ln_b) = params
    w1, b1, w2, b2 = pf
    ln = lambda y: _ref_ln(y, ln_w[0], ln_b[0])
    ffn = lambda x: jnp.maximum(x @ w1 + b1[0], 0.0) @ w2 + b2[0]
    trg = trg.astype(jnp.float32)
    src = src.astype(jnp.float32)
    trg1 = ln(trg + _ref_attn(trg, trg, trg_mask, sa))
    trg1 = ln(trg1 + _ref_attn(trg1, src, src_mask, ea))
    trg1 = ln(trg1 + ffn(trg1))
    src1 = ln(src + _ref_attn(src, src, src_mask, sa))
    src1 = ln(src1 + _ref_attn(src1, trg, trg_mask, ea))
    src1 = ln(src1 + ffn(src1))
    return trg1, src1


# ------------------------------- main -------------------------------------- #
def _init_params(key):
    def lin(k, din, dout, scale=0.1):
        kw, kb = jax.random.split(k)
        # stored already transposed: y = x @ W (+ b);  W: (din, dout)
        w = jax.random.normal(kw, (din, dout), jnp.float32) * scale
        b = jax.random.normal(kb, (1, dout), jnp.float32) * scale
        return w, b

    keys = jax.random.split(key, 11)
    sa = lin(keys[0], HID, HID) + lin(keys[1], HID, HID) + \
         lin(keys[2], HID, HID) + lin(keys[3], HID, HID)          # wq,bq,wk,bk,wv,bv,wo,bo
    ea = lin(keys[4], HID, HID) + lin(keys[5], HID, HID) + \
         lin(keys[6], HID, HID) + lin(keys[7], HID, HID)
    pf = lin(keys[8], HID, PF) + lin(keys[9], PF, HID)            # w1,b1,w2,b2
    ln_w = jnp.ones((1, HID), jnp.float32)                        # nn.LayerNorm default init
    ln_b = jnp.zeros((1, HID), jnp.float32)
    return sa, ea, pf, (ln_w, ln_b)


if __name__ == "__main__":
    B, S = 2, 8
    key = jax.random.PRNGKey(0)
    k_trg, k_src, k_par = jax.random.split(key, 3)
    trg = jax.random.normal(k_trg, (B, S, HID), jnp.float32)
    src = jax.random.normal(k_src, (B, S, HID), jnp.float32)

    # trg_mask: causal; src_mask: all ones.  Shapes broadcast over heads.
    trg_mask = jnp.broadcast_to(
        jnp.tril(jnp.ones((S, S), jnp.float32))[None, None], (B, 1, S, S))
    src_mask = jnp.ones((B, 1, S, S), jnp.float32)

    params = _init_params(k_par)
    packed = pack_params(params)     # parameter packing hoisted out of the hot path

    trg1, src1 = decoder_layer(trg, src, trg_mask, src_mask, packed)
    jax.block_until_ready((trg1, src1))

    # sanity check against a pure-JAX reference of the same math
    r_trg1, r_src1 = _ref_decoder(trg, src, trg_mask, src_mask, params)
    assert jnp.allclose(trg1, r_trg1, rtol=1e-4, atol=1e-4)
    assert jnp.allclose(src1, r_src1, rtol=1e-4, atol=1e-4)

    print("KERNEL_OK")
</pallas_src>

<mosaic_0001>
module attributes {stable_mosaic.version = 11 : i64} {
  func.func @decoder_layer_kernel(%arg0: i32, %arg1: memref<1x2x8x32xf32, #tpu.memory_space<vmem>>, %arg2: memref<1x2x8x32xf32, #tpu.memory_space<vmem>>, %arg3: memref<1x2x8x8xf32, #tpu.memory_space<vmem>>, %arg4: memref<1x2x8x8xf32, #tpu.memory_space<vmem>>, %arg5: memref<32x96xf32, #tpu.memory_space<vmem>>, %arg6: memref<1x96xf32, #tpu.memory_space<vmem>>, %arg7: memref<32x64xf32, #tpu.memory_space<vmem>>, %arg8: memref<1x64xf32, #tpu.memory_space<vmem>>, %arg9: memref<3x32x32xf32, #tpu.memory_space<vmem>>, %arg10: memref<6x32xf32, #tpu.memory_space<vmem>>, %arg11: memref<32x64xf32, #tpu.memory_space<vmem>>, %arg12: memref<1x64xf32, #tpu.memory_space<vmem>>, %arg13: memref<64x32xf32, #tpu.memory_space<vmem>>, %arg14: memref<1x2x8x32xf32, #tpu.memory_space<vmem>>) attributes {dimension_semantics = [#tpu.dimension_semantics<parallel>], iteration_bounds = array<i64: 2>, scalar_prefetch = 0 : i64, scratch_operands = 0 : i64, tpu.core_type = #tpu.core_type<tc>, window_params = [{transform_indices = @transform_0, window_bounds = array<i64: 1, 2, 8, 32>}, {transform_indices = @transform_1, window_bounds = array<i64: 1, 2, 8, 32>}, {transform_indices = @transform_2, window_bounds = array<i64: 1, 2, 8, 8>}, {transform_indices = @transform_3, window_bounds = array<i64: 1, 2, 8, 8>}, {pipeline_mode = #tpu.pipeline_mode<synchronous>, transform_indices = @transform_4, window_bounds = array<i64: 32, 96>}, {pipeline_mode = #tpu.pipeline_mode<synchronous>, transform_indices = @transform_5, window_bounds = array<i64: 1, 96>}, {pipeline_mode = #tpu.pipeline_mode<synchronous>, transform_indices = @transform_6, window_bounds = array<i64: 32, 64>}, {pipeline_mode = #tpu.pipeline_mode<synchronous>, transform_indices = @transform_7, window_bounds = array<i64: 1, 64>}, {pipeline_mode = #tpu.pipeline_mode<synchronous>, transform_indices = @transform_8, window_bounds = array<i64: 3, 32, 32>}, {pipeline_mode = #tpu.pipeline_mode<synchronous>, transform_indices = @transform_9, window_bounds = array<i64: 6, 32>}, {pipeline_mode = #tpu.pipeline_mode<synchronous>, transform_indices = @transform_10, window_bounds = array<i64: 32, 64>}, {pipeline_mode = #tpu.pipeline_mode<synchronous>, transform_indices = @transform_11, window_bounds = array<i64: 1, 64>}, {pipeline_mode = #tpu.pipeline_mode<synchronous>, transform_indices = @transform_12, window_bounds = array<i64: 64, 32>}, {transform_indices = @transform_13, window_bounds = array<i64: 1, 2, 8, 32>}]} {
    %c0 = arith.constant 0 : index
    %c0_0 = arith.constant 0 : index
    %c0_1 = arith.constant 0 : index
    %c0_2 = arith.constant 0 : index
    %0 = vector.load %arg1[%c0, %c0_0, %c0_1, %c0_2] : memref<1x2x8x32xf32, #tpu.memory_space<vmem>>, vector<1x2x8x32xf32>
    %1 = vector.shape_cast %0 : vector<1x2x8x32xf32> to vector<2x8x32xf32>
    %2 = vector.shape_cast %1 : vector<2x8x32xf32> to vector<16x32xf32>
    %c0_3 = arith.constant 0 : index
    %c0_4 = arith.constant 0 : index
    %c0_5 = arith.constant 0 : index
    %c0_6 = arith.constant 0 : index
    %3 = vector.load %arg2[%c0_3, %c0_4, %c0_5, %c0_6] : memref<1x2x8x32xf32, #tpu.memory_space<vmem>>, vector<1x2x8x32xf32>
    %4 = vector.shape_cast %3 : vector<1x2x8x32xf32> to vector<2x8x32xf32>
    %5 = vector.shape_cast %4 : vector<2x8x32xf32> to vector<16x32xf32>
    %c0_7 = arith.constant 0 : index
    %c0_8 = arith.constant 0 : index
    %c0_9 = arith.constant 0 : index
    %6 = vector.load %arg9[%c0_7, %c0_8, %c0_9] : memref<3x32x32xf32, #tpu.memory_space<vmem>>, vector<1x32x32xf32>
    %7 = vector.shape_cast %6 : vector<1x32x32xf32> to vector<32x32xf32>
    %c1 = arith.constant 1 : index
    %c0_10 = arith.constant 0 : index
    %c0_11 = arith.constant 0 : index
    %8 = vector.load %arg9[%c1, %c0_10, %c0_11] : memref<3x32x32xf32, #tpu.memory_space<vmem>>, vector<1x32x32xf32>
    %9 = vector.shape_cast %8 : vector<1x32x32xf32> to vector<32x32xf32>
    %c2 = arith.constant 2 : index
    %c0_12 = arith.constant 0 : index
    %c0_13 = arith.constant 0 : index
    %10 = vector.load %arg9[%c2, %c0_12, %c0_13] : memref<3x32x32xf32, #tpu.memory_space<vmem>>, vector<1x32x32xf32>
    %11 = vector.shape_cast %10 : vector<1x32x32xf32> to vector<32x32xf32>
    %c0_14 = arith.constant 0 : index
    %c0_15 = arith.constant 0 : index
    %12 = vector.load %arg10[%c0_14, %c0_15] : memref<6x32xf32, #tpu.memory_space<vmem>>, vector<1x32xf32>
    %13 = vector.shape_cast %12 : vector<1x32xf32> to vector<32xf32>
    %c1_16 = arith.constant 1 : index
    %c0_17 = arith.constant 0 : index
    %14 = vector.load %arg10[%c1_16, %c0_17] : memref<6x32xf32, #tpu.memory_space<vmem>>, vector<1x32xf32>
    %15 = vector.shape_cast %14 : vector<1x32xf32> to vector<32xf32>
    %c2_18 = arith.constant 2 : index
    %c0_19 = arith.constant 0 : index
    %16 = vector.load %arg10[%c2_18, %c0_19] : memref<6x32xf32, #tpu.memory_space<vmem>>, vector<1x32xf32>
    %17 = vector.shape_cast %16 : vector<1x32xf32> to vector<32xf32>
    %c3 = arith.constant 3 : index
    %c0_20 = arith.constant 0 : index
    %18 = vector.load %arg10[%c3, %c0_20] : memref<6x32xf32, #tpu.memory_space<vmem>>, vector<1x32xf32>
    %19 = vector.shape_cast %18 : vector<1x32xf32> to vector<32xf32>
    %c4 = arith.constant 4 : index
    %c0_21 = arith.constant 0 : index
    %20 = vector.load %arg10[%c4, %c0_21] : memref<6x32xf32, #tpu.memory_space<vmem>>, vector<1x32xf32>
    %21 = vector.shape_cast %20 : vector<1x32xf32> to vector<32xf32>
    %c5 = arith.constant 5 : index
    %c0_22 = arith.constant 0 : index
    %22 = vector.load %arg10[%c5, %c0_22] : memref<6x32xf32, #tpu.memory_space<vmem>>, vector<1x32xf32>
    %23 = vector.shape_cast %22 : vector<1x32xf32> to vector<32xf32>
    %c0_23 = arith.constant 0 : index
    %c0_24 = arith.constant 0 : index
    %c0_25 = arith.constant 0 : index
    %c0_26 = arith.constant 0 : index
    %24 = vector.load %arg3[%c0_23, %c0_24, %c0_25, %c0_26] : memref<1x2x8x8xf32, #tpu.memory_space<vmem>>, vector<1x2x8x8xf32>
    %25 = vector.shape_cast %24 : vector<1x2x8x8xf32> to vector<2x8x8xf32>
    %cst = arith.constant 1.000000e+00 : f32
    %26 = vector.broadcast %cst : f32 to vector<2x8x8xf32>
    %27 = arith.subf %25, %26 : vector<2x8x8xf32>
    %cst_27 = arith.constant 1.000000e+10 : f32
    %28 = vector.broadcast %cst_27 : f32 to vector<2x8x8xf32>
    %29 = arith.mulf %27, %28 : vector<2x8x8xf32>
    %cst_28 = arith.constant -1.000000e+10 : f32
    %30 = vector.broadcast %cst_28 : f32 to vector<8x8xf32>
    %31 = vector.extract_strided_slice %29 {offsets = [0, 0, 0], sizes = [1, 8, 8], strides = [1, 1, 1]} : vector<2x8x8xf32> to vector<1x8x8xf32>
    %32 = vector.shape_cast %31 : vector<1x8x8xf32> to vector<8x8xf32>
    %33 = tpu.concatenate %32, %30 in 1 : vector<8x8xf32>, vector<8x8xf32> -> vector<8x16xf32>
    %34 = vector.extract_strided_slice %29 {offsets = [1, 0, 0], sizes = [1, 8, 8], strides = [1, 1, 1]} : vector<2x8x8xf32> to vector<1x8x8xf32>
    %35 = vector.shape_cast %34 : vector<1x8x8xf32> to vector<8x8xf32>
    %36 = tpu.concatenate %30, %35 in 1 : vector<8x8xf32>, vector<8x8xf32> -> vector<8x16xf32>
    %37 = tpu.concatenate %33, %36 in 0 : vector<8x16xf32>, vector<8x16xf32> -> vector<16x16xf32>
    %c0_29 = arith.constant 0 : index
    %c0_30 = arith.constant 0 : index
    %c0_31 = arith.constant 0 : index
    %c0_32 = arith.constant 0 : index
    %38 = vector.load %arg4[%c0_29, %c0_30, %c0_31, %c0_32] : memref<1x2x8x8xf32, #tpu.memory_space<vmem>>, vector<1x2x8x8xf32>
    %39 = vector.shape_cast %38 : vector<1x2x8x8xf32> to vector<2x8x8xf32>
    %cst_33 = arith.constant 1.000000e+00 : f32
    %40 = vector.broadcast %cst_33 : f32 to vector<2x8x8xf32>
    %41 = arith.subf %39, %40 : vector<2x8x8xf32>
    %cst_34 = arith.constant 1.000000e+10 : f32
    %42 = vector.broadcast %cst_34 : f32 to vector<2x8x8xf32>
    %43 = arith.mulf %41, %42 : vector<2x8x8xf32>
    %cst_35 = arith.constant -1.000000e+10 : f32
    %44 = vector.broadcast %cst_35 : f32 to vector<8x8xf32>
    %45 = vector.extract_strided_slice %43 {offsets = [0, 0, 0], sizes = [1, 8, 8], strides = [1, 1, 1]} : vector<2x8x8xf32> to vector<1x8x8xf32>
    %46 = vector.shape_cast %45 : vector<1x8x8xf32> to vector<8x8xf32>
    %47 = tpu.concatenate %46, %44 in 1 : vector<8x8xf32>, vector<8x8xf32> -> vector<8x16xf32>
    %48 = vector.extract_strided_slice %43 {offsets = [1, 0, 0], sizes = [1, 8, 8], strides = [1, 1, 1]} : vector<2x8x8xf32> to vector<1x8x8xf32>
    %49 = vector.shape_cast %48 : vector<1x8x8xf32> to vector<8x8xf32>
    %50 = tpu.concatenate %44, %49 in 1 : vector<8x8xf32>, vector<8x8xf32> -> vector<8x16xf32>
    %51 = tpu.concatenate %47, %50 in 0 : vector<8x16xf32>, vector<8x16xf32> -> vector<16x16xf32>
    %c0_36 = arith.constant 0 : index
    %c0_37 = arith.constant 0 : index
    %52 = vector.load %arg7[%c0_36, %c0_37] : memref<32x64xf32, #tpu.memory_space<vmem>>, vector<32x64xf32>
    %cst_38 = arith.constant dense<0.000000e+00> : vector<16x64xf32>
    %53 = tpu.matmul %5, %52, %cst_38 {dimension_numbers = #tpu.dot_dimension_numbers<[1], [0], [0], [1], [0, 0, 1, 1], [], []>} : vector<16x32xf32>, vector<32x64xf32>, vector<16x64xf32> -> vector<16x64xf32>
    %c0_39 = arith.constant 0 : index
    %c0_40 = arith.constant 0 : index
    %54 = vector.load %arg8[%c0_39, %c0_40] : memref<1x64xf32, #tpu.memory_space<vmem>>, vector<1x64xf32>
    %55 = vector.shape_cast %54 : vector<1x64xf32> to vector<64xf32>
    %56 = vector.shape_cast %55 : vector<64xf32> to vector<1x64xf32>
    %57 = vector.broadcast %56 : vector<1x64xf32> to vector<16x64xf32>
    %58 = arith.addf %53, %57 : vector<16x64xf32>
    %59 = vector.extract_strided_slice %58 {offsets = [0, 0], sizes = [16, 32], strides = [1, 1]} : vector<16x64xf32> to vector<16x32xf32>
    %60 = vector.extract_strided_slice %58 {offsets = [0, 32], sizes = [16, 32], strides = [1, 1]} : vector<16x64xf32> to vector<16x32xf32>
    %c0_41 = arith.constant 0 : index
    %c0_42 = arith.constant 0 : index
    %61 = vector.load %arg5[%c0_41, %c0_42] : memref<32x96xf32, #tpu.memory_space<vmem>>, vector<32x96xf32>
    %cst_43 = arith.constant dense<0.000000e+00> : vector<16x96xf32>
    %62 = tpu.matmul %2, %61, %cst_43 {dimension_numbers = #tpu.dot_dimension_numbers<[1], [0], [0], [1], [0, 0, 1, 1], [], []>} : vector<16x32xf32>, vector<32x96xf32>, vector<16x96xf32> -> vector<16x96xf32>
    %c0_44 = arith.constant 0 : index
    %c0_45 = arith.constant 0 : index
    %63 = vector.load %arg6[%c0_44, %c0_45] : memref<1x96xf32, #tpu.memory_space<vmem>>, vector<1x96xf32>
    %64 = vector.shape_cast %63 : vector<1x96xf32> to vector<96xf32>
    %65 = vector.shape_cast %64 : vector<96xf32> to vector<1x96xf32>
    %66 = vector.broadcast %65 : vector<1x96xf32> to vector<16x96xf32>
    %67 = arith.addf %62, %66 : vector<16x96xf32>
    %68 = vector.extract_strided_slice %67 {offsets = [0, 0], sizes = [16, 32], strides = [1, 1]} : vector<16x96xf32> to vector<16x32xf32>
    %69 = vector.extract_strided_slice %67 {offsets = [0, 32], sizes = [16, 32], strides = [1, 1]} : vector<16x96xf32> to vector<16x32xf32>
    %70 = vector.extract_strided_slice %67 {offsets = [0, 64], sizes = [16, 32], strides = [1, 1]} : vector<16x96xf32> to vector<16x32xf32>
    %71 = vector.extract_strided_slice %68 {offsets = [0, 0], sizes = [16, 8], strides = [1, 1]} : vector<16x32xf32> to vector<16x8xf32>
    %72 = vector.extract_strided_slice %69 {offsets = [0, 0], sizes = [16, 8], strides = [1, 1]} : vector<16x32xf32> to vector<16x8xf32>
    %73 = vector.extract_strided_slice %70 {offsets = [0, 0], sizes = [16, 8], strides = [1, 1]} : vector<16x32xf32> to vector<16x8xf32>
    %cst_46 = arith.constant dense<0.000000e+00> : vector<16x16xf32>
    %74 = tpu.matmul %71, %72, %cst_46 {dimension_numbers = #tpu.dot_dimension_numbers<[1], [1], [0], [0], [0, 0, 1, 0], [], []>} : vector<16x8xf32>, vector<16x8xf32>, vector<16x16xf32> -> vector<16x16xf32>
    %cst_47 = arith.constant 0.353553385 : f32
    %75 = vector.broadcast %cst_47 : f32 to vector<16x16xf32>
    %76 = arith.mulf %74, %75 : vector<16x16xf32>
    %77 = arith.addf %76, %37 : vector<16x16xf32>
    %cst_48 = arith.constant dense<0xFF800000> : vector<16xf32>
    %78 = vector.multi_reduction <maximumf>, %77, %cst_48 [1] : vector<16x16xf32> to vector<16xf32>
    %79 = vector.shape_cast %78 : vector<16xf32> to vector<16x1xf32>
    %80 = vector.broadcast %79 : vector<16x1xf32> to vector<16x16xf32>
    %81 = arith.subf %77, %80 : vector<16x16xf32>
    %82 = math.exp %81 : vector<16x16xf32>
    %cst_49 = arith.constant dense<0.000000e+00> : vector<16xf32>
    %83 = vector.multi_reduction <add>, %82, %cst_49 [1] : vector<16x16xf32> to vector<16xf32>
    %84 = vector.shape_cast %83 : vector<16xf32> to vector<16x1xf32>
    %85 = tpu.reciprocal %84 : vector<16x1xf32> -> vector<16x1xf32>
    %86 = vector.broadcast %85 : vector<16x1xf32> to vector<16x16xf32>
    %87 = arith.mulf %82, %86 : vector<16x16xf32>
    %cst_50 = arith.constant dense<0.000000e+00> : vector<16x8xf32>
    %88 = tpu.matmul %87, %73, %cst_50 {dimension_numbers = #tpu.dot_dimension_numbers<[1], [0], [0], [1], [0, 0, 1, 1], [], []>} : vector<16x16xf32>, vector<16x8xf32>, vector<16x8xf32> -> vector<16x8xf32>
    %89 = vector.extract_strided_slice %68 {offsets = [0, 8], sizes = [16, 8], strides = [1, 1]} : vector<16x32xf32> to vector<16x8xf32>
    %90 = vector.extract_strided_slice %69 {offsets = [0, 8], sizes = [16, 8], strides = [1, 1]} : vector<16x32xf32> to vector<16x8xf32>
    %91 = vector.extract_strided_slice %70 {offsets = [0, 8], sizes = [16, 8], strides = [1, 1]} : vector<16x32xf32> to vector<16x8xf32>
    %cst_51 = arith.constant dense<0.000000e+00> : vector<16x16xf32>
    %92 = tpu.matmul %89, %90, %cst_51 {dimension_numbers = #tpu.dot_dimension_numbers<[1], [1], [0], [0], [0, 0, 1, 0], [], []>} : vector<16x8xf32>, vector<16x8xf32>, vector<16x16xf32> -> vector<16x16xf32>
    %cst_52 = arith.constant 0.353553385 : f32
    %93 = vector.broadcast %cst_52 : f32 to vector<16x16xf32>
    %94 = arith.mulf %92, %93 : vector<16x16xf32>
    %95 = arith.addf %94, %37 : vector<16x16xf32>
    %cst_53 = arith.constant dense<0xFF800000> : vector<16xf32>
    %96 = vector.multi_reduction <maximumf>, %95, %cst_53 [1] : vector<16x16xf32> to vector<16xf32>
    %97 = vector.shape_cast %96 : vector<16xf32> to vector<16x1xf32>
    %98 = vector.broadcast %97 : vector<16x1xf32> to vector<16x16xf32>
    %99 = arith.subf %95, %98 : vector<16x16xf32>
    %100 = math.exp %99 : vector<16x16xf32>
    %cst_54 = arith.constant dense<0.000000e+00> : vector<16xf32>
    %101 = vector.multi_reduction <add>, %100, %cst_54 [1] : vector<16x16xf32> to vector<16xf32>
    %102 = vector.shape_cast %101 : vector<16xf32> to vector<16x1xf32>
    %103 = tpu.reciprocal %102 : vector<16x1xf32> -> vector<16x1xf32>
    %104 = vector.broadcast %103 : vector<16x1xf32> to vector<16x16xf32>
    %105 = arith.mulf %100, %104 : vector<16x16xf32>
    %cst_55 = arith.constant dense<0.000000e+00> : vector<16x8xf32>
    %106 = tpu.matmul %105, %91, %cst_55 {dimension_numbers = #tpu.dot_dimension_numbers<[1], [0], [0], [1], [0, 0, 1, 1], [], []>} : vector<16x16xf32>, vector<16x8xf32>, vector<16x8xf32> -> vector<16x8xf32>
    %107 = vector.extract_strided_slice %68 {offsets = [0, 16], sizes = [16, 8], strides = [1, 1]} : vector<16x32xf32> to vector<16x8xf32>
    %108 = vector.extract_strided_slice %69 {offsets = [0, 16], sizes = [16, 8], strides = [1, 1]} : vector<16x32xf32> to vector<16x8xf32>
    %109 = vector.extract_strided_slice %70 {offsets = [0, 16], sizes = [16, 8], strides = [1, 1]} : vector<16x32xf32> to vector<16x8xf32>
    %cst_56 = arith.constant dense<0.000000e+00> : vector<16x16xf32>
    %110 = tpu.matmul %107, %108, %cst_56 {dimension_numbers = #tpu.dot_dimension_numbers<[1], [1], [0], [0], [0, 0, 1, 0], [], []>} : vector<16x8xf32>, vector<16x8xf32>, vector<16x16xf32> -> vector<16x16xf32>
    %cst_57 = arith.constant 0.353553385 : f32
    %111 = vector.broadcast %cst_57 : f32 to vector<16x16xf32>
    %112 = arith.mulf %110, %111 : vector<16x16xf32>
    %113 = arith.addf %112, %37 : vector<16x16xf32>
    %cst_58 = arith.constant dense<0xFF800000> : vector<16xf32>
    %114 = vector.multi_reduction <maximumf>, %113, %cst_58 [1] : vector<16x16xf32> to vector<16xf32>
    %115 = vector.shape_cast %114 : vector<16xf32> to vector<16x1xf32>
    %116 = vector.broadcast %115 : vector<16x1xf32> to vector<16x16xf32>
    %117 = arith.subf %113, %116 : vector<16x16xf32>
    %118 = math.exp %117 : vector<16x16xf32>
    %cst_59 = arith.constant dense<0.000000e+00> : vector<16xf32>
    %119 = vector.multi_reduction <add>, %118, %cst_59 [1] : vector<16x16xf32> to vector<16xf32>
    %120 = vector.shape_cast %119 : vector<16xf32> to vector<16x1xf32>
    %121 = tpu.reciprocal %120 : vector<16x1xf32> -> vector<16x1xf32>
    %122 = vector.broadcast %121 : vector<16x1xf32> to vector<16x16xf32>
    %123 = arith.mulf %118, %122 : vector<16x16xf32>
    %cst_60 = arith.constant dense<0.000000e+00> : vector<16x8xf32>
    %124 = tpu.matmul %123, %109, %cst_60 {dimension_numbers = #tpu.dot_dimension_numbers<[1], [0], [0], [1], [0, 0, 1, 1], [], []>} : vector<16x16xf32>, vector<16x8xf32>, vector<16x8xf32> -> vector<16x8xf32>
    %125 = vector.extract_strided_slice %68 {offsets = [0, 24], sizes = [16, 8], strides = [1, 1]} : vector<16x32xf32> to vector<16x8xf32>
    %126 = vector.extract_strided_slice %69 {offsets = [0, 24], sizes = [16, 8], strides = [1, 1]} : vector<16x32xf32> to vector<16x8xf32>
    %127 = vector.extract_strided_slice %70 {offsets = [0, 24], sizes = [16, 8], strides = [1, 1]} : vector<16x32xf32> to vector<16x8xf32>
    %cst_61 = arith.constant dense<0.000000e+00> : vector<16x16xf32>
    %128 = tpu.matmul %125, %126, %cst_61 {dimension_numbers = #tpu.dot_dimension_numbers<[1], [1], [0], [0], [0, 0, 1, 0], [], []>} : vector<16x8xf32>, vector<16x8xf32>, vector<16x16xf32> -> vector<16x16xf32>
    %cst_62 = arith.constant 0.353553385 : f32
    %129 = vector.broadcast %cst_62 : f32 to vector<16x16xf32>
    %130 = arith.mulf %128, %129 : vector<16x16xf32>
    %131 = arith.addf %130, %37 : vector<16x16xf32>
    %cst_63 = arith.constant dense<0xFF800000> : vector<16xf32>
    %132 = vector.multi_reduction <maximumf>, %131, %cst_63 [1] : vector<16x16xf32> to vector<16xf32>
    %133 = vector.shape_cast %132 : vector<16xf32> to vector<16x1xf32>
    %134 = vector.broadcast %133 : vector<16x1xf32> to vector<16x16xf32>
    %135 = arith.subf %131, %134 : vector<16x16xf32>
    %136 = math.exp %135 : vector<16x16xf32>
    %cst_64 = arith.constant dense<0.000000e+00> : vector<16xf32>
    %137 = vector.multi_reduction <add>, %136, %cst_64 [1] : vector<16x16xf32> to vector<16xf32>
    %138 = vector.shape_cast %137 : vector<16xf32> to vector<16x1xf32>
    %139 = tpu.reciprocal %138 : vector<16x1xf32> -> vector<16x1xf32>
    %140 = vector.broadcast %139 : vector<16x1xf32> to vector<16x16xf32>
    %141 = arith.mulf %136, %140 : vector<16x16xf32>
    %cst_65 = arith.constant dense<0.000000e+00> : vector<16x8xf32>
    %142 = tpu.matmul %141, %127, %cst_65 {dimension_numbers = #tpu.dot_dimension_numbers<[1], [0], [0], [1], [0, 0, 1, 1], [], []>} : vector<16x16xf32>, vector<16x8xf32>, vector<16x8xf32> -> vector<16x8xf32>
    %143 = tpu.concatenate %88, %106, %124, %142 in 1 : vector<16x8xf32>, vector<16x8xf32>, vector<16x8xf32>, vector<16x8xf32> -> vector<16x32xf32>
    %cst_66 = arith.constant dense<0.000000e+00> : vector<16x32xf32>
    %144 = tpu.matmul %143, %7, %cst_66 {dimension_numbers = #tpu.dot_dimension_numbers<[1], [0], [0], [1], [0, 0, 1, 1], [], []>} : vector<16x32xf32>, vector<32x32xf32>, vector<16x32xf32> -> vector<16x32xf32>
    %145 = vector.shape_cast %13 : vector<32xf32> to vector<1x32xf32>
    %146 = vector.broadcast %145 : vector<1x32xf32> to vector<16x32xf32>
    %147 = arith.addf %144, %146 : vector<16x32xf32>
    %148 = arith.addf %2, %147 : vector<16x32xf32>
    %cst_67 = arith.constant dense<0.000000e+00> : vector<16xf32>
    %149 = vector.multi_reduction <add>, %148, %cst_67 [1] : vector<16x32xf32> to vector<16xf32>
    %150 = vector.shape_cast %149 : vector<16xf32> to vector<16x1xf32>
    %cst_68 = arith.constant 3.200000e+01 : f32
    %151 = vector.broadcast %cst_68 : f32 to vector<16x1xf32>
    %152 = arith.divf %150, %151 : vector<16x1xf32>
    %153 = vector.broadcast %152 : vector<16x1xf32> to vector<16x32xf32>
    %154 = arith.subf %148, %153 : vector<16x32xf32>
    %155 = arith.mulf %154, %154 : vector<16x32xf32>
    %cst_69 = arith.constant dense<0.000000e+00> : vector<16xf32>
    %156 = vector.multi_reduction <add>, %155, %cst_69 [1] : vector<16x32xf32> to vector<16xf32>
    %157 = vector.shape_cast %156 : vector<16xf32> to vector<16x1xf32>
    %cst_70 = arith.constant 3.200000e+01 : f32
    %158 = vector.broadcast %cst_70 : f32 to vector<16x1xf32>
    %159 = arith.divf %157, %158 : vector<16x1xf32>
    %160 = vector.broadcast %152 : vector<16x1xf32> to vector<16x32xf32>
    %161 = arith.subf %148, %160 : vector<16x32xf32>
    %cst_71 = arith.constant 9.99999974E-6 : f32
    %162 = vector.broadcast %cst_71 : f32 to vector<16x1xf32>
    %163 = arith.addf %159, %162 : vector<16x1xf32>
    %164 = math.rsqrt %163 : vector<16x1xf32>
    %165 = vector.broadcast %164 : vector<16x1xf32> to vector<16x32xf32>
    %166 = arith.mulf %161, %165 : vector<16x32xf32>
    %167 = vector.shape_cast %21 : vector<32xf32> to vector<1x32xf32>
    %168 = vector.broadcast %167 : vector<1x32xf32> to vector<16x32xf32>
    %169 = arith.mulf %166, %168 : vector<16x32xf32>
    %170 = vector.shape_cast %23 : vector<32xf32> to vector<1x32xf32>
    %171 = vector.broadcast %170 : vector<1x32xf32> to vector<16x32xf32>
    %172 = arith.addf %169, %171 : vector<16x32xf32>
    %cst_72 = arith.constant dense<0.000000e+00> : vector<16x32xf32>
    %173 = tpu.matmul %172, %9, %cst_72 {dimension_numbers = #tpu.dot_dimension_numbers<[1], [0], [0], [1], [0, 0, 1, 1], [], []>} : vector<16x32xf32>, vector<32x32xf32>, vector<16x32xf32> -> vector<16x32xf32>
    %174 = vector.shape_cast %15 : vector<32xf32> to vector<1x32xf32>
    %175 = vector.broadcast %174 : vector<1x32xf32> to vector<16x32xf32>
    %176 = arith.addf %173, %175 : vector<16x32xf32>
    %177 = vector.extract_strided_slice %176 {offsets = [0, 0], sizes = [16, 8], strides = [1, 1]} : vector<16x32xf32> to vector<16x8xf32>
    %178 = vector.extract_strided_slice %59 {offsets = [0, 0], sizes = [16, 8], strides = [1, 1]} : vector<16x32xf32> to vector<16x8xf32>
    %179 = vector.extract_strided_slice %60 {offsets = [0, 0], sizes = [16, 8], strides = [1, 1]} : vector<16x32xf32> to vector<16x8xf32>
    %cst_73 = arith.constant dense<0.000000e+00> : vector<16x16xf32>
    %180 = tpu.matmul %177, %178, %cst_73 {dimension_numbers = #tpu.dot_dimension_numbers<[1], [1], [0], [0], [0, 0, 1, 0], [], []>} : vector<16x8xf32>, vector<16x8xf32>, vector<16x16xf32> -> vector<16x16xf32>
    %cst_74 = arith.constant 0.353553385 : f32
    %181 = vector.broadcast %cst_74 : f32 to vector<16x16xf32>
    %182 = arith.mulf %180, %181 : vector<16x16xf32>
    %183 = arith.addf %182, %51 : vector<16x16xf32>
    %cst_75 = arith.constant dense<0xFF800000> : vector<16xf32>
    %184 = vector.multi_reduction <maximumf>, %183, %cst_75 [1] : vector<16x16xf32> to vector<16xf32>
    %185 = vector.shape_cast %184 : vector<16xf32> to vector<16x1xf32>
    %186 = vector.broadcast %185 : vector<16x1xf32> to vector<16x16xf32>
    %187 = arith.subf %183, %186 : vector<16x16xf32>
    %188 = math.exp %187 : vector<16x16xf32>
    %cst_76 = arith.constant dense<0.000000e+00> : vector<16xf32>
    %189 = vector.multi_reduction <add>, %188, %cst_76 [1] : vector<16x16xf32> to vector<16xf32>
    %190 = vector.shape_cast %189 : vector<16xf32> to vector<16x1xf32>
    %191 = tpu.reciprocal %190 : vector<16x1xf32> -> vector<16x1xf32>
    %192 = vector.broadcast %191 : vector<16x1xf32> to vector<16x16xf32>
    %193 = arith.mulf %188, %192 : vector<16x16xf32>
    %cst_77 = arith.constant dense<0.000000e+00> : vector<16x8xf32>
    %194 = tpu.matmul %193, %179, %cst_77 {dimension_numbers = #tpu.dot_dimension_numbers<[1], [0], [0], [1], [0, 0, 1, 1], [], []>} : vector<16x16xf32>, vector<16x8xf32>, vector<16x8xf32> -> vector<16x8xf32>
    %195 = vector.extract_strided_slice %176 {offsets = [0, 8], sizes = [16, 8], strides = [1, 1]} : vector<16x32xf32> to vector<16x8xf32>
    %196 = vector.extract_strided_slice %59 {offsets = [0, 8], sizes = [16, 8], strides = [1, 1]} : vector<16x32xf32> to vector<16x8xf32>
    %197 = vector.extract_strided_slice %60 {offsets = [0, 8], sizes = [16, 8], strides = [1, 1]} : vector<16x32xf32> to vector<16x8xf32>
    %cst_78 = arith.constant dense<0.000000e+00> : vector<16x16xf32>
    %198 = tpu.matmul %195, %196, %cst_78 {dimension_numbers = #tpu.dot_dimension_numbers<[1], [1], [0], [0], [0, 0, 1, 0], [], []>} : vector<16x8xf32>, vector<16x8xf32>, vector<16x16xf32> -> vector<16x16xf32>
    %cst_79 = arith.constant 0.353553385 : f32
    %199 = vector.broadcast %cst_79 : f32 to vector<16x16xf32>
    %200 = arith.mulf %198, %199 : vector<16x16xf32>
    %201 = arith.addf %200, %51 : vector<16x16xf32>
    %cst_80 = arith.constant dense<0xFF800000> : vector<16xf32>
    %202 = vector.multi_reduction <maximumf>, %201, %cst_80 [1] : vector<16x16xf32> to vector<16xf32>
    %203 = vector.shape_cast %202 : vector<16xf32> to vector<16x1xf32>
    %204 = vector.broadcast %203 : vector<16x1xf32> to vector<16x16xf32>
    %205 = arith.subf %201, %204 : vector<16x16xf32>
    %206 = math.exp %205 : vector<16x16xf32>
    %cst_81 = arith.constant dense<0.000000e+00> : vector<16xf32>
    %207 = vector.multi_reduction <add>, %206, %cst_81 [1] : vector<16x16xf32> to vector<16xf32>
    %208 = vector.shape_cast %207 : vector<16xf32> to vector<16x1xf32>
    %209 = tpu.reciprocal %208 : vector<16x1xf32> -> vector<16x1xf32>
    %210 = vector.broadcast %209 : vector<16x1xf32> to vector<16x16xf32>
    %211 = arith.mulf %206, %210 : vector<16x16xf32>
    %cst_82 = arith.constant dense<0.000000e+00> : vector<16x8xf32>
    %212 = tpu.matmul %211, %197, %cst_82 {dimension_numbers = #tpu.dot_dimension_numbers<[1], [0], [0], [1], [0, 0, 1, 1], [], []>} : vector<16x16xf32>, vector<16x8xf32>, vector<16x8xf32> -> vector<16x8xf32>
    %213 = vector.extract_strided_slice %176 {offsets = [0, 16], sizes = [16, 8], strides = [1, 1]} : vector<16x32xf32> to vector<16x8xf32>
    %214 = vector.extract_strided_slice %59 {offsets = [0, 16], sizes = [16, 8], strides = [1, 1]} : vector<16x32xf32> to vector<16x8xf32>
    %215 = vector.extract_strided_slice %60 {offsets = [0, 16], sizes = [16, 8], strides = [1, 1]} : vector<16x32xf32> to vector<16x8xf32>
    %cst_83 = arith.constant dense<0.000000e+00> : vector<16x16xf32>
    %216 = tpu.matmul %213, %214, %cst_83 {dimension_numbers = #tpu.dot_dimension_numbers<[1], [1], [0], [0], [0, 0, 1, 0], [], []>} : vector<16x8xf32>, vector<16x8xf32>, vector<16x16xf32> -> vector<16x16xf32>
    %cst_84 = arith.constant 0.353553385 : f32
    %217 = vector.broadcast %cst_84 : f32 to vector<16x16xf32>
    %218 = arith.mulf %216, %217 : vector<16x16xf32>
    %219 = arith.addf %218, %51 : vector<16x16xf32>
    %cst_85 = arith.constant dense<0xFF800000> : vector<16xf32>
    %220 = vector.multi_reduction <maximumf>, %219, %cst_85 [1] : vector<16x16xf32> to vector<16xf32>
    %221 = vector.shape_cast %220 : vector<16xf32> to vector<16x1xf32>
    %222 = vector.broadcast %221 : vector<16x1xf32> to vector<16x16xf32>
    %223 = arith.subf %219, %222 : vector<16x16xf32>
    %224 = math.exp %223 : vector<16x16xf32>
    %cst_86 = arith.constant dense<0.000000e+00> : vector<16xf32>
    %225 = vector.multi_reduction <add>, %224, %cst_86 [1] : vector<16x16xf32> to vector<16xf32>
    %226 = vector.shape_cast %225 : vector<16xf32> to vector<16x1xf32>
    %227 = tpu.reciprocal %226 : vector<16x1xf32> -> vector<16x1xf32>
    %228 = vector.broadcast %227 : vector<16x1xf32> to vector<16x16xf32>
    %229 = arith.mulf %224, %228 : vector<16x16xf32>
    %cst_87 = arith.constant dense<0.000000e+00> : vector<16x8xf32>
    %230 = tpu.matmul %229, %215, %cst_87 {dimension_numbers = #tpu.dot_dimension_numbers<[1], [0], [0], [1], [0, 0, 1, 1], [], []>} : vector<16x16xf32>, vector<16x8xf32>, vector<16x8xf32> -> vector<16x8xf32>
    %231 = vector.extract_strided_slice %176 {offsets = [0, 24], sizes = [16, 8], strides = [1, 1]} : vector<16x32xf32> to vector<16x8xf32>
    %232 = vector.extract_strided_slice %59 {offsets = [0, 24], sizes = [16, 8], strides = [1, 1]} : vector<16x32xf32> to vector<16x8xf32>
    %233 = vector.extract_strided_slice %60 {offsets = [0, 24], sizes = [16, 8], strides = [1, 1]} : vector<16x32xf32> to vector<16x8xf32>
    %cst_88 = arith.constant dense<0.000000e+00> : vector<16x16xf32>
    %234 = tpu.matmul %231, %232, %cst_88 {dimension_numbers = #tpu.dot_dimension_numbers<[1], [1], [0], [0], [0, 0, 1, 0], [], []>} : vector<16x8xf32>, vector<16x8xf32>, vector<16x16xf32> -> vector<16x16xf32>
    %cst_89 = arith.constant 0.353553385 : f32
    %235 = vector.broadcast %cst_89 : f32 to vector<16x16xf32>
    %236 = arith.mulf %234, %235 : vector<16x16xf32>
    %237 = arith.addf %236, %51 : vector<16x16xf32>
    %cst_90 = arith.constant dense<0xFF800000> : vector<16xf32>
    %238 = vector.multi_reduction <maximumf>, %237, %cst_90 [1] : vector<16x16xf32> to vector<16xf32>
    %239 = vector.shape_cast %238 : vector<16xf32> to vector<16x1xf32>
    %240 = vector.broadcast %239 : vector<16x1xf32> to vector<16x16xf32>
    %241 = arith.subf %237, %240 : vector<16x16xf32>
    %242 = math.exp %241 : vector<16x16xf32>
    %cst_91 = arith.constant dense<0.000000e+00> : vector<16xf32>
    %243 = vector.multi_reduction <add>, %242, %cst_91 [1] : vector<16x16xf32> to vector<16xf32>
    %244 = vector.shape_cast %243 : vector<16xf32> to vector<16x1xf32>
    %245 = tpu.reciprocal %244 : vector<16x1xf32> -> vector<16x1xf32>
    %246 = vector.broadcast %245 : vector<16x1xf32> to vector<16x16xf32>
    %247 = arith.mulf %242, %246 : vector<16x16xf32>
    %cst_92 = arith.constant dense<0.000000e+00> : vector<16x8xf32>
    %248 = tpu.matmul %247, %233, %cst_92 {dimension_numbers = #tpu.dot_dimension_numbers<[1], [0], [0], [1], [0, 0, 1, 1], [], []>} : vector<16x16xf32>, vector<16x8xf32>, vector<16x8xf32> -> vector<16x8xf32>
    %249 = tpu.concatenate %194, %212, %230, %248 in 1 : vector<16x8xf32>, vector<16x8xf32>, vector<16x8xf32>, vector<16x8xf32> -> vector<16x32xf32>
    %cst_93 = arith.constant dense<0.000000e+00> : vector<16x32xf32>
    %250 = tpu.matmul %249, %11, %cst_93 {dimension_numbers = #tpu.dot_dimension_numbers<[1], [0], [0], [1], [0, 0, 1, 1], [], []>} : vector<16x32xf32>, vector<32x32xf32>, vector<16x32xf32> -> vector<16x32xf32>
    %251 = vector.shape_cast %17 : vector<32xf32> to vector<1x32xf32>
    %252 = vector.broadcast %251 : vector<1x32xf32> to vector<16x32xf32>
    %253 = arith.addf %250, %252 : vector<16x32xf32>
    %254 = arith.addf %172, %253 : vector<16x32xf32>
    %cst_94 = arith.constant dense<0.000000e+00> : vector<16xf32>
    %255 = vector.multi_reduction <add>, %254, %cst_94 [1] : vector<16x32xf32> to vector<16xf32>
    %256 = vector.shape_cast %255 : vector<16xf32> to vector<16x1xf32>
    %cst_95 = arith.constant 3.200000e+01 : f32
    %257 = vector.broadcast %cst_95 : f32 to vector<16x1xf32>
    %258 = arith.divf %256, %257 : vector<16x1xf32>
    %259 = vector.broadcast %258 : vector<16x1xf32> to vector<16x32xf32>
    %260 = arith.subf %254, %259 : vector<16x32xf32>
    %261 = arith.mulf %260, %260 : vector<16x32xf32>
    %cst_96 = arith.constant dense<0.000000e+00> : vector<16xf32>
    %262 = vector.multi_reduction <add>, %261, %cst_96 [1] : vector<16x32xf32> to vector<16xf32>
    %263 = vector.shape_cast %262 : vector<16xf32> to vector<16x1xf32>
    %cst_97 = arith.constant 3.200000e+01 : f32
    %264 = vector.broadcast %cst_97 : f32 to vector<16x1xf32>
    %265 = arith.divf %263, %264 : vector<16x1xf32>
    %266 = vector.broadcast %258 : vector<16x1xf32> to vector<16x32xf32>
    %267 = arith.subf %254, %266 : vector<16x32xf32>
    %cst_98 = arith.constant 9.99999974E-6 : f32
    %268 = vector.broadcast %cst_98 : f32 to vector<16x1xf32>
    %269 = arith.addf %265, %268 : vector<16x1xf32>
    %270 = math.rsqrt %269 : vector<16x1xf32>
    %271 = vector.broadcast %270 : vector<16x1xf32> to vector<16x32xf32>
    %272 = arith.mulf %267, %271 : vector<16x32xf32>
    %273 = vector.shape_cast %21 : vector<32xf32> to vector<1x32xf32>
    %274 = vector.broadcast %273 : vector<1x32xf32> to vector<16x32xf32>
    %275 = arith.mulf %272, %274 : vector<16x32xf32>
    %276 = vector.shape_cast %23 : vector<32xf32> to vector<1x32xf32>
    %277 = vector.broadcast %276 : vector<1x32xf32> to vector<16x32xf32>
    %278 = arith.addf %275, %277 : vector<16x32xf32>
    %c0_99 = arith.constant 0 : index
    %c0_100 = arith.constant 0 : index
    %279 = vector.load %arg11[%c0_99, %c0_100] : memref<32x64xf32, #tpu.memory_space<vmem>>, vector<32x64xf32>
    %cst_101 = arith.constant dense<0.000000e+00> : vector<16x64xf32>
    %280 = tpu.matmul %278, %279, %cst_101 {dimension_numbers = #tpu.dot_dimension_numbers<[1], [0], [0], [1], [0, 0, 1, 1], [], []>} : vector<16x32xf32>, vector<32x64xf32>, vector<16x64xf32> -> vector<16x64xf32>
    %c0_102 = arith.constant 0 : index
    %c0_103 = arith.constant 0 : index
    %281 = vector.load %arg12[%c0_102, %c0_103] : memref<1x64xf32, #tpu.memory_space<vmem>>, vector<1x64xf32>
    %282 = vector.shape_cast %281 : vector<1x64xf32> to vector<64xf32>
    %283 = vector.shape_cast %282 : vector<64xf32> to vector<1x64xf32>
    %284 = vector.broadcast %283 : vector<1x64xf32> to vector<16x64xf32>
    %285 = arith.addf %280, %284 : vector<16x64xf32>
    %cst_104 = arith.constant 0.000000e+00 : f32
    %286 = vector.broadcast %cst_104 : f32 to vector<16x64xf32>
    %287 = arith.maximumf %285, %286 : vector<16x64xf32>
    %c0_105 = arith.constant 0 : index
    %c0_106 = arith.constant 0 : index
    %288 = vector.load %arg13[%c0_105, %c0_106] : memref<64x32xf32, #tpu.memory_space<vmem>>, vector<64x32xf32>
    %cst_107 = arith.constant dense<0.000000e+00> : vector<16x32xf32>
    %289 = tpu.matmul %287, %288, %cst_107 {dimension_numbers = #tpu.dot_dimension_numbers<[1], [0], [0], [1], [0, 0, 1, 1], [], []>} : vector<16x64xf32>, vector<64x32xf32>, vector<16x32xf32> -> vector<16x32xf32>
    %290 = vector.shape_cast %19 : vector<32xf32> to vector<1x32xf32>
    %291 = vector.broadcast %290 : vector<1x32xf32> to vector<16x32xf32>
    %292 = arith.addf %289, %291 : vector<16x32xf32>
    %293 = arith.addf %278, %292 : vector<16x32xf32>
    %cst_108 = arith.constant dense<0.000000e+00> : vector<16xf32>
    %294 = vector.multi_reduction <add>, %293, %cst_108 [1] : vector<16x32xf32> to vector<16xf32>
    %295 = vector.shape_cast %294 : vector<16xf32> to vector<16x1xf32>
    %cst_109 = arith.constant 3.200000e+01 : f32
    %296 = vector.broadcast %cst_109 : f32 to vector<16x1xf32>
    %297 = arith.divf %295, %296 : vector<16x1xf32>
    %298 = vector.broadcast %297 : vector<16x1xf32> to vector<16x32xf32>
    %299 = arith.subf %293, %298 : vector<16x32xf32>
    %300 = arith.mulf %299, %299 : vector<16x32xf32>
    %cst_110 = arith.constant dense<0.000000e+00> : vector<16xf32>
    %301 = vector.multi_reduction <add>, %300, %cst_110 [1] : vector<16x32xf32> to vector<16xf32>
    %302 = vector.shape_cast %301 : vector<16xf32> to vector<16x1xf32>
    %cst_111 = arith.constant 3.200000e+01 : f32
    %303 = vector.broadcast %cst_111 : f32 to vector<16x1xf32>
    %304 = arith.divf %302, %303 : vector<16x1xf32>
    %305 = vector.broadcast %297 : vector<16x1xf32> to vector<16x32xf32>
    %306 = arith.subf %293, %305 : vector<16x32xf32>
    %cst_112 = arith.constant 9.99999974E-6 : f32
    %307 = vector.broadcast %cst_112 : f32 to vector<16x1xf32>
    %308 = arith.addf %304, %307 : vector<16x1xf32>
    %309 = math.rsqrt %308 : vector<16x1xf32>
    %310 = vector.broadcast %309 : vector<16x1xf32> to vector<16x32xf32>
    %311 = arith.mulf %306, %310 : vector<16x32xf32>
    %312 = vector.shape_cast %21 : vector<32xf32> to vector<1x32xf32>
    %313 = vector.broadcast %312 : vector<1x32xf32> to vector<16x32xf32>
    %314 = arith.mulf %311, %313 : vector<16x32xf32>
    %315 = vector.shape_cast %23 : vector<32xf32> to vector<1x32xf32>
    %316 = vector.broadcast %315 : vector<1x32xf32> to vector<16x32xf32>
    %317 = arith.addf %314, %316 : vector<16x32xf32>
    %318 = vector.shape_cast %317 : vector<16x32xf32> to vector<2x8x32xf32>
    %c0_113 = arith.constant 0 : index
    %c0_114 = arith.constant 0 : index
    %c0_115 = arith.constant 0 : index
    %c0_116 = arith.constant 0 : index
    %319 = vector.load %arg14[%c0_113, %c0_114, %c0_115, %c0_116] : memref<1x2x8x32xf32, #tpu.memory_space<vmem>>, vector<1x2x8x32xf32>
    %320 = vector.shape_cast %319 : vector<1x2x8x32xf32> to vector<2x8x32xf32>
    %321 = vector.shape_cast %318 : vector<2x8x32xf32> to vector<1x2x8x32xf32>
    tpu.vector_store %arg14[%c0_113, %c0_114, %c0_115, %c0_116], %321 {strides = array<i32>} : memref<1x2x8x32xf32, #tpu.memory_space<vmem>>, vector<1x2x8x32xf32>,
    return
  }
  func.func @transform_0(%arg0: i32) -> (i32, i32, i32, i32) {
    %c0_i32 = arith.constant 0 : i32
    %c0_i32_0 = arith.constant 0 : i32
    %c0_i32_1 = arith.constant 0 : i32
    %c0_i32_2 = arith.constant 0 : i32
    return %arg0, %c0_i32, %c0_i32_0, %c0_i32_1 : i32, i32, i32, i32
  }
  func.func @transform_1(%arg0: i32) -> (i32, i32, i32, i32) {
    %c1_i32 = arith.constant 1 : i32
    %0 = arith.subi %c1_i32, %arg0 : i32
    %c0_i32 = arith.constant 0 : i32
    %c0_i32_0 = arith.constant 0 : i32
    %c0_i32_1 = arith.constant 0 : i32
    %c0_i32_2 = arith.constant 0 : i32
    return %0, %c0_i32, %c0_i32_0, %c0_i32_1 : i32, i32, i32, i32
  }
  func.func @transform_2(%arg0: i32) -> (i32, i32, i32, i32) {
    %c0_i32 = arith.constant 0 : i32
    %c0_i32_0 = arith.constant 0 : i32
    %c0_i32_1 = arith.constant 0 : i32
    %c0_i32_2 = arith.constant 0 : i32
    return %arg0, %c0_i32, %c0_i32_0, %c0_i32_1 : i32, i32, i32, i32
  }
  func.func @transform_3(%arg0: i32) -> (i32, i32, i32, i32) {
    %c1_i32 = arith.constant 1 : i32
    %0 = arith.subi %c1_i32, %arg0 : i32
    %c0_i32 = arith.constant 0 : i32
    %c0_i32_0 = arith.constant 0 : i32
    %c0_i32_1 = arith.constant 0 : i32
    %c0_i32_2 = arith.constant 0 : i32
    return %0, %c0_i32, %c0_i32_0, %c0_i32_1 : i32, i32, i32, i32
  }
  func.func @transform_4(%arg0: i32) -> (i32, i32) {
    %c0_i32 = arith.constant 0 : i32
    %c0_i32_0 = arith.constant 0 : i32
    %c0_i32_1 = arith.constant 0 : i32
    return %c0_i32, %c0_i32_0 : i32, i32
  }
  func.func @transform_5(%arg0: i32) -> (i32, i32) {
    %c0_i32 = arith.constant 0 : i32
    %c0_i32_0 = arith.constant 0 : i32
    %c0_i32_1 = arith.constant 0 : i32
    return %c0_i32, %c0_i32_0 : i32, i32
  }
  func.func @transform_6(%arg0: i32) -> (i32, i32) {
    %c0_i32 = arith.constant 0 : i32
    %c0_i32_0 = arith.constant 0 : i32
    %c0_i32_1 = arith.constant 0 : i32
    return %c0_i32, %c0_i32_0 : i32, i32
  }
  func.func @transform_7(%arg0: i32) -> (i32, i32) {
    %c0_i32 = arith.constant 0 : i32
    %c0_i32_0 = arith.constant 0 : i32
    %c0_i32_1 = arith.constant 0 : i32
    return %c0_i32, %c0_i32_0 : i32, i32
  }
  func.func @transform_8(%arg0: i32) -> (i32, i32, i32) {
    %c0_i32 = arith.constant 0 : i32
    %c0_i32_0 = arith.constant 0 : i32
    %c0_i32_1 = arith.constant 0 : i32
    %c0_i32_2 = arith.constant 0 : i32
    return %c0_i32, %c0_i32_0, %c0_i32_1 : i32, i32, i32
  }
  func.func @transform_9(%arg0: i32) -> (i32, i32) {
    %c0_i32 = arith.constant 0 : i32
    %c0_i32_0 = arith.constant 0 : i32
    %c0_i32_1 = arith.constant 0 : i32
    return %c0_i32, %c0_i32_0 : i32, i32
  }
  func.func @transform_10(%arg0: i32) -> (i32, i32) {
    %c0_i32 = arith.constant 0 : i32
    %c0_i32_0 = arith.constant 0 : i32
    %c0_i32_1 = arith.constant 0 : i32
    return %c0_i32, %c0_i32_0 : i32, i32
  }
  func.func @transform_11(%arg0: i32) -> (i32, i32) {
    %c0_i32 = arith.constant 0 : i32
    %c0_i32_0 = arith.constant 0 : i32
    %c0_i32_1 = arith.constant 0 : i32
    return %c0_i32, %c0_i32_0 : i32, i32
  }
  func.func @transform_12(%arg0: i32) -> (i32, i32) {
    %c0_i32 = arith.constant 0 : i32
    %c0_i32_0 = arith.constant 0 : i32
    %c0_i32_1 = arith.constant 0 : i32
    return %c0_i32, %c0_i32_0 : i32, i32
  }
  func.func @transform_13(%arg0: i32) -> (i32, i32, i32, i32) {
    %c0_i32 = arith.constant 0 : i32
    %c0_i32_0 = arith.constant 0 : i32
    %c0_i32_1 = arith.constant 0 : i32
    %c0_i32_2 = arith.constant 0 : i32
    return %arg0, %c0_i32, %c0_i32_0, %c0_i32_1 : i32, i32, i32, i32
  }
}

</mosaic_0001>

<llo_original>
// kernel: decoder_layer.1
$region0: #{decoder_layer.1}
  #allocation0 [shape = 'u32[]', space=smem, size = 0x4, offset = 0x4, fixed_abs, tag = 'smem constant byte address 0x4 - core index']
  #allocation1 [shape = 'u32[144,128]{1,0:T(1,128)}', space=vmem, size = 0x12000, scoped, tag = 'internal scratch']
  %s0 = inlined_call_operand.vmem [shape: f32[2,2,8,32], index: 0, kind: input, shape index: {}, may-alias: {0,1}]
  %s1 = inlined_call_operand.vmem [shape: f32[2,2,8,32], index: 1, kind: input, shape index: {}, may-alias: {0,1}]
  %s2 = inlined_call_operand.vmem [shape: f32[2,2,8,8], index: 2, kind: input, shape index: {}, may-alias: {2,3}]
  %s3 = inlined_call_operand.vmem [shape: f32[2,2,8,8], index: 3, kind: input, shape index: {}, may-alias: {2,3}]
  %s4 = inlined_call_operand.vmem [shape: f32[32,96], index: 4, kind: input, shape index: {}]
  %s5 = inlined_call_operand.vmem [shape: f32[1,96], index: 5, kind: input, shape index: {}]
  %s6 = inlined_call_operand.vmem [shape: f32[32,64], index: 6, kind: input, shape index: {}]
  %s7 = inlined_call_operand.vmem [shape: f32[1,64], index: 7, kind: input, shape index: {}]
  %s8 = inlined_call_operand.vmem [shape: f32[3,32,32], index: 8, kind: input, shape index: {}]
  %s9 = inlined_call_operand.vmem [shape: f32[6,32], index: 9, kind: input, shape index: {}]
  %s10 = inlined_call_operand.vmem [shape: f32[32,64], index: 10, kind: input, shape index: {}]
  %s11 = inlined_call_operand.vmem [shape: f32[1,64], index: 11, kind: input, shape index: {}]
  %s12 = inlined_call_operand.vmem [shape: f32[64,32], index: 12, kind: input, shape index: {}]
  %s13 = inlined_call_operand.vmem [shape: f32[2,2,8,32], index: 13, kind: output, shape index: {}]
  %s14 = sld [smem:[#allocation0]]
  $region85: #{decoder_layer.1} parent=0
    _
  %s16 = ssub.s32 1, %s14
  %s17 = scalar_select 0, %s16, %s14
  loop: start=0, step=1, limit=4
  $region2: #{decoder_layer.1} parent=0 // loop_pre_header
    _
  $region3: #{decoder_layer.1} parent=0 // loop_header
    %s19 = sphi 0, %s23
    %p20 = scmp.ge.s32.totalorder %s19, 4
    %s29 = sphi 0, %s31
    %s32 = sphi 0, %s29
    %s33 = sphi 0, %s32
    %s49 = sphi 0, %s33
    %s57 = sphi 0, %s59
    %s60 = sphi 0, %s57
    %s61 = sphi 0, %s60
    %s77 = sphi 0, %s61
    %s83 = sphi 0, %s85
    %s86 = sphi 0, %s83
    %s87 = sphi 0, %s86
    %s103 = sphi 0, %s87
    %s111 = sphi 0, %s113
    %s114 = sphi 0, %s111
    %s115 = sphi 0, %s114
    %s131 = sphi 0, %s115
    %s135 = sphi 0, %s135
    %s137 = sphi 0, %s135
    %s138 = sphi 0, %s137
    %s152 = sphi 0, %s138
    %s156 = sphi 0, %s156
    %s158 = sphi 0, %s156
    %s159 = sphi 0, %s158
    %s173 = sphi 0, %s159
    %s177 = sphi 0, %s177
    %s179 = sphi 0, %s177
    %s180 = sphi 0, %s179
    %s194 = sphi 0, %s180
    %s198 = sphi 0, %s198
    %s200 = sphi 0, %s198
    %s201 = sphi 0, %s200
    %s215 = sphi 0, %s201
    %s219 = sphi 0, %s219
    %s221 = sphi 0, %s219
    %s222 = sphi 0, %s221
    %s236 = sphi 0, %s222
    %s240 = sphi 0, %s240
    %s242 = sphi 0, %s240
    %s243 = sphi 0, %s242
    %s257 = sphi 0, %s243
    %s261 = sphi 0, %s261
    %s263 = sphi 0, %s261
    %s264 = sphi 0, %s263
    %s278 = sphi 0, %s264
    %s282 = sphi 0, %s282
    %s284 = sphi 0, %s282
    %s285 = sphi 0, %s284
    %s299 = sphi 0, %s285
    %s303 = sphi 0, %s303
    %s305 = sphi 0, %s303
    %s306 = sphi 0, %s305
    %s320 = sphi 0, %s306
    %s326 = sphi 0, %s328
    %s329 = sphi 0, %s326
    %s330 = sphi 0, %s329
    %s346 = sphi 0, %s330
  $region4: #{decoder_layer.1} parent=0 // loop_header_branch
    %22 = sbr.rel (%p20) target = $region8
  $region5: #{decoder_layer.1} parent=0 // loop_body
    %s24 = ssub.s32 %s19, 1
    %s25 = ssub.s32 %s19, 2
    %s26 = sadd.s32 %s19, 1
    %s27 = ssub.s32 %s19, %s26
    %p28 = scmp.eq.s32.totalorder %s27, 0
    %s30 = sadd.s32 %s29, 1
    %s31 = scalar_select %p28, %s29, %s30
    %p34 = pneg %p28
    %p35 = scmp.eq.s32.totalorder %s19, 1
    %p36 = por %p34, %p35
    %p37 = scmp.ne.s32.totalorder %s29, %s32
    %p38 = scmp.eq.s32.totalorder %s19, 0
    %p39 = por %p37, %p38
    %p40 = scmp.ne.s32.totalorder %s29, %s32
    %p41 = scmp.eq.s32.totalorder %s24, 1
    %p42 = por %p40, %p41
    %p43 = scmp.ne.s32.totalorder %s32, %s33
    %p44 = scmp.eq.s32.totalorder %s24, 0
    %p45 = por %p43, %p44
    %p46 = scmp.ne.s32.totalorder %s32, %s33
    %p47 = scmp.eq.s32.totalorder %s25, 1
    %p48 = por %p46, %p47
    %p50 = scmp.ne.s32.totalorder %s33, %s49
    %p51 = scmp.eq.s32.totalorder %s25, 0
    %p52 = por %p50, %p51
    %s53 = ssub.s32 1, %s19
    %s54 = ssub.s32 1, %s26
    %s55 = ssub.s32 %s53, %s54
    %p56 = scmp.eq.s32.totalorder %s55, 0
    %s58 = sadd.s32 %s57, 1
    %s59 = scalar_select %p56, %s57, %s58
    %p62 = pneg %p56
    %p63 = scmp.eq.s32.totalorder %s19, 1
    %p64 = por %p62, %p63
    %p65 = scmp.ne.s32.totalorder %s57, %s60
    %p66 = scmp.eq.s32.totalorder %s19, 0
    %p67 = por %p65, %p66
    %p68 = scmp.ne.s32.totalorder %s57, %s60
    %p69 = scmp.eq.s32.totalorder %s24, 1
    %p70 = por %p68, %p69
    %p71 = scmp.ne.s32.totalorder %s60, %s61
    %p72 = scmp.eq.s32.totalorder %s24, 0
    %p73 = por %p71, %p72
    %p74 = scmp.ne.s32.totalorder %s60, %s61
    %p75 = scmp.eq.s32.totalorder %s25, 1
    %p76 = por %p74, %p75
    %p78 = scmp.ne.s32.totalorder %s61, %s77
    %p79 = scmp.eq.s32.totalorder %s25, 0
    %p80 = por %p78, %p79
    %s81 = ssub.s32 %s19, %s26
    %p82 = scmp.eq.s32.totalorder %s81, 0
    %s84 = sadd.s32 %s83, 1
    %s85 = scalar_select %p82, %s83, %s84
    %p88 = pneg %p82
    %p89 = scmp.eq.s32.totalorder %s19, 1
    %p90 = por %p88, %p89
    %p91 = scmp.ne.s32.totalorder %s83, %s86
    %p92 = scmp.eq.s32.totalorder %s19, 0
    %p93 = por %p91, %p92
    %p94 = scmp.ne.s32.totalorder %s83, %s86
    %p95 = scmp.eq.s32.totalorder %s24, 1
    %p96 = por %p94, %p95
    %p97 = scmp.ne.s32.totalorder %s86, %s87
    %p98 = scmp.eq.s32.totalorder %s24, 0
    %p99 = por %p97, %p98
    %p100 = scmp.ne.s32.totalorder %s86, %s87
    %p101 = scmp.eq.s32.totalorder %s25, 1
    %p102 = por %p100, %p101
    %p104 = scmp.ne.s32.totalorder %s87, %s103
    %p105 = scmp.eq.s32.totalorder %s25, 0
    %p106 = por %p104, %p105
    %s107 = ssub.s32 1, %s19
    %s108 = ssub.s32 1, %s26
    %s109 = ssub.s32 %s107, %s108
    %p110 = scmp.eq.s32.totalorder %s109, 0
    %s112 = sadd.s32 %s111, 1
    %s113 = scalar_select %p110, %s111, %s112
    %p116 = pneg %p110
    %p117 = scmp.eq.s32.totalorder %s19, 1
    %p118 = por %p116, %p117
    %p119 = scmp.ne.s32.totalorder %s111, %s114
    %p120 = scmp.eq.s32.totalorder %s19, 0
    %p121 = por %p119, %p120
    %p122 = scmp.ne.s32.totalorder %s111, %s114
    %p123 = scmp.eq.s32.totalorder %s24, 1
    %p124 = por %p122, %p123
    %p125 = scmp.ne.s32.totalorder %s114, %s115
    %p126 = scmp.eq.s32.totalorder %s24, 0
    %p127 = por %p125, %p126
    %p128 = scmp.ne.s32.totalorder %s114, %s115
    %p129 = scmp.eq.s32.totalorder %s25, 1
    %p130 = por %p128, %p129
    %p132 = scmp.ne.s32.totalorder %s115, %s131
    %p133 = scmp.eq.s32.totalorder %s25, 0
    %p134 = por %p132, %p133
    %s136 = sadd.s32 %s135, 1
    %p139 = scmp.eq.s32.totalorder %s19, 1
    %p140 = scmp.ne.s32.totalorder %s135, %s137
    %p141 = scmp.eq.s32.totalorder %s19, 0
    %p142 = por %p140, %p141
    %p143 = scmp.ne.s32.totalorder %s135, %s137
    %p144 = scmp.eq.s32.totalorder %s24, 1
    %p145 = por %p143, %p144
    %p146 = scmp.ne.s32.totalorder %s137, %s138
    %p147 = scmp.eq.s32.totalorder %s24, 0
    %p148 = por %p146, %p147
    %p149 = scmp.ne.s32.totalorder %s137, %s138
    %p150 = scmp.eq.s32.totalorder %s25, 1
    %p151 = por %p149, %p150
    %p153 = scmp.ne.s32.totalorder %s138, %s152
    %p154 = scmp.eq.s32.totalorder %s25, 0
    %p155 = por %p153, %p154
    %s157 = sadd.s32 %s156, 1
    %p160 = scmp.eq.s32.totalorder %s19, 1
    %p161 = scmp.ne.s32.totalorder %s156, %s158
    %p162 = scmp.eq.s32.totalorder %s19, 0
    %p163 = por %p161, %p162
    %p164 = scmp.ne.s32.totalorder %s156, %s158
    %p165 = scmp.eq.s32.totalorder %s24, 1
    %p166 = por %p164, %p165
    %p167 = scmp.ne.s32.totalorder %s158, %s159
    %p168 = scmp.eq.s32.totalorder %s24, 0
    %p169 = por %p167, %p168
    %p170 = scmp.ne.s32.totalorder %s158, %s159
    %p171 = scmp.eq.s32.totalorder %s25, 1
    %p172 = por %p170, %p171
    %p174 = scmp.ne.s32.totalorder %s159, %s173
    %p175 = scmp.eq.s32.totalorder %s25, 0
    %p176 = por %p174, %p175
    %s178 = sadd.s32 %s177, 1
    %p181 = scmp.eq.s32.totalorder %s19, 1
    %p182 = scmp.ne.s32.totalorder %s177, %s179
    %p183 = scmp.eq.s32.totalorder %s19, 0
    %p184 = por %p182, %p183
    %p185 = scmp.ne.s32.totalorder %s177, %s179
    %p186 = scmp.eq.s32.totalorder %s24, 1
    %p187 = por %p185, %p186
    %p188 = scmp.ne.s32.totalorder %s179, %s180
    %p189 = scmp.eq.s32.totalorder %s24, 0
    %p190 = por %p188, %p189
    %p191 = scmp.ne.s32.totalorder %s179, %s180
    %p192 = scmp.eq.s32.totalorder %s25, 1
    %p193 = por %p191, %p192
    %p195 = scmp.ne.s32.totalorder %s180, %s194
    %p196 = scmp.eq.s32.totalorder %s25, 0
    %p197 = por %p195, %p196
    %s199 = sadd.s32 %s198, 1
    %p202 = scmp.eq.s32.totalorder %s19, 1
    %p203 = scmp.ne.s32.totalorder %s198, %s200
    %p204 = scmp.eq.s32.totalorder %s19, 0
    %p205 = por %p203, %p204
    %p206 = scmp.ne.s32.totalorder %s198, %s200
    %p207 = scmp.eq.s32.totalorder %s24, 1
    %p208 = por %p206, %p207
    %p209 = scmp.ne.s32.totalorder %s200, %s201
    %p210 = scmp.eq.s32.totalorder %s24, 0
    %p211 = por %p209, %p210
    %p212 = scmp.ne.s32.totalorder %s200, %s201
    %p213 = scmp.eq.s32.totalorder %s25, 1
    %p214 = por %p212, %p213
    %p216 = scmp.ne.s32.totalorder %s201, %s215
    %p217 = scmp.eq.s32.totalorder %s25, 0
    %p218 = por %p216, %p217
    %s220 = sadd.s32 %s219, 1
    %p223 = scmp.eq.s32.totalorder %s19, 1
    %p224 = scmp.ne.s32.totalorder %s219, %s221
    %p225 = scmp.eq.s32.totalorder %s19, 0
    %p226 = por %p224, %p225
    %p227 = scmp.ne.s32.totalorder %s219, %s221
    %p228 = scmp.eq.s32.totalorder %s24, 1
    %p229 = por %p227, %p228
    %p230 = scmp.ne.s32.totalorder %s221, %s222
    %p231 = scmp.eq.s32.totalorder %s24, 0
    %p232 = por %p230, %p231
    %p233 = scmp.ne.s32.totalorder %s221, %s222
    %p234 = scmp.eq.s32.totalorder %s25, 1
    %p235 = por %p233, %p234
    %p237 = scmp.ne.s32.totalorder %s222, %s236
    %p238 = scmp.eq.s32.totalorder %s25, 0
    %p239 = por %p237, %p238
    %s241 = sadd.s32 %s240, 1
    %p244 = scmp.eq.s32.totalorder %s19, 1
    %p245 = scmp.ne.s32.totalorder %s240, %s242
    %p246 = scmp.eq.s32.totalorder %s19, 0
    %p247 = por %p245, %p246
    %p248 = scmp.ne.s32.totalorder %s240, %s242
    %p249 = scmp.eq.s32.totalorder %s24, 1
    %p250 = por %p248, %p249
    %p251 = scmp.ne.s32.totalorder %s242, %s243
    %p252 = scmp.eq.s32.totalorder %s24, 0
    %p253 = por %p251, %p252
    %p254 = scmp.ne.s32.totalorder %s242, %s243
    %p255 = scmp.eq.s32.totalorder %s25, 1
    %p256 = por %p254, %p255
    %p258 = scmp.ne.s32.totalorder %s243, %s257
    %p259 = scmp.eq.s32.totalorder %s25, 0
    %p260 = por %p258, %p259
    %s262 = sadd.s32 %s261, 1
    %p265 = scmp.eq.s32.totalorder %s19, 1
    %p266 = scmp.ne.s32.totalorder %s261, %s263
    %p267 = scmp.eq.s32.totalorder %s19, 0
    %p268 = por %p266, %p267
    %p269 = scmp.ne.s32.totalorder %s261, %s263
    %p270 = scmp.eq.s32.totalorder %s24, 1
    %p271 = por %p269, %p270
    %p272 = scmp.ne.s32.totalorder %s263, %s264
    %p273 = scmp.eq.s32.totalorder %s24, 0
    %p274 = por %p272, %p273
    %p275 = scmp.ne.s32.totalorder %s263, %s264
    %p276 = scmp.eq.s32.totalorder %s25, 1
    %p277 = por %p275, %p276
    %p279 = scmp.ne.s32.totalorder %s264, %s278
    %p280 = scmp.eq.s32.totalorder %s25, 0
    %p281 = por %p279, %p280
    %s283 = sadd.s32 %s282, 1
    %p286 = scmp.eq.s32.totalorder %s19, 1
    %p287 = scmp.ne.s32.totalorder %s282, %s284
    %p288 = scmp.eq.s32.totalorder %s19, 0
    %p289 = por %p287, %p288
    %p290 = scmp.ne.s32.totalorder %s282, %s284
    %p291 = scmp.eq.s32.totalorder %s24, 1
    %p292 = por %p290, %p291
    %p293 = scmp.ne.s32.totalorder %s284, %s285
    %p294 = scmp.eq.s32.totalorder %s24, 0
    %p295 = por %p293, %p294
    %p296 = scmp.ne.s32.totalorder %s284, %s285
    %p297 = scmp.eq.s32.totalorder %s25, 1
    %p298 = por %p296, %p297
    %p300 = scmp.ne.s32.totalorder %s285, %s299
    %p301 = scmp.eq.s32.totalorder %s25, 0
    %p302 = por %p300, %p301
    %s304 = sadd.s32 %s303, 1
    %p307 = scmp.eq.s32.totalorder %s19, 1
    %p308 = scmp.ne.s32.totalorder %s303, %s305
    %p309 = scmp.eq.s32.totalorder %s19, 0
    %p310 = por %p308, %p309
    %p311 = scmp.ne.s32.totalorder %s303, %s305
    %p312 = scmp.eq.s32.totalorder %s24, 1
    %p313 = por %p311, %p312
    %p314 = scmp.ne.s32.totalorder %s305, %s306
    %p315 = scmp.eq.s32.totalorder %s24, 0
    %p316 = por %p314, %p315
    %p317 = scmp.ne.s32.totalorder %s305, %s306
    %p318 = scmp.eq.s32.totalorder %s25, 1
    %p319 = por %p317, %p318
    %p321 = scmp.ne.s32.totalorder %s306, %s320
    %p322 = scmp.eq.s32.totalorder %s25, 0
    %p323 = por %p321, %p322
    %s324 = ssub.s32 %s19, %s26
    %p325 = scmp.eq.s32.totalorder %s324, 0
    %s327 = sadd.s32 %s326, 1
    %s328 = scalar_select %p325, %s326, %s327
    %p331 = pneg %p325
    %p332 = scmp.eq.s32.totalorder %s19, 1
    %p333 = por %p331, %p332
    %p334 = scmp.ne.s32.totalorder %s326, %s329
    %p335 = scmp.eq.s32.totalorder %s19, 0
    %p336 = por %p334, %p335
    %p337 = scmp.ne.s32.totalorder %s326, %s329
    %p338 = scmp.eq.s32.totalorder %s24, 1
    %p339 = por %p337, %p338
    %p340 = scmp.ne.s32.totalorder %s329, %s330
    %p341 = scmp.eq.s32.totalorder %s24, 0
    %p342 = por %p340, %p341
    %p343 = scmp.ne.s32.totalorder %s329, %s330
    %p344 = scmp.eq.s32.totalorder %s25, 1
    %p345 = por %p343, %p344
    %p347 = scmp.ne.s32.totalorder %s330, %s346
    %p348 = scmp.eq.s32.totalorder %s25, 0
    %p349 = por %p347, %p348
    %p350 = scmp.le.s32.totalorder 1, %s19
    %p351 = scmp.lt.s32.totalorder %s19, 3
    %p352 = pnand %p350, %p351
    %p353 = pneg %p352
    // Predicated region
    $region9: #{decoder_layer.1} parent=5 // pred_check
      _
    $region10: #{decoder_layer.1} parent=5 // pred_check_branch
      %355 = sbr.rel (%p352) target = $region12
    $region11: #{decoder_layer.1} parent=5 // pred_region
      %s356 = ssub.s32 %s19, 1
      // Predicated region
      $region13: #{decoder_layer.1} parent=11 // pred_check
        %p357 = pneg %p148
      $region14: #{decoder_layer.1} parent=11 // pred_check_branch
        %359 = sbr.rel (%p357) target = $region16
      $region15: #{decoder_layer.1} parent=11 // pred_region
        _
      $region16: #{decoder_layer.1} parent=11 // pred_fallthru
        _
      // Predicated region
      $region17: #{decoder_layer.1} parent=11 // pred_check
        %p360 = pneg %p169
      $region18: #{decoder_layer.1} parent=11 // pred_check_branch
        %362 = sbr.rel (%p360) target = $region20
      $region19: #{decoder_layer.1} parent=11 // pred_region
        _
      $region20: #{decoder_layer.1} parent=11 // pred_fallthru
        _
      // Predicated region
      $region21: #{decoder_layer.1} parent=11 // pred_check
        %p363 = pneg %p190
      $region22: #{decoder_layer.1} parent=11 // pred_check_branch
        %365 = sbr.rel (%p363) target = $region24
      $region23: #{decoder_layer.1} parent=11 // pred_region
        _
      $region24: #{decoder_layer.1} parent=11 // pred_fallthru
        _
      // Predicated region
      $region25: #{decoder_layer.1} parent=11 // pred_check
        %p366 = pneg %p211
      $region26: #{decoder_layer.1} parent=11 // pred_check_branch
        %368 = sbr.rel (%p366) target = $region28
      $region27: #{decoder_layer.1} parent=11 // pred_region
        _
      $region28: #{decoder_layer.1} parent=11 // pred_fallthru
        _
      // Predicated region
      $region29: #{decoder_layer.1} parent=11 // pred_check
        %p369 = pneg %p232
      $region30: #{decoder_layer.1} parent=11 // pred_check_branch
        %371 = sbr.rel (%p369) target = $region32
      $region31: #{decoder_layer.1} parent=11 // pred_region
        _
      $region32: #{decoder_layer.1} parent=11 // pred_fallthru
        _
      // Predicated region
      $region33: #{decoder_layer.1} parent=11 // pred_check
        %p372 = pneg %p253
      $region34: #{decoder_layer.1} parent=11 // pred_check_branch
        %374 = sbr.rel (%p372) target = $region36
      $region35: #{decoder_layer.1} parent=11 // pred_region
        _
      $region36: #{decoder_layer.1} parent=11 // pred_fallthru
        _
      // Predicated region
      $region37: #{decoder_layer.1} parent=11 // pred_check
        %p375 = pneg %p274
      $region38: #{decoder_layer.1} parent=11 // pred_check_branch
        %377 = sbr.rel (%p375) target = $region40
      $region39: #{decoder_layer.1} parent=11 // pred_region
        _
      $region40: #{decoder_layer.1} parent=11 // pred_fallthru
        _
      // Predicated region
      $region41: #{decoder_layer.1} parent=11 // pred_check
        %p378 = pneg %p295
      $region42: #{decoder_layer.1} parent=11 // pred_check_branch
        %380 = sbr.rel (%p378) target = $region44
      $region43: #{decoder_layer.1} parent=11 // pred_region
        _
      $region44: #{decoder_layer.1} parent=11 // pred_fallthru
        _
      // Predicated region
      $region45: #{decoder_layer.1} parent=11 // pred_check
        %p381 = pneg %p316
      $region46: #{decoder_layer.1} parent=11 // pred_check_branch
        %383 = sbr.rel (%p381) target = $region48
      $region47: #{decoder_layer.1} parent=11 // pred_region
        _
      $region48: #{decoder_layer.1} parent=11 // pred_fallthru
        _
    $region12: #{decoder_layer.1} parent=5 // pred_fallthru
      _
    %p384 = scmp.lt.s32.totalorder %s19, 2
    // Predicated region
    $region49: #{decoder_layer.1} parent=5 // pred_check
      %p385 = pneg %p384
    $region50: #{decoder_layer.1} parent=5 // pred_check_branch
      %387 = sbr.rel (%p385) target = $region52
    $region51: #{decoder_layer.1} parent=5 // pred_region
      // Predicated region
      $region53: #{decoder_layer.1} parent=51 // pred_check
        %p388 = pneg %p39
      $region54: #{decoder_layer.1} parent=51 // pred_check_branch
        %390 = sbr.rel (%p388) target = $region56
      $region55: #{decoder_layer.1} parent=51 // pred_region
        %p391 = scmp.lt.s32.totalorder %s19, 1
        %s392 = scalar_select %p391, %s19, 1
        %s393 = smul.addr %s392, 2
        %s394 = smul.addr %s393, 8
        %s395 = scalar_lea.vmem %s0, %s394
      $region56: #{decoder_layer.1} parent=51 // pred_fallthru
        _
      // Predicated region
      $region57: #{decoder_layer.1} parent=51 // pred_check
        %p396 = pneg %p67
      $region58: #{decoder_layer.1} parent=51 // pred_check_branch
        %398 = sbr.rel (%p396) target = $region60
      $region59: #{decoder_layer.1} parent=51 // pred_region
        %s399 = ssub.s32 1, %s19
        %p400 = scmp.lt.s32.totalorder %s399, 1
        %s401 = scalar_select %p400, %s399, 1
        %s402 = smul.addr %s401, 2
        %s403 = smul.addr %s402, 8
        %s404 = scalar_lea.vmem %s1, %s403
        %s405 = ssub.s32 1, %s19
      $region60: #{decoder_layer.1} parent=51 // pred_fallthru
        _
      // Predicated region
      $region61: #{decoder_layer.1} parent=51 // pred_check
        %p406 = pneg %p93
      $region62: #{decoder_layer.1} parent=51 // pred_check_branch
        %408 = sbr.rel (%p406) target = $region64
      $region63: #{decoder_layer.1} parent=51 // pred_region
        %p409 = scmp.lt.s32.totalorder %s19, 1
        %s410 = scalar_select %p409, %s19, 1
        %s411 = smul.addr %s410, 2
        %s412 = smul.addr %s411, 8
        %s413 = scalar_lea.vmem %s2, %s412
      $region64: #{decoder_layer.1} parent=51 // pred_fallthru
        _
      // Predicated region
      $region65: #{decoder_layer.1} parent=51 // pred_check
        %p414 = pneg %p121
      $region66: #{decoder_layer.1} parent=51 // pred_check_branch
        %416 = sbr.rel (%p414) target = $region68
      $region67: #{decoder_layer.1} parent=51 // pred_region
        %s417 = ssub.s32 1, %s19
        %p418 = scmp.lt.s32.totalorder %s417, 1
        %s419 = scalar_select %p418, %s417, 1
        %s420 = smul.addr %s419, 2
        %s421 = smul.addr %s420, 8
        %s422 = scalar_lea.vmem %s3, %s421
        %s423 = ssub.s32 1, %s19
      $region68: #{decoder_layer.1} parent=51 // pred_fallthru
        _
    $region52: #{decoder_layer.1} parent=5 // pred_fallthru
      _
    %p424 = scmp.le.s32.totalorder 1, %s19
    %p425 = scmp.lt.s32.totalorder %s19, 3
    %p426 = pnand %p424, %p425
    %p427 = pneg %p426
    // Predicated region
    $region69: #{decoder_layer.1} parent=5 // pred_check
      _
    $region70: #{decoder_layer.1} parent=5 // pred_check_branch
      %429 = sbr.rel (%p426) target = $region72
    $region71: #{decoder_layer.1} parent=5 // pred_region
      %s430 = ssub.s32 %s19, 1
      %p431 = scmp.lt.s32.totalorder %s24, 1
      %s432 = scalar_select %p431, %s24, 1
      %s433 = smul.addr %s432, 2
      %s434 = smul.addr %s433, 8
      %s435 = scalar_lea.vmem %s0, %s434
      %p436 = pneg %p45
      %p437 = pneg %p42
      %s438 = ssub.s32 1, %s24
      %p439 = scmp.lt.s32.totalorder %s438, 1
      %s440 = scalar_select %p439, %s438, 1
      %s441 = smul.addr %s440, 2
      %s442 = smul.addr %s441, 8
      %s443 = scalar_lea.vmem %s1, %s442
      %p444 = pneg %p73
      %p445 = pneg %p70
      %p446 = scmp.lt.s32.totalorder %s24, 1
      %s447 = scalar_select %p446, %s24, 1
      %s448 = smul.addr %s447, 2
      %s449 = smul.addr %s448, 8
      %s450 = scalar_lea.vmem %s2, %s449
      %p451 = pneg %p99
      %p452 = pneg %p96
      %s453 = ssub.s32 1, %s24
      %p454 = scmp.lt.s32.totalorder %s453, 1
      %s455 = scalar_select %p454, %s453, 1
      %s456 = smul.addr %s455, 2
      %s457 = smul.addr %s456, 8
      %s458 = scalar_lea.vmem %s3, %s457
      %p459 = pneg %p127
      %p460 = pneg %p124
      %p461 = pneg %p148
      %p462 = pneg %p145
      %p463 = pneg %p169
      %p464 = pneg %p166
      %p465 = pneg %p190
      %p466 = pneg %p187
      %p467 = pneg %p211
      %p468 = pneg %p208
      %p469 = pneg %p232
      %p470 = pneg %p229
      %p471 = pneg %p253
      %p472 = pneg %p250
      %p473 = pneg %p274
      %p474 = pneg %p271
      %p475 = pneg %p295
      %p476 = pneg %p292
      %p477 = pneg %p316
      %p478 = pneg %p313
      %p479 = pneg %p342
      %p480 = pneg %p339
      %p481 = scmp.lt.s32.totalorder %s24, 1
      %s482 = scalar_select %p481, %s24, 1
      %s483 = smul.addr %s482, 2
      %s484 = smul.addr %s483, 8
      %s485 = scalar_lea.vmem %s13, %s484
      %p486 = scmp.lt.s32.totalorder %s24, 1
      %s487 = scalar_select %p486, %s24, 1
      %s488 = smul.addr %s487, 2
      %s489 = smul.addr %s488, 8
      %s490 = scalar_lea.vmem %s0, %s489
      %s491 = ssub.s32 1, %s24
      %p492 = scmp.lt.s32.totalorder %s491, 1
      %s493 = scalar_select %p492, %s491, 1
      %s494 = smul.addr %s493, 2
      %s495 = smul.addr %s494, 8
      %s496 = scalar_lea.vmem %s1, %s495
      %s497 = ssub.s32 1, %s24
      %p498 = scmp.lt.s32.totalorder %s24, 1
      %s499 = scalar_select %p498, %s24, 1
      %s500 = smul.addr %s499, 2
      %s501 = smul.addr %s500, 8
      %s502 = scalar_lea.vmem %s2, %s501
      %s503 = ssub.s32 1, %s24
      %p504 = scmp.lt.s32.totalorder %s503, 1
      %s505 = scalar_select %p504, %s503, 1
      %s506 = smul.addr %s505, 2
      %s507 = smul.addr %s506, 8
      %s508 = scalar_lea.vmem %s3, %s507
      %s509 = ssub.s32 1, %s24
      %p510 = scmp.lt.s32.totalorder %s24, 1
      %s511 = scalar_select %p510, %s24, 1
      %s512 = smul.addr %s511, 2
      %s513 = smul.addr %s512, 8
      %s514 = scalar_lea.vmem %s13, %s513
      %v515 = vld [vmem:[%s490] sm:$0xff]
      %v516 = vld [vmem:[%s490 + $0x8] sm:$0xff]
      %v517 = vld [vmem:[%s496] sm:$0xff]
      %v518 = vld [vmem:[%s496 + $0x8] sm:$0xff]
      %v519 = vld [vmem:[%s8] sm:$0xff]
      %v520 = vld [vmem:[%s8 + $0x8] sm:$0xff]
      %v521 = vld [vmem:[%s8 + $0x10] sm:$0xff]
      %v522 = vld [vmem:[%s8 + $0x18] sm:$0xff]
      %s523 = scalar_lea.vmem %s8, 32
      %v524 = vld [vmem:[%s523] sm:$0xff]
      %v525 = vld [vmem:[%s523 + $0x8] sm:$0xff]
      %v526 = vld [vmem:[%s523 + $0x10] sm:$0xff]
      %v527 = vld [vmem:[%s523 + $0x18] sm:$0xff]
      %s528 = scalar_lea.vmem %s8, 64
      %v529 = vld [vmem:[%s528] sm:$0xff]
      %v530 = vld [vmem:[%s528 + $0x8] sm:$0xff]
      %v531 = vld [vmem:[%s528 + $0x10] sm:$0xff]
      %v532 = vld [vmem:[%s528 + $0x18] sm:$0xff]
      %v533 = vld [vmem:[%s9] sm:$0x1]
      %v534 = vld [vmem:[%s9 + $0x1] sm:$0x1]
      %v535 = vld [vmem:[%s9 + $0x2] sm:$0x1]
      %v536 = vld [vmem:[%s9 + $0x3] sm:$0x1]
      %v537 = vld [vmem:[%s9 + $0x4] sm:$0x1]
      %v538 = vld [vmem:[%s9 + $0x5] sm:$0x1]
      %v539 = vld [vmem:[%s502] sm:$0xff]
      %v540 = vld [vmem:[%s502 + $0x8] sm:$0xff]
      %v541 = vsub.f32 %v539, 1.0
      %v542 = vsub.f32 %v540, 1.0
      %v543 = vmul.f32 %v541, 1e+10
      %v544 = vmul.f32 %v542, 1e+10
      %vm545 = vcmask 64512
      %v546 = vsel %vm545, %v543, -1e+10
      %548 = vrot.lane.b32.xlu0 %v544, 8
      %v549 = vpop.permute.xlu0 %548
      %v551 = vsel %vm545, -1e+10, %v549
      %v552 = vld [vmem:[%s508] sm:$0xff]
      %v553 = vld [vmem:[%s508 + $0x8] sm:$0xff]
      %v554 = vsub.f32 %v552, 1.0
      %v555 = vsub.f32 %v553, 1.0
      %v556 = vmul.f32 %v554, 1e+10
      %v557 = vmul.f32 %v555, 1e+10
      %v558 = vsel %vm545, %v556, -1e+10
      %560 = vrot.lane.b32.xlu0 %v557, 8
      %v561 = vpop.permute.xlu0 %560
      %v563 = vsel %vm545, -1e+10, %v561
      %v564 = vld [vmem:[%s6] sm:$0xff]
      %v565 = vld [vmem:[%s6 + $0x8] sm:$0xff]
      %v566 = vld [vmem:[%s6 + $0x10] sm:$0xff]
      %v567 = vld [vmem:[%s6 + $0x18] sm:$0xff]
      %v568 = vld [vmem:[%s7] sm:$0x1]
      %v570 = vlaneseq
      %v571 = vshrl.u32 %v570, 7
      %v572 = vsub.s32 0, %v571
      %v573 = vrot.slane %v568, %v572
      %vm575 = vcmask 261120
      %v577 = vsel %vm575, %v517, 0
      %v580 = vsel %vm575, %v518, 0
      %582 = vmatprep.subr.mxu0 0.0
      %583 = vmatpush1.msra.mxu0 %v564
      %584 = vmatprep.subr.mxu0 0.0
      %585 = vmatpush1.msra.mxu0 %v565
      %586 = vmatprep.subr.mxu0 0.0
      %587 = vmatpush1.msra.mxu0 %v566
      %588 = vmatprep.subr.mxu0 0.0
      %589 = vmatpush1.msra.mxu0 %v567
      %590 = vmatprep.subr.mxu0 0.0
      %591 = vmatpush1.msra.mxu0 0.0
      %592 = vmatprep.subr.mxu0 0.0
      %593 = vmatpush1.msra.mxu0 0.0
      %594 = vmatprep.subr.mxu0 0.0
      %595 = vmatpush1.msra.mxu0 0.0
      %596 = vmatprep.subr.mxu0 0.0
      %597 = vmatpush1.msra.mxu0 0.0
      %598 = vmatprep.subr.mxu0 0.0
      %599 = vmatpush1.msra.mxu0 0.0
      %600 = vmatprep.subr.mxu0 0.0
      %601 = vmatpush1.msra.mxu0 0.0
      %602 = vmatprep.subr.mxu0 0.0
      %603 = vmatpush1.msra.mxu0 0.0
      %604 = vmatprep.subr.mxu0 0.0
      %605 = vmatpush1.msra.mxu0 0.0
      %606 = vmatprep.subr.mxu0 0.0
      %607 = vmatpush1.msra.mxu0 0.0
      %608 = vmatprep.subr.mxu0 0.0
      %609 = vmatpush1.msra.mxu0 0.0
      %610 = vmatprep.subr.mxu0 0.0
      %611 = vmatpush1.msra.mxu0 0.0
      %612 = vmatprep.subr.mxu0 0.0
      %613 = vmatpush1.msra.mxu0 0.0
      %614 = vmatprep.subr.mxu0 0.0
      %615 = vmatpush1.msra.mxu0 0.0
      %616 = vmatprep.subr.mxu0 0.0
      %617 = vmatpush1.msra.mxu0 0.0
      %618 = vmatprep.subr.mxu0 0.0
      %619 = vmatpush1.msra.mxu0 0.0
      %620 = vmatprep.subr.mxu0 0.0
      %621 = vmatpush1.msra.mxu0 0.0
      %622 = vmatprep.subr.mxu0 0.0
      %623 = vmatpush1.msra.mxu0 0.0
      %624 = vmatprep.subr.mxu0 0.0
      %625 = vmatpush1.msra.mxu0 0.0
      %626 = vmatprep.subr.mxu0 0.0
      %627 = vmatpush1.msra.mxu0 0.0
      %628 = vmatprep.subr.mxu0 0.0
      %629 = vmatpush1.msra.mxu0 0.0
      %630 = vmatprep.subr.mxu0 0.0
      %631 = vmatpush1.msra.mxu0 0.0
      %632 = vmatprep.subr.mxu0 0.0
      %633 = vmatpush1.msra.mxu0 0.0
      %634 = vmatprep.subr.mxu0 0.0
      %635 = vmatpush1.msra.mxu0 0.0
      %636 = vmatprep.subr.mxu0 0.0
      %637 = vmatpush1.msra.mxu0 0.0
      %638 = vmatprep.subr.mxu0 0.0
      %639 = vmatpush1.msra.mxu0 0.0
      %640 = vmatprep.subr.mxu0 0.0
      %641 = vmatpush1.msra.mxu0 0.0
      %642 = vmatprep.subr.mxu0 0.0
      %643 = vmatpush1.msra.mxu0 0.0
      %644 = vmatprep.subr.mxu0 0.0
      %645 = vmatpush1.msra.mxu0 0.0
      %646 = vmatprep.mubr.f32.mxu0 0.0
      %647 = vmatmul.mubr.f32.gmra.mrb[0].mxu0 %v577
      %v648 = vpop.f32.mrb[0].mxu0
      %v649 = vadd.f32 %v573, %v648
      %v650 = vpop.f32.mrb[0].mxu0
      %651 = vmatprep.mubr.f32.mxu0 0.0
      %652 = vmatmul.mubr.f32.gmra.mrb[0].mxu0 %v580
      %v653 = vpop.f32.mrb[0].mxu0
      %v654 = vadd.f32 %v573, %v653
      %v655 = vpop.f32.mrb[0].mxu0
      %656 = vdwg.mxu0
      %v657 = vld [vmem:[%s4] sm:$0xff]
      %v658 = vld [vmem:[%s4 + $0x8] sm:$0xff]
      %v659 = vld [vmem:[%s4 + $0x10] sm:$0xff]
      %v660 = vld [vmem:[%s4 + $0x18] sm:$0xff]
      %v661 = vld [vmem:[%s5] sm:$0x1]
      %v663 = vlaneseq
      %v664 = vshrl.u32 %v663, 7
      %v665 = vsub.s32 0, %v664
      %v666 = vrot.slane %v661, %v665
      %v669 = vsel %vm575, %v515, 0
      %v672 = vsel %vm575, %v516, 0
      %674 = vmatprep.subr.mxu0 0.0
      %675 = vmatpush1.msra.mxu0 %v657
      %676 = vmatprep.subr.mxu0 0.0
      %677 = vmatpush1.msra.mxu0 %v658
      %678 = vmatprep.subr.mxu0 0.0
      %679 = vmatpush1.msra.mxu0 %v659
      %680 = vmatprep.subr.mxu0 0.0
      %681 = vmatpush1.msra.mxu0 %v660
      %682 = vmatprep.subr.mxu0 0.0
      %683 = vmatpush1.msra.mxu0 0.0
      %684 = vmatprep.subr.mxu0 0.0
      %685 = vmatpush1.msra.mxu0 0.0
      %686 = vmatprep.subr.mxu0 0.0
      %687 = vmatpush1.msra.mxu0 0.0
      %688 = vmatprep.subr.mxu0 0.0
      %689 = vmatpush1.msra.mxu0 0.0
      %690 = vmatprep.subr.mxu0 0.0
      %691 = vmatpush1.msra.mxu0 0.0
      %692 = vmatprep.subr.mxu0 0.0
      %693 = vmatpush1.msra.mxu0 0.0
      %694 = vmatprep.subr.mxu0 0.0
      %695 = vmatpush1.msra.mxu0 0.0
      %696 = vmatprep.subr.mxu0 0.0
      %697 = vmatpush1.msra.mxu0 0.0
      %698 = vmatprep.subr.mxu0 0.0
      %699 = vmatpush1.msra.mxu0 0.0
      %700 = vmatprep.subr.mxu0 0.0
      %701 = vmatpush1.msra.mxu0 0.0
      %702 = vmatprep.subr.mxu0 0.0
      %703 = vmatpush1.msra.mxu0 0.0
      %704 = vmatprep.subr.mxu0 0.0
      %705 = vmatpush1.msra.mxu0 0.0
      %706 = vmatprep.subr.mxu0 0.0
      %707 = vmatpush1.msra.mxu0 0.0
      %708 = vmatprep.subr.mxu0 0.0
      %709 = vmatpush1.msra.mxu0 0.0
      %710 = vmatprep.subr.mxu0 0.0
      %711 = vmatpush1.msra.mxu0 0.0
      %712 = vmatprep.subr.mxu0 0.0
      %713 = vmatpush1.msra.mxu0 0.0
      %714 = vmatprep.subr.mxu0 0.0
      %715 = vmatpush1.msra.mxu0 0.0
      %716 = vmatprep.subr.mxu0 0.0
      %717 = vmatpush1.msra.mxu0 0.0
      %718 = vmatprep.subr.mxu0 0.0
      %719 = vmatpush1.msra.mxu0 0.0
      %720 = vmatprep.subr.mxu0 0.0
      %721 = vmatpush1.msra.mxu0 0.0
      %722 = vmatprep.subr.mxu0 0.0
      %723 = vmatpush1.msra.mxu0 0.0
      %724 = vmatprep.subr.mxu0 0.0
      %725 = vmatpush1.msra.mxu0 0.0
      %726 = vmatprep.subr.mxu0 0.0
      %727 = vmatpush1.msra.mxu0 0.0
      %728 = vmatprep.subr.mxu0 0.0
      %729 = vmatpush1.msra.mxu0 0.0
      %730 = vmatprep.subr.mxu0 0.0
      %731 = vmatpush1.msra.mxu0 0.0
      %732 = vmatprep.subr.mxu0 0.0
      %733 = vmatpush1.msra.mxu0 0.0
      %734 = vmatprep.subr.mxu0 0.0
      %735 = vmatpush1.msra.mxu0 0.0
      %736 = vmatprep.subr.mxu0 0.0
      %737 = vmatpush1.msra.mxu0 0.0
      %738 = vmatprep.mubr.f32.mxu0 0.0
      %739 = vmatmul.mubr.f32.gmra.mrb[0].mxu0 %v669
      %v740 = vpop.f32.mrb[0].mxu0
      %v741 = vadd.f32 %v666, %v740
      %v742 = vpop.f32.mrb[0].mxu0
      %743 = vmatprep.mubr.f32.mxu0 0.0
      %744 = vmatmul.mubr.f32.gmra.mrb[0].mxu0 %v672
      %v745 = vpop.f32.mrb[0].mxu0
      %v746 = vadd.f32 %v666, %v745
      %v747 = vpop.f32.mrb[0].mxu0
      %748 = vdwg.mxu0
      %751 = vrot.lane.b32.xlu0 %v741, 96
      %v752 = vpop.permute.xlu0 %751
      %753 = vrot.lane.b32.xlu0 %v746, 96
      %v754 = vpop.permute.xlu0 %753
      %v755 = vsel %vm545, %v741, 0
      %v757 = vsel %vm545, %v746, 0
      %v759 = vsel %vm545, %v752, 0
      %v761 = vsel %vm545, %v754, 0
      %763 = vmatprep.subr.mxu0 0.0
      %764 = vmatpush1.xpose.msra.mxu0 %v759
      %765 = vmatprep.subr.mxu0 0.0
      %766 = vmatpush1.xpose.msra.mxu0 %v761
      %767 = vmatprep.subr.mxu0 0.0
      %768 = vmatpush1.xpose.msra.mxu0 0.0
      %769 = vmatprep.subr.mxu0 0.0
      %770 = vmatpush1.xpose.msra.mxu0 0.0
      %771 = vmatprep.subr.mxu0 0.0
      %772 = vmatpush1.xpose.msra.mxu0 0.0
      %773 = vmatprep.subr.mxu0 0.0
      %774 = vmatpush1.xpose.msra.mxu0 0.0
      %775 = vmatprep.subr.mxu0 0.0
      %776 = vmatpush1.xpose.msra.mxu0 0.0
      %777 = vmatprep.subr.mxu0 0.0
      %778 = vmatpush1.xpose.msra.mxu0 0.0
      %779 = vmatprep.subr.mxu0 0.0
      %780 = vmatpush1.xpose.msra.mxu0 0.0
      %781 = vmatprep.subr.mxu0 0.0
      %782 = vmatpush1.xpose.msra.mxu0 0.0
      %783 = vmatprep.subr.mxu0 0.0
      %784 = vmatpush1.xpose.msra.mxu0 0.0
      %785 = vmatprep.subr.mxu0 0.0
      %786 = vmatpush1.xpose.msra.mxu0 0.0
      %787 = vmatprep.subr.mxu0 0.0
      %788 = vmatpush1.xpose.msra.mxu0 0.0
      %789 = vmatprep.subr.mxu0 0.0
      %790 = vmatpush1.xpose.msra.mxu0 0.0
      %791 = vmatprep.subr.mxu0 0.0
      %792 = vmatpush1.xpose.msra.mxu0 0.0
      %793 = vmatprep.subr.mxu0 0.0
      %794 = vmatpush1.xpose.msra.mxu0 0.0
      %795 = vmatprep.subr.mxu0 0.0
      %796 = vmatpush1.xpose.msra.mxu0 0.0
      %797 = vmatprep.subr.mxu0 0.0
      %798 = vmatpush1.xpose.msra.mxu0 0.0
      %799 = vmatprep.subr.mxu0 0.0
      %800 = vmatpush1.xpose.msra.mxu0 0.0
      %801 = vmatprep.subr.mxu0 0.0
      %802 = vmatpush1.xpose.msra.mxu0 0.0
      %803 = vmatprep.subr.mxu0 0.0
      %804 = vmatpush1.xpose.msra.mxu0 0.0
      %805 = vmatprep.subr.mxu0 0.0
      %806 = vmatpush1.xpose.msra.mxu0 0.0
      %807 = vmatprep.subr.mxu0 0.0
      %808 = vmatpush1.xpose.msra.mxu0 0.0
      %809 = vmatprep.subr.mxu0 0.0
      %810 = vmatpush1.xpose.msra.mxu0 0.0
      %811 = vmatprep.subr.mxu0 0.0
      %812 = vmatpush1.xpose.msra.mxu0 0.0
      %813 = vmatprep.subr.mxu0 0.0
      %814 = vmatpush1.xpose.msra.mxu0 0.0
      %815 = vmatprep.subr.mxu0 0.0
      %816 = vmatpush1.xpose.msra.mxu0 0.0
      %817 = vmatprep.subr.mxu0 0.0
      %818 = vmatpush1.xpose.msra.mxu0 0.0
      %819 = vmatprep.subr.mxu0 0.0
      %820 = vmatpush1.xpose.msra.mxu0 0.0
      %821 = vmatprep.subr.mxu0 0.0
      %822 = vmatpush1.xpose.msra.mxu0 0.0
      %823 = vmatprep.subr.mxu0 0.0
      %824 = vmatpush1.xpose.msra.mxu0 0.0
      %825 = vmatprep.subr.mxu0 0.0
      %826 = vmatpush1.xpose.msra.mxu0 0.0
      %827 = vmatprep.mubr.f32.mxu0 0.0
      %828 = vmatmul.mubr.f32.gmra.mrb[0].mxu0 %v755
      %v829 = vpop.f32.mrb[0].mxu0
      %v830 = vadd.f32 0.0, %v829
      %v831 = vpop.f32.mrb[0].mxu0
      %832 = vmatprep.mubr.f32.mxu0 0.0
      %833 = vmatmul.mubr.f32.gmra.mrb[0].mxu0 %v757
      %v834 = vpop.f32.mrb[0].mxu0
      %v835 = vadd.f32 0.0, %v834
      %v836 = vpop.f32.mrb[0].mxu0
      %837 = vdwg.mxu0
      %v838 = vmul.f32 %v830, 0.35355338
      %v839 = vmul.f32 %v835, 0.35355338
      %v840 = vadd.f32 %v838, %v546
      %v841 = vadd.f32 %v839, %v551
      %vm842 = vcmask 130048
      %v843 = vsel %vm842, %v840, -inf
      %844 = vmax.xlane.f32.xlu0 %v843
      %v845 = vpop.xlane.xlu0 %844
      %v846 = vsel %vm842, %v841, -inf
      %847 = vmax.xlane.f32.xlu0 %v846
      %v848 = vpop.xlane.xlu0 %847
      %v849 = vsub.f32 %v840, %v845
      %v850 = vsub.f32 %v841, %v848
      %v851 = vmul.f32 %v849, 1.442695
      %v852 = vpow.pop %v851
      %v853 = vmul.f32 %v850, 1.442695
      %v854 = vpow.pop %v853
      %v855 = vsel %vm842, %v852, 0.0
      %856 = vadd.xlane.f32.xlu0 %v855
      %v857 = vpop.xlane.xlu0 %856
      %v858 = vsel %vm842, %v854, 0.0
      %859 = vadd.xlane.f32.xlu0 %v858
      %v860 = vpop.xlane.xlu0 %859
      %v861 = vrcp.pop %v857
      %v862 = vrcp.pop %v860
      %v863 = vmul.f32 %v852, %v861
      %v864 = vmul.f32 %v854, %v862
      %865 = vrot.lane.b32.xlu0 %v741, 64
      %v866 = vpop.permute.xlu0 %865
      %867 = vrot.lane.b32.xlu0 %v746, 64
      %v868 = vpop.permute.xlu0 %867
      %v872 = vsel %vm842, %v863, 0
      %v875 = vsel %vm842, %v864, 0
      %877 = vmatprep.subr.mxu0 0.0
      %878 = vmatpush1.msra.mxu0 %v866
      %879 = vmatprep.subr.mxu0 0.0
      %880 = vmatpush1.msra.mxu0 %v868
      %881 = vmatprep.subr.mxu0 0.0
      %882 = vmatpush1.msra.mxu0 0.0
      %883 = vmatprep.subr.mxu0 0.0
      %884 = vmatpush1.msra.mxu0 0.0
      %885 = vmatprep.subr.mxu0 0.0
      %886 = vmatpush1.msra.mxu0 0.0
      %887 = vmatprep.subr.mxu0 0.0
      %888 = vmatpush1.msra.mxu0 0.0
      %889 = vmatprep.subr.mxu0 0.0
      %890 = vmatpush1.msra.mxu0 0.0
      %891 = vmatprep.subr.mxu0 0.0
      %892 = vmatpush1.msra.mxu0 0.0
      %893 = vmatprep.subr.mxu0 0.0
      %894 = vmatpush1.msra.mxu0 0.0
      %895 = vmatprep.subr.mxu0 0.0
      %896 = vmatpush1.msra.mxu0 0.0
      %897 = vmatprep.subr.mxu0 0.0
      %898 = vmatpush1.msra.mxu0 0.0
      %899 = vmatprep.subr.mxu0 0.0
      %900 = vmatpush1.msra.mxu0 0.0
      %901 = vmatprep.subr.mxu0 0.0
      %902 = vmatpush1.msra.mxu0 0.0
      %903 = vmatprep.subr.mxu0 0.0
      %904 = vmatpush1.msra.mxu0 0.0
      %905 = vmatprep.subr.mxu0 0.0
      %906 = vmatpush1.msra.mxu0 0.0
      %907 = vmatprep.subr.mxu0 0.0
      %908 = vmatpush1.msra.mxu0 0.0
      %909 = vmatprep.subr.mxu0 0.0
      %910 = vmatpush1.msra.mxu0 0.0
      %911 = vmatprep.subr.mxu0 0.0
      %912 = vmatpush1.msra.mxu0 0.0
      %913 = vmatprep.subr.mxu0 0.0
      %914 = vmatpush1.msra.mxu0 0.0
      %915 = vmatprep.subr.mxu0 0.0
      %916 = vmatpush1.msra.mxu0 0.0
      %917 = vmatprep.subr.mxu0 0.0
      %918 = vmatpush1.msra.mxu0 0.0
      %919 = vmatprep.subr.mxu0 0.0
      %920 = vmatpush1.msra.mxu0 0.0
      %921 = vmatprep.subr.mxu0 0.0
      %922 = vmatpush1.msra.mxu0 0.0
      %923 = vmatprep.subr.mxu0 0.0
      %924 = vmatpush1.msra.mxu0 0.0
      %925 = vmatprep.subr.mxu0 0.0
      %926 = vmatpush1.msra.mxu0 0.0
      %927 = vmatprep.subr.mxu0 0.0
      %928 = vmatpush1.msra.mxu0 0.0
      %929 = vmatprep.subr.mxu0 0.0
      %930 = vmatpush1.msra.mxu0 0.0
      %931 = vmatprep.subr.mxu0 0.0
      %932 = vmatpush1.msra.mxu0 0.0
      %933 = vmatprep.subr.mxu0 0.0
      %934 = vmatpush1.msra.mxu0 0.0
      %935 = vmatprep.subr.mxu0 0.0
      %936 = vmatpush1.msra.mxu0 0.0
      %937 = vmatprep.subr.mxu0 0.0
      %938 = vmatpush1.msra.mxu0 0.0
      %939 = vmatprep.subr.mxu0 0.0
      %940 = vmatpush1.msra.mxu0 0.0
      %941 = vmatprep.mubr.f32.mxu0 0.0
      %942 = vmatmul.mubr.f32.gmra.mrb[0].mxu0 %v872
      %v943 = vpop.f32.mrb[0].mxu0
      %v944 = vadd.f32 0.0, %v943
      %v945 = vpop.f32.mrb[0].mxu0
      %946 = vmatprep.mubr.f32.mxu0 0.0
      %947 = vmatmul.mubr.f32.gmra.mrb[0].mxu0 %v875
      %v948 = vpop.f32.mrb[0].mxu0
      %v949 = vadd.f32 0.0, %v948
      %v950 = vpop.f32.mrb[0].mxu0
      %951 = vdwg.mxu0
      %952 = vrot.lane.b32.xlu0 %v741, 120
      %v953 = vpop.permute.xlu0 %952
      %954 = vrot.lane.b32.xlu0 %v746, 120
      %v955 = vpop.permute.xlu0 %954
      %956 = vrot.lane.b32.xlu0 %v741, 88
      %v957 = vpop.permute.xlu0 %956
      %958 = vrot.lane.b32.xlu0 %v746, 88
      %v959 = vpop.permute.xlu0 %958
      %v960 = vsel %vm545, %v953, 0
      %v962 = vsel %vm545, %v955, 0
      %v964 = vsel %vm545, %v957, 0
      %v966 = vsel %vm545, %v959, 0
      %968 = vmatprep.subr.mxu0 0.0
      %969 = vmatpush1.xpose.msra.mxu0 %v964
      %970 = vmatprep.subr.mxu0 0.0
      %971 = vmatpush1.xpose.msra.mxu0 %v966
      %972 = vmatprep.subr.mxu0 0.0
      %973 = vmatpush1.xpose.msra.mxu0 0.0
      %974 = vmatprep.subr.mxu0 0.0
      %975 = vmatpush1.xpose.msra.mxu0 0.0
      %976 = vmatprep.subr.mxu0 0.0
      %977 = vmatpush1.xpose.msra.mxu0 0.0
      %978 = vmatprep.subr.mxu0 0.0
      %979 = vmatpush1.xpose.msra.mxu0 0.0
      %980 = vmatprep.subr.mxu0 0.0
      %981 = vmatpush1.xpose.msra.mxu0 0.0
      %982 = vmatprep.subr.mxu0 0.0
      %983 = vmatpush1.xpose.msra.mxu0 0.0
      %984 = vmatprep.subr.mxu0 0.0
      %985 = vmatpush1.xpose.msra.mxu0 0.0
      %986 = vmatprep.subr.mxu0 0.0
      %987 = vmatpush1.xpose.msra.mxu0 0.0
      %988 = vmatprep.subr.mxu0 0.0
      %989 = vmatpush1.xpose.msra.mxu0 0.0
      %990 = vmatprep.subr.mxu0 0.0
      %991 = vmatpush1.xpose.msra.mxu0 0.0
      %992 = vmatprep.subr.mxu0 0.0
      %993 = vmatpush1.xpose.msra.mxu0 0.0
      %994 = vmatprep.subr.mxu0 0.0
      %995 = vmatpush1.xpose.msra.mxu0 0.0
      %996 = vmatprep.subr.mxu0 0.0
      %997 = vmatpush1.xpose.msra.mxu0 0.0
      %998 = vmatprep.subr.mxu0 0.0
      %999 = vmatpush1.xpose.msra.mxu0 0.0
      %1000 = vmatprep.subr.mxu0 0.0
      %1001 = vmatpush1.xpose.msra.mxu0 0.0
      %1002 = vmatprep.subr.mxu0 0.0
      %1003 = vmatpush1.xpose.msra.mxu0 0.0
      %1004 = vmatprep.subr.mxu0 0.0
      %1005 = vmatpush1.xpose.msra.mxu0 0.0
      %1006 = vmatprep.subr.mxu0 0.0
      %1007 = vmatpush1.xpose.msra.mxu0 0.0
      %1008 = vmatprep.subr.mxu0 0.0
      %1009 = vmatpush1.xpose.msra.mxu0 0.0
      %1010 = vmatprep.subr.mxu0 0.0
      %1011 = vmatpush1.xpose.msra.mxu0 0.0
      %1012 = vmatprep.subr.mxu0 0.0
      %1013 = vmatpush1.xpose.msra.mxu0 0.0
      %1014 = vmatprep.subr.mxu0 0.0
      %1015 = vmatpush1.xpose.msra.mxu0 0.0
      %1016 = vmatprep.subr.mxu0 0.0
      %1017 = vmatpush1.xpose.msra.mxu0 0.0
      %1018 = vmatprep.subr.mxu0 0.0
      %1019 = vmatpush1.xpose.msra.mxu0 0.0
      %1020 = vmatprep.subr.mxu0 0.0
      %1021 = vmatpush1.xpose.msra.mxu0 0.0
      %1022 = vmatprep.subr.mxu0 0.0
      %1023 = vmatpush1.xpose.msra.mxu0 0.0
      %1024 = vmatprep.subr.mxu0 0.0
      %1025 = vmatpush1.xpose.msra.mxu0 0.0
      %1026 = vmatprep.subr.mxu0 0.0
      %1027 = vmatpush1.xpose.msra.mxu0 0.0
      %1028 = vmatprep.subr.mxu0 0.0
      %1029 = vmatpush1.xpose.msra.mxu0 0.0
      %1030 = vmatprep.subr.mxu0 0.0
      %1031 = vmatpush1.xpose.msra.mxu0 0.0
      %1032 = vmatprep.mubr.f32.mxu0 0.0
      %1033 = vmatmul.mubr.f32.gmra.mrb[0].mxu0 %v960
      %v1034 = vpop.f32.mrb[0].mxu0
      %v1035 = vadd.f32 0.0, %v1034
      %v1036 = vpop.f32.mrb[0].mxu0
      %1037 = vmatprep.mubr.f32.mxu0 0.0
      %1038 = vmatmul.mubr.f32.gmra.mrb[0].mxu0 %v962
      %v1039 = vpop.f32.mrb[0].mxu0
      %v1040 = vadd.f32 0.0, %v1039
      %v1041 = vpop.f32.mrb[0].mxu0
      %1042 = vdwg.mxu0
      %v1043 = vmul.f32 %v1035, 0.35355338
      %v1044 = vmul.f32 %v1040, 0.35355338
      %v1045 = vadd.f32 %v1043, %v546
      %v1046 = vadd.f32 %v1044, %v551
      %v1047 = vsel %vm842, %v1045, -inf
      %1048 = vmax.xlane.f32.xlu0 %v1047
      %v1049 = vpop.xlane.xlu0 %1048
      %v1050 = vsel %vm842, %v1046, -inf
      %1051 = vmax.xlane.f32.xlu0 %v1050
      %v1052 = vpop.xlane.xlu0 %1051
      %v1053 = vsub.f32 %v1045, %v1049
      %v1054 = vsub.f32 %v1046, %v1052
      %v1055 = vmul.f32 %v1053, 1.442695
      %v1056 = vpow.pop %v1055
      %v1057 = vmul.f32 %v1054, 1.442695
      %v1058 = vpow.pop %v1057
      %v1059 = vsel %vm842, %v1056, 0.0
      %1060 = vadd.xlane.f32.xlu0 %v1059
      %v1061 = vpop.xlane.xlu0 %1060
      %v1062 = vsel %vm842, %v1058, 0.0
      %1063 = vadd.xlane.f32.xlu0 %v1062
      %v1064 = vpop.xlane.xlu0 %1063
      %v1065 = vrcp.pop %v1061
      %v1066 = vrcp.pop %v1064
      %v1067 = vmul.f32 %v1056, %v1065
      %v1068 = vmul.f32 %v1058, %v1066
      %1069 = vrot.lane.b32.xlu0 %v741, 56
      %v1070 = vpop.permute.xlu0 %1069
      %1071 = vrot.lane.b32.xlu0 %v746, 56
      %v1072 = vpop.permute.xlu0 %1071
      %v1076 = vsel %vm842, %v1067, 0
      %v1079 = vsel %vm842, %v1068, 0
      %1081 = vmatprep.subr.mxu0 0.0
      %1082 = vmatpush1.msra.mxu0 %v1070
      %1083 = vmatprep.subr.mxu0 0.0
      %1084 = vmatpush1.msra.mxu0 %v1072
      %1085 = vmatprep.subr.mxu0 0.0
      %1086 = vmatpush1.msra.mxu0 0.0
      %1087 = vmatprep.subr.mxu0 0.0
      %1088 = vmatpush1.msra.mxu0 0.0
      %1089 = vmatprep.subr.mxu0 0.0
      %1090 = vmatpush1.msra.mxu0 0.0
      %1091 = vmatprep.subr.mxu0 0.0
      %1092 = vmatpush1.msra.mxu0 0.0
      %1093 = vmatprep.subr.mxu0 0.0
      %1094 = vmatpush1.msra.mxu0 0.0
      %1095 = vmatprep.subr.mxu0 0.0
      %1096 = vmatpush1.msra.mxu0 0.0
      %1097 = vmatprep.subr.mxu0 0.0
      %1098 = vmatpush1.msra.mxu0 0.0
      %1099 = vmatprep.subr.mxu0 0.0
      %1100 = vmatpush1.msra.mxu0 0.0
      %1101 = vmatprep.subr.mxu0 0.0
      %1102 = vmatpush1.msra.mxu0 0.0
      %1103 = vmatprep.subr.mxu0 0.0
      %1104 = vmatpush1.msra.mxu0 0.0
      %1105 = vmatprep.subr.mxu0 0.0
      %1106 = vmatpush1.msra.mxu0 0.0
      %1107 = vmatprep.subr.mxu0 0.0
      %1108 = vmatpush1.msra.mxu0 0.0
      %1109 = vmatprep.subr.mxu0 0.0
      %1110 = vmatpush1.msra.mxu0 0.0
      %1111 = vmatprep.subr.mxu0 0.0
      %1112 = vmatpush1.msra.mxu0 0.0
      %1113 = vmatprep.subr.mxu0 0.0
      %1114 = vmatpush1.msra.mxu0 0.0
      %1115 = vmatprep.subr.mxu0 0.0
      %1116 = vmatpush1.msra.mxu0 0.0
      %1117 = vmatprep.subr.mxu0 0.0
      %1118 = vmatpush1.msra.mxu0 0.0
      %1119 = vmatprep.subr.mxu0 0.0
      %1120 = vmatpush1.msra.mxu0 0.0
      %1121 = vmatprep.subr.mxu0 0.0
      %1122 = vmatpush1.msra.mxu0 0.0
      %1123 = vmatprep.subr.mxu0 0.0
      %1124 = vmatpush1.msra.mxu0 0.0
      %1125 = vmatprep.subr.mxu0 0.0
      %1126 = vmatpush1.msra.mxu0 0.0
      %1127 = vmatprep.subr.mxu0 0.0
      %1128 = vmatpush1.msra.mxu0 0.0
      %1129 = vmatprep.subr.mxu0 0.0
      %1130 = vmatpush1.msra.mxu0 0.0
      %1131 = vmatprep.subr.mxu0 0.0
      %1132 = vmatpush1.msra.mxu0 0.0
      %1133 = vmatprep.subr.mxu0 0.0
      %1134 = vmatpush1.msra.mxu0 0.0
      %1135 = vmatprep.subr.mxu0 0.0
      %1136 = vmatpush1.msra.mxu0 0.0
      %1137 = vmatprep.subr.mxu0 0.0
      %1138 = vmatpush1.msra.mxu0 0.0
      %1139 = vmatprep.subr.mxu0 0.0
      %1140 = vmatpush1.msra.mxu0 0.0
      %1141 = vmatprep.subr.mxu0 0.0
      %1142 = vmatpush1.msra.mxu0 0.0
      %1143 = vmatprep.subr.mxu0 0.0
      %1144 = vmatpush1.msra.mxu0 0.0
      %1145 = vmatprep.mubr.f32.mxu0 0.0
      %1146 = vmatmul.mubr.f32.gmra.mrb[0].mxu0 %v1076
      %v1147 = vpop.f32.mrb[0].mxu0
      %v1148 = vadd.f32 0.0, %v1147
      %v1149 = vpop.f32.mrb[0].mxu0
      %1150 = vmatprep.mubr.f32.mxu0 0.0
      %1151 = vmatmul.mubr.f32.gmra.mrb[0].mxu0 %v1079
      %v1152 = vpop.f32.mrb[0].mxu0
      %v1153 = vadd.f32 0.0, %v1152
      %v1154 = vpop.f32.mrb[0].mxu0
      %1155 = vdwg.mxu0
      %1156 = vrot.lane.b32.xlu0 %v741, 112
      %v1157 = vpop.permute.xlu0 %1156
      %1158 = vrot.lane.b32.xlu0 %v746, 112
      %v1159 = vpop.permute.xlu0 %1158
      %1160 = vrot.lane.b32.xlu0 %v741, 80
      %v1161 = vpop.permute.xlu0 %1160
      %1162 = vrot.lane.b32.xlu0 %v746, 80
      %v1163 = vpop.permute.xlu0 %1162
      %v1164 = vsel %vm545, %v1157, 0
      %v1166 = vsel %vm545, %v1159, 0
      %v1168 = vsel %vm545, %v1161, 0
      %v1170 = vsel %vm545, %v1163, 0
      %1172 = vmatprep.subr.mxu0 0.0
      %1173 = vmatpush1.xpose.msra.mxu0 %v1168
      %1174 = vmatprep.subr.mxu0 0.0
      %1175 = vmatpush1.xpose.msra.mxu0 %v1170
      %1176 = vmatprep.subr.mxu0 0.0
      %1177 = vmatpush1.xpose.msra.mxu0 0.0
      %1178 = vmatprep.subr.mxu0 0.0
      %1179 = vmatpush1.xpose.msra.mxu0 0.0
      %1180 = vmatprep.subr.mxu0 0.0
      %1181 = vmatpush1.xpose.msra.mxu0 0.0
      %1182 = vmatprep.subr.mxu0 0.0
      %1183 = vmatpush1.xpose.msra.mxu0 0.0
      %1184 = vmatprep.subr.mxu0 0.0
      %1185 = vmatpush1.xpose.msra.mxu0 0.0
      %1186 = vmatprep.subr.mxu0 0.0
      %1187 = vmatpush1.xpose.msra.mxu0 0.0
      %1188 = vmatprep.subr.mxu0 0.0
      %1189 = vmatpush1.xpose.msra.mxu0 0.0
      %1190 = vmatprep.subr.mxu0 0.0
      %1191 = vmatpush1.xpose.msra.mxu0 0.0
      %1192 = vmatprep.subr.mxu0 0.0
      %1193 = vmatpush1.xpose.msra.mxu0 0.0
      %1194 = vmatprep.subr.mxu0 0.0
      %1195 = vmatpush1.xpose.msra.mxu0 0.0
      %1196 = vmatprep.subr.mxu0 0.0
      %1197 = vmatpush1.xpose.msra.mxu0 0.0
      %1198 = vmatprep.subr.mxu0 0.0
      %1199 = vmatpush1.xpose.msra.mxu0 0.0
      %1200 = vmatprep.subr.mxu0 0.0
      %1201 = vmatpush1.xpose.msra.mxu0 0.0
      %1202 = vmatprep.subr.mxu0 0.0
      %1203 = vmatpush1.xpose.msra.mxu0 0.0
      %1204 = vmatprep.subr.mxu0 0.0
      %1205 = vmatpush1.xpose.msra.mxu0 0.0
      %1206 = vmatprep.subr.mxu0 0.0
      %1207 = vmatpush1.xpose.msra.mxu0 0.0
      %1208 = vmatprep.subr.mxu0 0.0
      %1209 = vmatpush1.xpose.msra.mxu0 0.0
      %1210 = vmatprep.subr.mxu0 0.0
      %1211 = vmatpush1.xpose.msra.mxu0 0.0
      %1212 = vmatprep.subr.mxu0 0.0
      %1213 = vmatpush1.xpose.msra.mxu0 0.0
      %1214 = vmatprep.subr.mxu0 0.0
      %1215 = vmatpush1.xpose.msra.mxu0 0.0
      %1216 = vmatprep.subr.mxu0 0.0
      %1217 = vmatpush1.xpose.msra.mxu0 0.0
      %1218 = vmatprep.subr.mxu0 0.0
      %1219 = vmatpush1.xpose.msra.mxu0 0.0
      %1220 = vmatprep.subr.mxu0 0.0
      %1221 = vmatpush1.xpose.msra.mxu0 0.0
      %1222 = vmatprep.subr.mxu0 0.0
      %1223 = vmatpush1.xpose.msra.mxu0 0.0
      %1224 = vmatprep.subr.mxu0 0.0
      %1225 = vmatpush1.xpose.msra.mxu0 0.0
      %1226 = vmatprep.subr.mxu0 0.0
      %1227 = vmatpush1.xpose.msra.mxu0 0.0
      %1228 = vmatprep.subr.mxu0 0.0
      %1229 = vmatpush1.xpose.msra.mxu0 0.0
      %1230 = vmatprep.subr.mxu0 0.0
      %1231 = vmatpush1.xpose.msra.mxu0 0.0
      %1232 = vmatprep.subr.mxu0 0.0
      %1233 = vmatpush1.xpose.msra.mxu0 0.0
      %1234 = vmatprep.subr.mxu0 0.0
      %1235 = vmatpush1.xpose.msra.mxu0 0.0
      %1236 = vmatprep.mubr.f32.mxu0 0.0
      %1237 = vmatmul.mubr.f32.gmra.mrb[0].mxu0 %v1164
      %v1238 = vpop.f32.mrb[0].mxu0
      %v1239 = vadd.f32 0.0, %v1238
      %v1240 = vpop.f32.mrb[0].mxu0
      %1241 = vmatprep.mubr.f32.mxu0 0.0
      %1242 = vmatmul.mubr.f32.gmra.mrb[0].mxu0 %v1166
      %v1243 = vpop.f32.mrb[0].mxu0
      %v1244 = vadd.f32 0.0, %v1243
      %v1245 = vpop.f32.mrb[0].mxu0
      %1246 = vdwg.mxu0
      %v1247 = vmul.f32 %v1239, 0.35355338
      %v1248 = vmul.f32 %v1244, 0.35355338
      %v1249 = vadd.f32 %v1247, %v546
      %v1250 = vadd.f32 %v1248, %v551
      %v1251 = vsel %vm842, %v1249, -inf
      %1252 = vmax.xlane.f32.xlu0 %v1251
      %v1253 = vpop.xlane.xlu0 %1252
      %v1254 = vsel %vm842, %v1250, -inf
      %1255 = vmax.xlane.f32.xlu0 %v1254
      %v1256 = vpop.xlane.xlu0 %1255
      %v1257 = vsub.f32 %v1249, %v1253
      %v1258 = vsub.f32 %v1250, %v1256
      %v1259 = vmul.f32 %v1257, 1.442695
      %v1260 = vpow.pop %v1259
      %v1261 = vmul.f32 %v1258, 1.442695
      %v1262 = vpow.pop %v1261
      %v1263 = vsel %vm842, %v1260, 0.0
      %1264 = vadd.xlane.f32.xlu0 %v1263
      %v1265 = vpop.xlane.xlu0 %1264
      %v1266 = vsel %vm842, %v1262, 0.0
      %1267 = vadd.xlane.f32.xlu0 %v1266
      %v1268 = vpop.xlane.xlu0 %1267
      %v1269 = vrcp.pop %v1265
      %v1270 = vrcp.pop %v1268
      %v1271 = vmul.f32 %v1260, %v1269
      %v1272 = vmul.f32 %v1262, %v1270
      %1273 = vrot.lane.b32.xlu0 %v741, 48
      %v1274 = vpop.permute.xlu0 %1273
      %1275 = vrot.lane.b32.xlu0 %v746, 48
      %v1276 = vpop.permute.xlu0 %1275
      %v1280 = vsel %vm842, %v1271, 0
      %v1283 = vsel %vm842, %v1272, 0
      %1285 = vmatprep.subr.mxu0 0.0
      %1286 = vmatpush1.msra.mxu0 %v1274
      %1287 = vmatprep.subr.mxu0 0.0
      %1288 = vmatpush1.msra.mxu0 %v1276
      %1289 = vmatprep.subr.mxu0 0.0
      %1290 = vmatpush1.msra.mxu0 0.0
      %1291 = vmatprep.subr.mxu0 0.0
      %1292 = vmatpush1.msra.mxu0 0.0
      %1293 = vmatprep.subr.mxu0 0.0
      %1294 = vmatpush1.msra.mxu0 0.0
      %1295 = vmatprep.subr.mxu0 0.0
      %1296 = vmatpush1.msra.mxu0 0.0
      %1297 = vmatprep.subr.mxu0 0.0
      %1298 = vmatpush1.msra.mxu0 0.0
      %1299 = vmatprep.subr.mxu0 0.0
      %1300 = vmatpush1.msra.mxu0 0.0
      %1301 = vmatprep.subr.mxu0 0.0
      %1302 = vmatpush1.msra.mxu0 0.0
      %1303 = vmatprep.subr.mxu0 0.0
      %1304 = vmatpush1.msra.mxu0 0.0
      %1305 = vmatprep.subr.mxu0 0.0
      %1306 = vmatpush1.msra.mxu0 0.0
      %1307 = vmatprep.subr.mxu0 0.0
      %1308 = vmatpush1.msra.mxu0 0.0
      %1309 = vmatprep.subr.mxu0 0.0
      %1310 = vmatpush1.msra.mxu0 0.0
      %1311 = vmatprep.subr.mxu0 0.0
      %1312 = vmatpush1.msra.mxu0 0.0
      %1313 = vmatprep.subr.mxu0 0.0
      %1314 = vmatpush1.msra.mxu0 0.0
      %1315 = vmatprep.subr.mxu0 0.0
      %1316 = vmatpush1.msra.mxu0 0.0
      %1317 = vmatprep.subr.mxu0 0.0
      %1318 = vmatpush1.msra.mxu0 0.0
      %1319 = vmatprep.subr.mxu0 0.0
      %1320 = vmatpush1.msra.mxu0 0.0
      %1321 = vmatprep.subr.mxu0 0.0
      %1322 = vmatpush1.msra.mxu0 0.0
      %1323 = vmatprep.subr.mxu0 0.0
      %1324 = vmatpush1.msra.mxu0 0.0
      %1325 = vmatprep.subr.mxu0 0.0
      %1326 = vmatpush1.msra.mxu0 0.0
      %1327 = vmatprep.subr.mxu0 0.0
      %1328 = vmatpush1.msra.mxu0 0.0
      %1329 = vmatprep.subr.mxu0 0.0
      %1330 = vmatpush1.msra.mxu0 0.0
      %1331 = vmatprep.subr.mxu0 0.0
      %1332 = vmatpush1.msra.mxu0 0.0
      %1333 = vmatprep.subr.mxu0 0.0
      %1334 = vmatpush1.msra.mxu0 0.0
      %1335 = vmatprep.subr.mxu0 0.0
      %1336 = vmatpush1.msra.mxu0 0.0
      %1337 = vmatprep.subr.mxu0 0.0
      %1338 = vmatpush1.msra.mxu0 0.0
      %1339 = vmatprep.subr.mxu0 0.0
      %1340 = vmatpush1.msra.mxu0 0.0
      %1341 = vmatprep.subr.mxu0 0.0
      %1342 = vmatpush1.msra.mxu0 0.0
      %1343 = vmatprep.subr.mxu0 0.0
      %1344 = vmatpush1.msra.mxu0 0.0
      %1345 = vmatprep.subr.mxu0 0.0
      %1346 = vmatpush1.msra.mxu0 0.0
      %1347 = vmatprep.subr.mxu0 0.0
      %1348 = vmatpush1.msra.mxu0 0.0
      %1349 = vmatprep.mubr.f32.mxu0 0.0
      %1350 = vmatmul.mubr.f32.gmra.mrb[0].mxu0 %v1280
      %v1351 = vpop.f32.mrb[0].mxu0
      %v1352 = vadd.f32 0.0, %v1351
      %v1353 = vpop.f32.mrb[0].mxu0
      %1354 = vmatprep.mubr.f32.mxu0 0.0
      %1355 = vmatmul.mubr.f32.gmra.mrb[0].mxu0 %v1283
      %v1356 = vpop.f32.mrb[0].mxu0
      %v1357 = vadd.f32 0.0, %v1356
      %v1358 = vpop.f32.mrb[0].mxu0
      %1359 = vdwg.mxu0
      %1360 = vrot.lane.b32.xlu0 %v741, 104
      %v1361 = vpop.permute.xlu0 %1360
      %1362 = vrot.lane.b32.xlu0 %v746, 104
      %v1363 = vpop.permute.xlu0 %1362
      %1364 = vrot.lane.b32.xlu0 %v741, 72
      %v1365 = vpop.permute.xlu0 %1364
      %1366 = vrot.lane.b32.xlu0 %v746, 72
      %v1367 = vpop.permute.xlu0 %1366
      %v1368 = vsel %vm545, %v1361, 0
      %v1370 = vsel %vm545, %v1363, 0
      %v1372 = vsel %vm545, %v1365, 0
      %v1374 = vsel %vm545, %v1367, 0
      %1376 = vmatprep.subr.mxu0 0.0
      %1377 = vmatpush1.xpose.msra.mxu0 %v1372
      %1378 = vmatprep.subr.mxu0 0.0
      %1379 = vmatpush1.xpose.msra.mxu0 %v1374
      %1380 = vmatprep.subr.mxu0 0.0
      %1381 = vmatpush1.xpose.msra.mxu0 0.0
      %1382 = vmatprep.subr.mxu0 0.0
      %1383 = vmatpush1.xpose.msra.mxu0 0.0
      %1384 = vmatprep.subr.mxu0 0.0
      %1385 = vmatpush1.xpose.msra.mxu0 0.0
      %1386 = vmatprep.subr.mxu0 0.0
      %1387 = vmatpush1.xpose.msra.mxu0 0.0
      %1388 = vmatprep.subr.mxu0 0.0
      %1389 = vmatpush1.xpose.msra.mxu0 0.0
      %1390 = vmatprep.subr.mxu0 0.0
      %1391 = vmatpush1.xpose.msra.mxu0 0.0
      %1392 = vmatprep.subr.mxu0 0.0
      %1393 = vmatpush1.xpose.msra.mxu0 0.0
      %1394 = vmatprep.subr.mxu0 0.0
      %1395 = vmatpush1.xpose.msra.mxu0 0.0
      %1396 = vmatprep.subr.mxu0 0.0
      %1397 = vmatpush1.xpose.msra.mxu0 0.0
      %1398 = vmatprep.subr.mxu0 0.0
      %1399 = vmatpush1.xpose.msra.mxu0 0.0
      %1400 = vmatprep.subr.mxu0 0.0
      %1401 = vmatpush1.xpose.msra.mxu0 0.0
      %1402 = vmatprep.subr.mxu0 0.0
      %1403 = vmatpush1.xpose.msra.mxu0 0.0
      %1404 = vmatprep.subr.mxu0 0.0
      %1405 = vmatpush1.xpose.msra.mxu0 0.0
      %1406 = vmatprep.subr.mxu0 0.0
      %1407 = vmatpush1.xpose.msra.mxu0 0.0
      %1408 = vmatprep.subr.mxu0 0.0
      %1409 = vmatpush1.xpose.msra.mxu0 0.0
      %1410 = vmatprep.subr.mxu0 0.0
      %1411 = vmatpush1.xpose.msra.mxu0 0.0
      %1412 = vmatprep.subr.mxu0 0.0
      %1413 = vmatpush1.xpose.msra.mxu0 0.0
      %1414 = vmatprep.subr.mxu0 0.0
      %1415 = vmatpush1.xpose.msra.mxu0 0.0
      %1416 = vmatprep.subr.mxu0 0.0
      %1417 = vmatpush1.xpose.msra.mxu0 0.0
      %1418 = vmatprep.subr.mxu0 0.0
      %1419 = vmatpush1.xpose.msra.mxu0 0.0
      %1420 = vmatprep.subr.mxu0 0.0
      %1421 = vmatpush1.xpose.msra.mxu0 0.0
      %1422 = vmatprep.subr.mxu0 0.0
      %1423 = vmatpush1.xpose.msra.mxu0 0.0
      %1424 = vmatprep.subr.mxu0 0.0
      %1425 = vmatpush1.xpose.msra.mxu0 0.0
      %1426 = vmatprep.subr.mxu0 0.0
      %1427 = vmatpush1.xpose.msra.mxu0 0.0
      %1428 = vmatprep.subr.mxu0 0.0
      %1429 = vmatpush1.xpose.msra.mxu0 0.0
      %1430 = vmatprep.subr.mxu0 0.0
      %1431 = vmatpush1.xpose.msra.mxu0 0.0
      %1432 = vmatprep.subr.mxu0 0.0
      %1433 = vmatpush1.xpose.msra.mxu0 0.0
      %1434 = vmatprep.subr.mxu0 0.0
      %1435 = vmatpush1.xpose.msra.mxu0 0.0
      %1436 = vmatprep.subr.mxu0 0.0
      %1437 = vmatpush1.xpose.msra.mxu0 0.0
      %1438 = vmatprep.subr.mxu0 0.0
      %1439 = vmatpush1.xpose.msra.mxu0 0.0
      %1440 = vmatprep.mubr.f32.mxu0 0.0
      %1441 = vmatmul.mubr.f32.gmra.mrb[0].mxu0 %v1368
      %v1442 = vpop.f32.mrb[0].mxu0
      %v1443 = vadd.f32 0.0, %v1442
      %v1444 = vpop.f32.mrb[0].mxu0
      %1445 = vmatprep.mubr.f32.mxu0 0.0
      %1446 = vmatmul.mubr.f32.gmra.mrb[0].mxu0 %v1370
      %v1447 = vpop.f32.mrb[0].mxu0
      %v1448 = vadd.f32 0.0, %v1447
      %v1449 = vpop.f32.mrb[0].mxu0
      %1450 = vdwg.mxu0
      %v1451 = vmul.f32 %v1443, 0.35355338
      %v1452 = vmul.f32 %v1448, 0.35355338
      %v1453 = vadd.f32 %v1451, %v546
      %v1454 = vadd.f32 %v1452, %v551
      %v1455 = vsel %vm842, %v1453, -inf
      %1456 = vmax.xlane.f32.xlu0 %v1455
      %v1457 = vpop.xlane.xlu0 %1456
      %v1458 = vsel %vm842, %v1454, -inf
      %1459 = vmax.xlane.f32.xlu0 %v1458
      %v1460 = vpop.xlane.xlu0 %1459
      %v1461 = vsub.f32 %v1453, %v1457
      %v1462 = vsub.f32 %v1454, %v1460
      %v1463 = vmul.f32 %v1461, 1.442695
      %v1464 = vpow.pop %v1463
      %v1465 = vmul.f32 %v1462, 1.442695
      %v1466 = vpow.pop %v1465
      %v1467 = vsel %vm842, %v1464, 0.0
      %1468 = vadd.xlane.f32.xlu0 %v1467
      %v1469 = vpop.xlane.xlu0 %1468
      %v1470 = vsel %vm842, %v1466, 0.0
      %1471 = vadd.xlane.f32.xlu0 %v1470
      %v1472 = vpop.xlane.xlu0 %1471
      %v1473 = vrcp.pop %v1469
      %v1474 = vrcp.pop %v1472
      %v1475 = vmul.f32 %v1464, %v1473
      %v1476 = vmul.f32 %v1466, %v1474
      %1477 = vrot.lane.b32.xlu0 %v741, 40
      %v1478 = vpop.permute.xlu0 %1477
      %1479 = vrot.lane.b32.xlu0 %v746, 40
      %v1480 = vpop.permute.xlu0 %1479
      %v1484 = vsel %vm842, %v1475, 0
      %v1487 = vsel %vm842, %v1476, 0
      %1489 = vmatprep.subr.mxu0 0.0
      %1490 = vmatpush1.msra.mxu0 %v1478
      %1491 = vmatprep.subr.mxu0 0.0
      %1492 = vmatpush1.msra.mxu0 %v1480
      %1493 = vmatprep.subr.mxu0 0.0
      %1494 = vmatpush1.msra.mxu0 0.0
      %1495 = vmatprep.subr.mxu0 0.0
      %1496 = vmatpush1.msra.mxu0 0.0
      %1497 = vmatprep.subr.mxu0 0.0
      %1498 = vmatpush1.msra.mxu0 0.0
      %1499 = vmatprep.subr.mxu0 0.0
      %1500 = vmatpush1.msra.mxu0 0.0
      %1501 = vmatprep.subr.mxu0 0.0
      %1502 = vmatpush1.msra.mxu0 0.0
      %1503 = vmatprep.subr.mxu0 0.0
      %1504 = vmatpush1.msra.mxu0 0.0
      %1505 = vmatprep.subr.mxu0 0.0
      %1506 = vmatpush1.msra.mxu0 0.0
      %1507 = vmatprep.subr.mxu0 0.0
      %1508 = vmatpush1.msra.mxu0 0.0
      %1509 = vmatprep.subr.mxu0 0.0
      %1510 = vmatpush1.msra.mxu0 0.0
      %1511 = vmatprep.subr.mxu0 0.0
      %1512 = vmatpush1.msra.mxu0 0.0
      %1513 = vmatprep.subr.mxu0 0.0
      %1514 = vmatpush1.msra.mxu0 0.0
      %1515 = vmatprep.subr.mxu0 0.0
      %1516 = vmatpush1.msra.mxu0 0.0
      %1517 = vmatprep.subr.mxu0 0.0
      %1518 = vmatpush1.msra.mxu0 0.0
      %1519 = vmatprep.subr.mxu0 0.0
      %1520 = vmatpush1.msra.mxu0 0.0
      %1521 = vmatprep.subr.mxu0 0.0
      %1522 = vmatpush1.msra.mxu0 0.0
      %1523 = vmatprep.subr.mxu0 0.0
      %1524 = vmatpush1.msra.mxu0 0.0
      %1525 = vmatprep.subr.mxu0 0.0
      %1526 = vmatpush1.msra.mxu0 0.0
      %1527 = vmatprep.subr.mxu0 0.0
      %1528 = vmatpush1.msra.mxu0 0.0
      %1529 = vmatprep.subr.mxu0 0.0
      %1530 = vmatpush1.msra.mxu0 0.0
      %1531 = vmatprep.subr.mxu0 0.0
      %1532 = vmatpush1.msra.mxu0 0.0
      %1533 = vmatprep.subr.mxu0 0.0
      %1534 = vmatpush1.msra.mxu0 0.0
      %1535 = vmatprep.subr.mxu0 0.0
      %1536 = vmatpush1.msra.mxu0 0.0
      %1537 = vmatprep.subr.mxu0 0.0
      %1538 = vmatpush1.msra.mxu0 0.0
      %1539 = vmatprep.subr.mxu0 0.0
      %1540 = vmatpush1.msra.mxu0 0.0
      %1541 = vmatprep.subr.mxu0 0.0
      %1542 = vmatpush1.msra.mxu0 0.0
      %1543 = vmatprep.subr.mxu0 0.0
      %1544 = vmatpush1.msra.mxu0 0.0
      %1545 = vmatprep.subr.mxu0 0.0
      %1546 = vmatpush1.msra.mxu0 0.0
      %1547 = vmatprep.subr.mxu0 0.0
      %1548 = vmatpush1.msra.mxu0 0.0
      %1549 = vmatprep.subr.mxu0 0.0
      %1550 = vmatpush1.msra.mxu0 0.0
      %1551 = vmatprep.subr.mxu0 0.0
      %1552 = vmatpush1.msra.mxu0 0.0
      %1553 = vmatprep.mubr.f32.mxu0 0.0
      %1554 = vmatmul.mubr.f32.gmra.mrb[0].mxu0 %v1484
      %v1555 = vpop.f32.mrb[0].mxu0
      %v1556 = vadd.f32 0.0, %v1555
      %v1557 = vpop.f32.mrb[0].mxu0
      %1558 = vmatprep.mubr.f32.mxu0 0.0
      %1559 = vmatmul.mubr.f32.gmra.mrb[0].mxu0 %v1487
      %v1560 = vpop.f32.mrb[0].mxu0
      %v1561 = vadd.f32 0.0, %v1560
      %v1562 = vpop.f32.mrb[0].mxu0
      %1563 = vdwg.mxu0
      %1566 = vrot.lane.b32.xlu0 %v1148, 8
      %v1567 = vpop.permute.xlu0 %1566
      %1568 = vrot.lane.b32.xlu0 %v1153, 8
      %v1569 = vpop.permute.xlu0 %1568
      %1574 = vrot.lane.b32.xlu0 %v1352, 16
      %v1575 = vpop.permute.xlu0 %1574
      %1576 = vrot.lane.b32.xlu0 %v1357, 16
      %v1577 = vpop.permute.xlu0 %1576
      %1582 = vrot.lane.b32.xlu0 %v1556, 24
      %v1583 = vpop.permute.xlu0 %1582
      %1584 = vrot.lane.b32.xlu0 %v1561, 24
      %v1585 = vpop.permute.xlu0 %1584
      %v1588 = vsel %vm545, %v944, %v1567
      %v1589 = vsel %vm545, %v949, %v1569
      %v1590 = vsel %vm842, %v1588, %v1575
      %v1591 = vsel %vm842, %v1589, %v1577
      %vm1592 = vcmask 195584
      %v1593 = vsel %vm1592, %v1590, %v1583
      %v1594 = vsel %vm1592, %v1591, %v1585
      %v1595 = vlaneseq
      %v1596 = vshrl.u32 %v1595, 7
      %v1597 = vsub.s32 0, %v1596
      %v1598 = vrot.slane %v533, %v1597
      %v1600 = vsel %vm575, %v1593, 0
      %v1603 = vsel %vm575, %v1594, 0
      %1605 = vmatprep.subr.mxu0 0.0
      %1606 = vmatpush1.msra.mxu0 %v519
      %1607 = vmatprep.subr.mxu0 0.0
      %1608 = vmatpush1.msra.mxu0 %v520
      %1609 = vmatprep.subr.mxu0 0.0
      %1610 = vmatpush1.msra.mxu0 %v521
      %1611 = vmatprep.subr.mxu0 0.0
      %1612 = vmatpush1.msra.mxu0 %v522
      %1613 = vmatprep.subr.mxu0 0.0
      %1614 = vmatpush1.msra.mxu0 0.0
      %1615 = vmatprep.subr.mxu0 0.0
      %1616 = vmatpush1.msra.mxu0 0.0
      %1617 = vmatprep.subr.mxu0 0.0
      %1618 = vmatpush1.msra.mxu0 0.0
      %1619 = vmatprep.subr.mxu0 0.0
      %1620 = vmatpush1.msra.mxu0 0.0
      %1621 = vmatprep.subr.mxu0 0.0
      %1622 = vmatpush1.msra.mxu0 0.0
      %1623 = vmatprep.subr.mxu0 0.0
      %1624 = vmatpush1.msra.mxu0 0.0
      %1625 = vmatprep.subr.mxu0 0.0
      %1626 = vmatpush1.msra.mxu0 0.0
      %1627 = vmatprep.subr.mxu0 0.0
      %1628 = vmatpush1.msra.mxu0 0.0
      %1629 = vmatprep.subr.mxu0 0.0
      %1630 = vmatpush1.msra.mxu0 0.0
      %1631 = vmatprep.subr.mxu0 0.0
      %1632 = vmatpush1.msra.mxu0 0.0
      %1633 = vmatprep.subr.mxu0 0.0
      %1634 = vmatpush1.msra.mxu0 0.0
      %1635 = vmatprep.subr.mxu0 0.0
      %1636 = vmatpush1.msra.mxu0 0.0
      %1637 = vmatprep.subr.mxu0 0.0
      %1638 = vmatpush1.msra.mxu0 0.0
      %1639 = vmatprep.subr.mxu0 0.0
      %1640 = vmatpush1.msra.mxu0 0.0
      %1641 = vmatprep.subr.mxu0 0.0
      %1642 = vmatpush1.msra.mxu0 0.0
      %1643 = vmatprep.subr.mxu0 0.0
      %1644 = vmatpush1.msra.mxu0 0.0
      %1645 = vmatprep.subr.mxu0 0.0
      %1646 = vmatpush1.msra.mxu0 0.0
      %1647 = vmatprep.subr.mxu0 0.0
      %1648 = vmatpush1.msra.mxu0 0.0
      %1649 = vmatprep.subr.mxu0 0.0
      %1650 = vmatpush1.msra.mxu0 0.0
      %1651 = vmatprep.subr.mxu0 0.0
      %1652 = vmatpush1.msra.mxu0 0.0
      %1653 = vmatprep.subr.mxu0 0.0
      %1654 = vmatpush1.msra.mxu0 0.0
      %1655 = vmatprep.subr.mxu0 0.0
      %1656 = vmatpush1.msra.mxu0 0.0
      %1657 = vmatprep.subr.mxu0 0.0
      %1658 = vmatpush1.msra.mxu0 0.0
      %1659 = vmatprep.subr.mxu0 0.0
      %1660 = vmatpush1.msra.mxu0 0.0
      %1661 = vmatprep.subr.mxu0 0.0
      %1662 = vmatpush1.msra.mxu0 0.0
      %1663 = vmatprep.subr.mxu0 0.0
      %1664 = vmatpush1.msra.mxu0 0.0
      %1665 = vmatprep.subr.mxu0 0.0
      %1666 = vmatpush1.msra.mxu0 0.0
      %1667 = vmatprep.subr.mxu0 0.0
      %1668 = vmatpush1.msra.mxu0 0.0
      %1669 = vmatprep.mubr.f32.mxu0 0.0
      %1670 = vmatmul.mubr.f32.gmra.mrb[0].mxu0 %v1600
      %v1671 = vpop.f32.mrb[0].mxu0
      %v1672 = vadd.f32 %v1598, %v1671
      %v1673 = vpop.f32.mrb[0].mxu0
      %1674 = vmatprep.mubr.f32.mxu0 0.0
      %1675 = vmatmul.mubr.f32.gmra.mrb[0].mxu0 %v1603
      %v1676 = vpop.f32.mrb[0].mxu0
      %v1677 = vadd.f32 %v1598, %v1676
      %v1678 = vpop.f32.mrb[0].mxu0
      %1679 = vdwg.mxu0
      %v1680 = vadd.f32 %v515, %v1672
      %v1681 = vadd.f32 %v516, %v1677
      %v1682 = vsel %vm575, %v1680, 0.0
      %1683 = vadd.xlane.f32.xlu0 %v1682
      %v1684 = vpop.xlane.xlu0 %1683
      %v1685 = vsel %vm575, %v1681, 0.0
      %1686 = vadd.xlane.f32.xlu0 %v1685
      %v1687 = vpop.xlane.xlu0 %1686
      %v1688 = vrcp.pop 32.0
      %v1689 = vmul.f32 %v1684, %v1688
      %v1690 = vmul.f32 %v1687, %v1688
      %v1691 = vsub.f32 %v1680, %v1689
      %v1692 = vsub.f32 %v1681, %v1690
      %v1693 = vmul.f32 %v1691, %v1691
      %v1694 = vmul.f32 %v1692, %v1692
      %v1695 = vsel %vm575, %v1693, 0.0
      %1696 = vadd.xlane.f32.xlu0 %v1695
      %v1697 = vpop.xlane.xlu0 %1696
      %v1698 = vsel %vm575, %v1694, 0.0
      %1699 = vadd.xlane.f32.xlu0 %v1698
      %v1700 = vpop.xlane.xlu0 %1699
      %v1701 = vmul.f32 %v1697, %v1688
      %v1702 = vmul.f32 %v1700, %v1688
      %v1703 = vadd.f32 %v1701, 1e-05
      %v1704 = vadd.f32 %v1702, 1e-05
      %v1705 = vrsqrt.pop %v1703
      %v1706 = vrsqrt.pop %v1704
      %v1707 = vmul.f32 %v1691, %v1705
      %v1708 = vmul.f32 %v1692, %v1706
      %v1709 = vlaneseq
      %v1710 = vshrl.u32 %v1709, 7
      %v1711 = vsub.s32 0, %v1710
      %v1712 = vrot.slane %v537, %v1711
      %v1713 = vmul.f32 %v1707, %v1712
      %v1714 = vmul.f32 %v1708, %v1712
      %v1715 = vlaneseq
      %v1716 = vshrl.u32 %v1715, 7
      %v1717 = vsub.s32 0, %v1716
      %v1718 = vrot.slane %v538, %v1717
      %v1719 = vadd.f32 %v1713, %v1718
      %v1720 = vadd.f32 %v1714, %v1718
      %v1721 = vlaneseq
      %v1722 = vshrl.u32 %v1721, 7
      %v1723 = vsub.s32 0, %v1722
      %v1724 = vrot.slane %v534, %v1723
      %v1726 = vsel %vm575, %v1719, 0
      %v1729 = vsel %vm575, %v1720, 0
      %1731 = vmatprep.subr.mxu0 0.0
      %1732 = vmatpush1.msra.mxu0 %v524
      %1733 = vmatprep.subr.mxu0 0.0
      %1734 = vmatpush1.msra.mxu0 %v525
      %1735 = vmatprep.subr.mxu0 0.0
      %1736 = vmatpush1.msra.mxu0 %v526
      %1737 = vmatprep.subr.mxu0 0.0
      %1738 = vmatpush1.msra.mxu0 %v527
      %1739 = vmatprep.subr.mxu0 0.0
      %1740 = vmatpush1.msra.mxu0 0.0
      %1741 = vmatprep.subr.mxu0 0.0
      %1742 = vmatpush1.msra.mxu0 0.0
      %1743 = vmatprep.subr.mxu0 0.0
      %1744 = vmatpush1.msra.mxu0 0.0
      %1745 = vmatprep.subr.mxu0 0.0
      %1746 = vmatpush1.msra.mxu0 0.0
      %1747 = vmatprep.subr.mxu0 0.0
      %1748 = vmatpush1.msra.mxu0 0.0
      %1749 = vmatprep.subr.mxu0 0.0
      %1750 = vmatpush1.msra.mxu0 0.0
      %1751 = vmatprep.subr.mxu0 0.0
      %1752 = vmatpush1.msra.mxu0 0.0
      %1753 = vmatprep.subr.mxu0 0.0
      %1754 = vmatpush1.msra.mxu0 0.0
      %1755 = vmatprep.subr.mxu0 0.0
      %1756 = vmatpush1.msra.mxu0 0.0
      %1757 = vmatprep.subr.mxu0 0.0
      %1758 = vmatpush1.msra.mxu0 0.0
      %1759 = vmatprep.subr.mxu0 0.0
      %1760 = vmatpush1.msra.mxu0 0.0
      %1761 = vmatprep.subr.mxu0 0.0
      %1762 = vmatpush1.msra.mxu0 0.0
      %1763 = vmatprep.subr.mxu0 0.0
      %1764 = vmatpush1.msra.mxu0 0.0
      %1765 = vmatprep.subr.mxu0 0.0
      %1766 = vmatpush1.msra.mxu0 0.0
      %1767 = vmatprep.subr.mxu0 0.0
      %1768 = vmatpush1.msra.mxu0 0.0
      %1769 = vmatprep.subr.mxu0 0.0
      %1770 = vmatpush1.msra.mxu0 0.0
      %1771 = vmatprep.subr.mxu0 0.0
      %1772 = vmatpush1.msra.mxu0 0.0
      %1773 = vmatprep.subr.mxu0 0.0
      %1774 = vmatpush1.msra.mxu0 0.0
      %1775 = vmatprep.subr.mxu0 0.0
      %1776 = vmatpush1.msra.mxu0 0.0
      %1777 = vmatprep.subr.mxu0 0.0
      %1778 = vmatpush1.msra.mxu0 0.0
      %1779 = vmatprep.subr.mxu0 0.0
      %1780 = vmatpush1.msra.mxu0 0.0
      %1781 = vmatprep.subr.mxu0 0.0
      %1782 = vmatpush1.msra.mxu0 0.0
      %1783 = vmatprep.subr.mxu0 0.0
      %1784 = vmatpush1.msra.mxu0 0.0
      %1785 = vmatprep.subr.mxu0 0.0
      %1786 = vmatpush1.msra.mxu0 0.0
      %1787 = vmatprep.subr.mxu0 0.0
      %1788 = vmatpush1.msra.mxu0 0.0
      %1789 = vmatprep.subr.mxu0 0.0
      %1790 = vmatpush1.msra.mxu0 0.0
      %1791 = vmatprep.subr.mxu0 0.0
      %1792 = vmatpush1.msra.mxu0 0.0
      %1793 = vmatprep.subr.mxu0 0.0
      %1794 = vmatpush1.msra.mxu0 0.0
      %1795 = vmatprep.mubr.f32.mxu0 0.0
      %1796 = vmatmul.mubr.f32.gmra.mrb[0].mxu0 %v1726
      %v1797 = vpop.f32.mrb[0].mxu0
      %v1798 = vadd.f32 %v1724, %v1797
      %v1799 = vpop.f32.mrb[0].mxu0
      %1800 = vmatprep.mubr.f32.mxu0 0.0
      %1801 = vmatmul.mubr.f32.gmra.mrb[0].mxu0 %v1729
      %v1802 = vpop.f32.mrb[0].mxu0
      %v1803 = vadd.f32 %v1724, %v1802
      %v1804 = vpop.f32.mrb[0].mxu0
      %1805 = vdwg.mxu0
      %v1807 = vsel %vm545, %v1798, 0
      %v1810 = vsel %vm545, %v1803, 0
      %v1813 = vsel %vm545, %v649, 0
      %v1816 = vsel %vm545, %v654, 0
      %1818 = vmatprep.subr.mxu0 0.0
      %1819 = vmatpush1.xpose.msra.mxu0 %v1813
      %1820 = vmatprep.subr.mxu0 0.0
      %1821 = vmatpush1.xpose.msra.mxu0 %v1816
      %1822 = vmatprep.subr.mxu0 0.0
      %1823 = vmatpush1.xpose.msra.mxu0 0.0
      %1824 = vmatprep.subr.mxu0 0.0
      %1825 = vmatpush1.xpose.msra.mxu0 0.0
      %1826 = vmatprep.subr.mxu0 0.0
      %1827 = vmatpush1.xpose.msra.mxu0 0.0
      %1828 = vmatprep.subr.mxu0 0.0
      %1829 = vmatpush1.xpose.msra.mxu0 0.0
      %1830 = vmatprep.subr.mxu0 0.0
      %1831 = vmatpush1.xpose.msra.mxu0 0.0
      %1832 = vmatprep.subr.mxu0 0.0
      %1833 = vmatpush1.xpose.msra.mxu0 0.0
      %1834 = vmatprep.subr.mxu0 0.0
      %1835 = vmatpush1.xpose.msra.mxu0 0.0
      %1836 = vmatprep.subr.mxu0 0.0
      %1837 = vmatpush1.xpose.msra.mxu0 0.0
      %1838 = vmatprep.subr.mxu0 0.0
      %1839 = vmatpush1.xpose.msra.mxu0 0.0
      %1840 = vmatprep.subr.mxu0 0.0
      %1841 = vmatpush1.xpose.msra.mxu0 0.0
      %1842 = vmatprep.subr.mxu0 0.0
      %1843 = vmatpush1.xpose.msra.mxu0 0.0
      %1844 = vmatprep.subr.mxu0 0.0
      %1845 = vmatpush1.xpose.msra.mxu0 0.0
      %1846 = vmatprep.subr.mxu0 0.0
      %1847 = vmatpush1.xpose.msra.mxu0 0.0
      %1848 = vmatprep.subr.mxu0 0.0
      %1849 = vmatpush1.xpose.msra.mxu0 0.0
      %1850 = vmatprep.subr.mxu0 0.0
      %1851 = vmatpush1.xpose.msra.mxu0 0.0
      %1852 = vmatprep.subr.mxu0 0.0
      %1853 = vmatpush1.xpose.msra.mxu0 0.0
      %1854 = vmatprep.subr.mxu0 0.0
      %1855 = vmatpush1.xpose.msra.mxu0 0.0
      %1856 = vmatprep.subr.mxu0 0.0
      %1857 = vmatpush1.xpose.msra.mxu0 0.0
      %1858 = vmatprep.subr.mxu0 0.0
      %1859 = vmatpush1.xpose.msra.mxu0 0.0
      %1860 = vmatprep.subr.mxu0 0.0
      %1861 = vmatpush1.xpose.msra.mxu0 0.0
      %1862 = vmatprep.subr.mxu0 0.0
      %1863 = vmatpush1.xpose.msra.mxu0 0.0
      %1864 = vmatprep.subr.mxu0 0.0
      %1865 = vmatpush1.xpose.msra.mxu0 0.0
      %1866 = vmatprep.subr.mxu0 0.0
      %1867 = vmatpush1.xpose.msra.mxu0 0.0
      %1868 = vmatprep.subr.mxu0 0.0
      %1869 = vmatpush1.xpose.msra.mxu0 0.0
      %1870 = vmatprep.subr.mxu0 0.0
      %1871 = vmatpush1.xpose.msra.mxu0 0.0
      %1872 = vmatprep.subr.mxu0 0.0
      %1873 = vmatpush1.xpose.msra.mxu0 0.0
      %1874 = vmatprep.subr.mxu0 0.0
      %1875 = vmatpush1.xpose.msra.mxu0 0.0
      %1876 = vmatprep.subr.mxu0 0.0
      %1877 = vmatpush1.xpose.msra.mxu0 0.0
      %1878 = vmatprep.subr.mxu0 0.0
      %1879 = vmatpush1.xpose.msra.mxu0 0.0
      %1880 = vmatprep.subr.mxu0 0.0
      %1881 = vmatpush1.xpose.msra.mxu0 0.0
      %1882 = vmatprep.mubr.f32.mxu0 0.0
      %1883 = vmatmul.mubr.f32.gmra.mrb[0].mxu0 %v1807
      %v1884 = vpop.f32.mrb[0].mxu0
      %v1885 = vadd.f32 0.0, %v1884
      %v1886 = vpop.f32.mrb[0].mxu0
      %1887 = vmatprep.mubr.f32.mxu0 0.0
      %1888 = vmatmul.mubr.f32.gmra.mrb[0].mxu0 %v1810
      %v1889 = vpop.f32.mrb[0].mxu0
      %v1890 = vadd.f32 0.0, %v1889
      %v1891 = vpop.f32.mrb[0].mxu0
      %1892 = vdwg.mxu0
      %v1893 = vmul.f32 %v1885, 0.35355338
      %v1894 = vmul.f32 %v1890, 0.35355338
      %v1895 = vadd.f32 %v1893, %v558
      %v1896 = vadd.f32 %v1894, %v563
      %v1897 = vsel %vm842, %v1895, -inf
      %1898 = vmax.xlane.f32.xlu0 %v1897
      %v1899 = vpop.xlane.xlu0 %1898
      %v1900 = vsel %vm842, %v1896, -inf
      %1901 = vmax.xlane.f32.xlu0 %v1900
      %v1902 = vpop.xlane.xlu0 %1901
      %v1903 = vsub.f32 %v1895, %v1899
      %v1904 = vsub.f32 %v1896, %v1902
      %v1905 = vmul.f32 %v1903, 1.442695
      %v1906 = vpow.pop %v1905
      %v1907 = vmul.f32 %v1904, 1.442695
      %v1908 = vpow.pop %v1907
      %v1909 = vsel %vm842, %v1906, 0.0
      %1910 = vadd.xlane.f32.xlu0 %v1909
      %v1911 = vpop.xlane.xlu0 %1910
      %v1912 = vsel %vm842, %v1908, 0.0
      %1913 = vadd.xlane.f32.xlu0 %v1912
      %v1914 = vpop.xlane.xlu0 %1913
      %v1915 = vrcp.pop %v1911
      %v1916 = vrcp.pop %v1914
      %v1917 = vmul.f32 %v1906, %v1915
      %v1918 = vmul.f32 %v1908, %v1916
      %1919 = vrot.lane.b32.xlu0 %v649, 96
      %v1920 = vpop.permute.xlu0 %1919
      %1921 = vrot.lane.b32.xlu0 %v654, 96
      %v1922 = vpop.permute.xlu0 %1921
      %v1926 = vsel %vm842, %v1917, 0
      %v1929 = vsel %vm842, %v1918, 0
      %1931 = vmatprep.subr.mxu0 0.0
      %1932 = vmatpush1.msra.mxu0 %v1920
      %1933 = vmatprep.subr.mxu0 0.0
      %1934 = vmatpush1.msra.mxu0 %v1922
      %1935 = vmatprep.subr.mxu0 0.0
      %1936 = vmatpush1.msra.mxu0 0.0
      %1937 = vmatprep.subr.mxu0 0.0
      %1938 = vmatpush1.msra.mxu0 0.0
      %1939 = vmatprep.subr.mxu0 0.0
      %1940 = vmatpush1.msra.mxu0 0.0
      %1941 = vmatprep.subr.mxu0 0.0
      %1942 = vmatpush1.msra.mxu0 0.0
      %1943 = vmatprep.subr.mxu0 0.0
      %1944 = vmatpush1.msra.mxu0 0.0
      %1945 = vmatprep.subr.mxu0 0.0
      %1946 = vmatpush1.msra.mxu0 0.0
      %1947 = vmatprep.subr.mxu0 0.0
      %1948 = vmatpush1.msra.mxu0 0.0
      %1949 = vmatprep.subr.mxu0 0.0
      %1950 = vmatpush1.msra.mxu0 0.0
      %1951 = vmatprep.subr.mxu0 0.0
      %1952 = vmatpush1.msra.mxu0 0.0
      %1953 = vmatprep.subr.mxu0 0.0
      %1954 = vmatpush1.msra.mxu0 0.0
      %1955 = vmatprep.subr.mxu0 0.0
      %1956 = vmatpush1.msra.mxu0 0.0
      %1957 = vmatprep.subr.mxu0 0.0
      %1958 = vmatpush1.msra.mxu0 0.0
      %1959 = vmatprep.subr.mxu0 0.0
      %1960 = vmatpush1.msra.mxu0 0.0
      %1961 = vmatprep.subr.mxu0 0.0
      %1962 = vmatpush1.msra.mxu0 0.0
      %1963 = vmatprep.subr.mxu0 0.0
      %1964 = vmatpush1.msra.mxu0 0.0
      %1965 = vmatprep.subr.mxu0 0.0
      %1966 = vmatpush1.msra.mxu0 0.0
      %1967 = vmatprep.subr.mxu0 0.0
      %1968 = vmatpush1.msra.mxu0 0.0
      %1969 = vmatprep.subr.mxu0 0.0
      %1970 = vmatpush1.msra.mxu0 0.0
      %1971 = vmatprep.subr.mxu0 0.0
      %1972 = vmatpush1.msra.mxu0 0.0
      %1973 = vmatprep.subr.mxu0 0.0
      %1974 = vmatpush1.msra.mxu0 0.0
      %1975 = vmatprep.subr.mxu0 0.0
      %1976 = vmatpush1.msra.mxu0 0.0
      %1977 = vmatprep.subr.mxu0 0.0
      %1978 = vmatpush1.msra.mxu0 0.0
      %1979 = vmatprep.subr.mxu0 0.0
      %1980 = vmatpush1.msra.mxu0 0.0
      %1981 = vmatprep.subr.mxu0 0.0
      %1982 = vmatpush1.msra.mxu0 0.0
      %1983 = vmatprep.subr.mxu0 0.0
      %1984 = vmatpush1.msra.mxu0 0.0
      %1985 = vmatprep.subr.mxu0 0.0
      %1986 = vmatpush1.msra.mxu0 0.0
      %1987 = vmatprep.subr.mxu0 0.0
      %1988 = vmatpush1.msra.mxu0 0.0
      %1989 = vmatprep.subr.mxu0 0.0
      %1990 = vmatpush1.msra.mxu0 0.0
      %1991 = vmatprep.subr.mxu0 0.0
      %1992 = vmatpush1.msra.mxu0 0.0
      %1993 = vmatprep.subr.mxu0 0.0
      %1994 = vmatpush1.msra.mxu0 0.0
      %1995 = vmatprep.mubr.f32.mxu0 0.0
      %1996 = vmatmul.mubr.f32.gmra.mrb[0].mxu0 %v1926
      %v1997 = vpop.f32.mrb[0].mxu0
      %v1998 = vadd.f32 0.0, %v1997
      %v1999 = vpop.f32.mrb[0].mxu0
      %2000 = vmatprep.mubr.f32.mxu0 0.0
      %2001 = vmatmul.mubr.f32.gmra.mrb[0].mxu0 %v1929
      %v2002 = vpop.f32.mrb[0].mxu0
      %v2003 = vadd.f32 0.0, %v2002
      %v2004 = vpop.f32.mrb[0].mxu0
      %2005 = vdwg.mxu0
      %2006 = vrot.lane.b32.xlu0 %v1798, 120
      %v2007 = vpop.permute.xlu0 %2006
      %2008 = vrot.lane.b32.xlu0 %v1803, 120
      %v2009 = vpop.permute.xlu0 %2008
      %2010 = vrot.lane.b32.xlu0 %v649, 120
      %v2011 = vpop.permute.xlu0 %2010
      %2012 = vrot.lane.b32.xlu0 %v654, 120
      %v2013 = vpop.permute.xlu0 %2012
      %v2014 = vsel %vm545, %v2007, 0
      %v2016 = vsel %vm545, %v2009, 0
      %v2018 = vsel %vm545, %v2011, 0
      %v2020 = vsel %vm545, %v2013, 0
      %2022 = vmatprep.subr.mxu0 0.0
      %2023 = vmatpush1.xpose.msra.mxu0 %v2018
      %2024 = vmatprep.subr.mxu0 0.0
      %2025 = vmatpush1.xpose.msra.mxu0 %v2020
      %2026 = vmatprep.subr.mxu0 0.0
      %2027 = vmatpush1.xpose.msra.mxu0 0.0
      %2028 = vmatprep.subr.mxu0 0.0
      %2029 = vmatpush1.xpose.msra.mxu0 0.0
      %2030 = vmatprep.subr.mxu0 0.0
      %2031 = vmatpush1.xpose.msra.mxu0 0.0
      %2032 = vmatprep.subr.mxu0 0.0
      %2033 = vmatpush1.xpose.msra.mxu0 0.0
      %2034 = vmatprep.subr.mxu0 0.0
      %2035 = vmatpush1.xpose.msra.mxu0 0.0
      %2036 = vmatprep.subr.mxu0 0.0
      %2037 = vmatpush1.xpose.msra.mxu0 0.0
      %2038 = vmatprep.subr.mxu0 0.0
      %2039 = vmatpush1.xpose.msra.mxu0 0.0
      %2040 = vmatprep.subr.mxu0 0.0
      %2041 = vmatpush1.xpose.msra.mxu0 0.0
      %2042 = vmatprep.subr.mxu0 0.0
      %2043 = vmatpush1.xpose.msra.mxu0 0.0
      %2044 = vmatprep.subr.mxu0 0.0
      %2045 = vmatpush1.xpose.msra.mxu0 0.0
      %2046 = vmatprep.subr.mxu0 0.0
      %2047 = vmatpush1.xpose.msra.mxu0 0.0
      %2048 = vmatprep.subr.mxu0 0.0
      %2049 = vmatpush1.xpose.msra.mxu0 0.0
      %2050 = vmatprep.subr.mxu0 0.0
      %2051 = vmatpush1.xpose.msra.mxu0 0.0
      %2052 = vmatprep.subr.mxu0 0.0
      %2053 = vmatpush1.xpose.msra.mxu0 0.0
      %2054 = vmatprep.subr.mxu0 0.0
      %2055 = vmatpush1.xpose.msra.mxu0 0.0
      %2056 = vmatprep.subr.mxu0 0.0
      %2057 = vmatpush1.xpose.msra.mxu0 0.0
      %2058 = vmatprep.subr.mxu0 0.0
      %2059 = vmatpush1.xpose.msra.mxu0 0.0
      %2060 = vmatprep.subr.mxu0 0.0
      %2061 = vmatpush1.xpose.msra.mxu0 0.0
      %2062 = vmatprep.subr.mxu0 0.0
      %2063 = vmatpush1.xpose.msra.mxu0 0.0
      %2064 = vmatprep.subr.mxu0 0.0
      %2065 = vmatpush1.xpose.msra.mxu0 0.0
      %2066 = vmatprep.subr.mxu0 0.0
      %2067 = vmatpush1.xpose.msra.mxu0 0.0
      %2068 = vmatprep.subr.mxu0 0.0
      %2069 = vmatpush1.xpose.msra.mxu0 0.0
      %2070 = vmatprep.subr.mxu0 0.0
      %2071 = vmatpush1.xpose.msra.mxu0 0.0
      %2072 = vmatprep.subr.mxu0 0.0
      %2073 = vmatpush1.xpose.msra.mxu0 0.0
      %2074 = vmatprep.subr.mxu0 0.0
      %2075 = vmatpush1.xpose.msra.mxu0 0.0
      %2076 = vmatprep.subr.mxu0 0.0
      %2077 = vmatpush1.xpose.msra.mxu0 0.0
      %2078 = vmatprep.subr.mxu0 0.0
      %2079 = vmatpush1.xpose.msra.mxu0 0.0
      %2080 = vmatprep.subr.mxu0 0.0
      %2081 = vmatpush1.xpose.msra.mxu0 0.0
      %2082 = vmatprep.subr.mxu0 0.0
      %2083 = vmatpush1.xpose.msra.mxu0 0.0
      %2084 = vmatprep.subr.mxu0 0.0
      %2085 = vmatpush1.xpose.msra.mxu0 0.0
      %2086 = vmatprep.mubr.f32.mxu0 0.0
      %2087 = vmatmul.mubr.f32.gmra.mrb[0].mxu0 %v2014
      %v2088 = vpop.f32.mrb[0].mxu0
      %v2089 = vadd.f32 0.0, %v2088
      %v2090 = vpop.f32.mrb[0].mxu0
      %2091 = vmatprep.mubr.f32.mxu0 0.0
      %2092 = vmatmul.mubr.f32.gmra.mrb[0].mxu0 %v2016
      %v2093 = vpop.f32.mrb[0].mxu0
      %v2094 = vadd.f32 0.0, %v2093
      %v2095 = vpop.f32.mrb[0].mxu0
      %2096 = vdwg.mxu0
      %v2097 = vmul.f32 %v2089, 0.35355338
      %v2098 = vmul.f32 %v2094, 0.35355338
      %v2099 = vadd.f32 %v2097, %v558
      %v2100 = vadd.f32 %v2098, %v563
      %v2101 = vsel %vm842, %v2099, -inf
      %2102 = vmax.xlane.f32.xlu0 %v2101
      %v2103 = vpop.xlane.xlu0 %2102
      %v2104 = vsel %vm842, %v2100, -inf
      %2105 = vmax.xlane.f32.xlu0 %v2104
      %v2106 = vpop.xlane.xlu0 %2105
      %v2107 = vsub.f32 %v2099, %v2103
      %v2108 = vsub.f32 %v2100, %v2106
      %v2109 = vmul.f32 %v2107, 1.442695
      %v2110 = vpow.pop %v2109
      %v2111 = vmul.f32 %v2108, 1.442695
      %v2112 = vpow.pop %v2111
      %v2113 = vsel %vm842, %v2110, 0.0
      %2114 = vadd.xlane.f32.xlu0 %v2113
      %v2115 = vpop.xlane.xlu0 %2114
      %v2116 = vsel %vm842, %v2112, 0.0
      %2117 = vadd.xlane.f32.xlu0 %v2116
      %v2118 = vpop.xlane.xlu0 %2117
      %v2119 = vrcp.pop %v2115
      %v2120 = vrcp.pop %v2118
      %v2121 = vmul.f32 %v2110, %v2119
      %v2122 = vmul.f32 %v2112, %v2120
      %2123 = vrot.lane.b32.xlu0 %v649, 88
      %v2124 = vpop.permute.xlu0 %2123
      %2125 = vrot.lane.b32.xlu0 %v654, 88
      %v2126 = vpop.permute.xlu0 %2125
      %v2130 = vsel %vm842, %v2121, 0
      %v2133 = vsel %vm842, %v2122, 0
      %2135 = vmatprep.subr.mxu0 0.0
      %2136 = vmatpush1.msra.mxu0 %v2124
      %2137 = vmatprep.subr.mxu0 0.0
      %2138 = vmatpush1.msra.mxu0 %v2126
      %2139 = vmatprep.subr.mxu0 0.0
      %2140 = vmatpush1.msra.mxu0 0.0
      %2141 = vmatprep.subr.mxu0 0.0
      %2142 = vmatpush1.msra.mxu0 0.0
      %2143 = vmatprep.subr.mxu0 0.0
      %2144 = vmatpush1.msra.mxu0 0.0
      %2145 = vmatprep.subr.mxu0 0.0
      %2146 = vmatpush1.msra.mxu0 0.0
      %2147 = vmatprep.subr.mxu0 0.0
      %2148 = vmatpush1.msra.mxu0 0.0
      %2149 = vmatprep.subr.mxu0 0.0
      %2150 = vmatpush1.msra.mxu0 0.0
      %2151 = vmatprep.subr.mxu0 0.0
      %2152 = vmatpush1.msra.mxu0 0.0
      %2153 = vmatprep.subr.mxu0 0.0
      %2154 = vmatpush1.msra.mxu0 0.0
      %2155 = vmatprep.subr.mxu0 0.0
      %2156 = vmatpush1.msra.mxu0 0.0
      %2157 = vmatprep.subr.mxu0 0.0
      %2158 = vmatpush1.msra.mxu0 0.0
      %2159 = vmatprep.subr.mxu0 0.0
      %2160 = vmatpush1.msra.mxu0 0.0
      %2161 = vmatprep.subr.mxu0 0.0
      %2162 = vmatpush1.msra.mxu0 0.0
      %2163 = vmatprep.subr.mxu0 0.0
      %2164 = vmatpush1.msra.mxu0 0.0
      %2165 = vmatprep.subr.mxu0 0.0
      %2166 = vmatpush1.msra.mxu0 0.0
      %2167 = vmatprep.subr.mxu0 0.0
      %2168 = vmatpush1.msra.mxu0 0.0
      %2169 = vmatprep.subr.mxu0 0.0
      %2170 = vmatpush1.msra.mxu0 0.0
      %2171 = vmatprep.subr.mxu0 0.0
      %2172 = vmatpush1.msra.mxu0 0.0
      %2173 = vmatprep.subr.mxu0 0.0
      %2174 = vmatpush1.msra.mxu0 0.0
      %2175 = vmatprep.subr.mxu0 0.0
      %2176 = vmatpush1.msra.mxu0 0.0
      %2177 = vmatprep.subr.mxu0 0.0
      %2178 = vmatpush1.msra.mxu0 0.0
      %2179 = vmatprep.subr.mxu0 0.0
      %2180 = vmatpush1.msra.mxu0 0.0
      %2181 = vmatprep.subr.mxu0 0.0
      %2182 = vmatpush1.msra.mxu0 0.0
      %2183 = vmatprep.subr.mxu0 0.0
      %2184 = vmatpush1.msra.mxu0 0.0
      %2185 = vmatprep.subr.mxu0 0.0
      %2186 = vmatpush1.msra.mxu0 0.0
      %2187 = vmatprep.subr.mxu0 0.0
      %2188 = vmatpush1.msra.mxu0 0.0
      %2189 = vmatprep.subr.mxu0 0.0
      %2190 = vmatpush1.msra.mxu0 0.0
      %2191 = vmatprep.subr.mxu0 0.0
      %2192 = vmatpush1.msra.mxu0 0.0
      %2193 = vmatprep.subr.mxu0 0.0
      %2194 = vmatpush1.msra.mxu0 0.0
      %2195 = vmatprep.subr.mxu0 0.0
      %2196 = vmatpush1.msra.mxu0 0.0
      %2197 = vmatprep.subr.mxu0 0.0
      %2198 = vmatpush1.msra.mxu0 0.0
      %2199 = vmatprep.mubr.f32.mxu0 0.0
      %2200 = vmatmul.mubr.f32.gmra.mrb[0].mxu0 %v2130
      %v2201 = vpop.f32.mrb[0].mxu0
      %v2202 = vadd.f32 0.0, %v2201
      %v2203 = vpop.f32.mrb[0].mxu0
      %2204 = vmatprep.mubr.f32.mxu0 0.0
      %2205 = vmatmul.mubr.f32.gmra.mrb[0].mxu0 %v2133
      %v2206 = vpop.f32.mrb[0].mxu0
      %v2207 = vadd.f32 0.0, %v2206
      %v2208 = vpop.f32.mrb[0].mxu0
      %2209 = vdwg.mxu0
      %2210 = vrot.lane.b32.xlu0 %v1798, 112
      %v2211 = vpop.permute.xlu0 %2210
      %2212 = vrot.lane.b32.xlu0 %v1803, 112
      %v2213 = vpop.permute.xlu0 %2212
      %2214 = vrot.lane.b32.xlu0 %v649, 112
      %v2215 = vpop.permute.xlu0 %2214
      %2216 = vrot.lane.b32.xlu0 %v654, 112
      %v2217 = vpop.permute.xlu0 %2216
      %v2218 = vsel %vm545, %v2211, 0
      %v2220 = vsel %vm545, %v2213, 0
      %v2222 = vsel %vm545, %v2215, 0
      %v2224 = vsel %vm545, %v2217, 0
      %2226 = vmatprep.subr.mxu0 0.0
      %2227 = vmatpush1.xpose.msra.mxu0 %v2222
      %2228 = vmatprep.subr.mxu0 0.0
      %2229 = vmatpush1.xpose.msra.mxu0 %v2224
      %2230 = vmatprep.subr.mxu0 0.0
      %2231 = vmatpush1.xpose.msra.mxu0 0.0
      %2232 = vmatprep.subr.mxu0 0.0
      %2233 = vmatpush1.xpose.msra.mxu0 0.0
      %2234 = vmatprep.subr.mxu0 0.0
      %2235 = vmatpush1.xpose.msra.mxu0 0.0
      %2236 = vmatprep.subr.mxu0 0.0
      %2237 = vmatpush1.xpose.msra.mxu0 0.0
      %2238 = vmatprep.subr.mxu0 0.0
      %2239 = vmatpush1.xpose.msra.mxu0 0.0
      %2240 = vmatprep.subr.mxu0 0.0
      %2241 = vmatpush1.xpose.msra.mxu0 0.0
      %2242 = vmatprep.subr.mxu0 0.0
      %2243 = vmatpush1.xpose.msra.mxu0 0.0
      %2244 = vmatprep.subr.mxu0 0.0
      %2245 = vmatpush1.xpose.msra.mxu0 0.0
      %2246 = vmatprep.subr.mxu0 0.0
      %2247 = vmatpush1.xpose.msra.mxu0 0.0
      %2248 = vmatprep.subr.mxu0 0.0
      %2249 = vmatpush1.xpose.msra.mxu0 0.0
      %2250 = vmatprep.subr.mxu0 0.0
      %2251 = vmatpush1.xpose.msra.mxu0 0.0
      %2252 = vmatprep.subr.mxu0 0.0
      %2253 = vmatpush1.xpose.msra.mxu0 0.0
      %2254 = vmatprep.subr.mxu0 0.0
      %2255 = vmatpush1.xpose.msra.mxu0 0.0
      %2256 = vmatprep.subr.mxu0 0.0
      %2257 = vmatpush1.xpose.msra.mxu0 0.0
      %2258 = vmatprep.subr.mxu0 0.0
      %2259 = vmatpush1.xpose.msra.mxu0 0.0
      %2260 = vmatprep.subr.mxu0 0.0
      %2261 = vmatpush1.xpose.msra.mxu0 0.0
      %2262 = vmatprep.subr.mxu0 0.0
      %2263 = vmatpush1.xpose.msra.mxu0 0.0
      %2264 = vmatprep.subr.mxu0 0.0
      %2265 = vmatpush1.xpose.msra.mxu0 0.0
      %2266 = vmatprep.subr.mxu0 0.0
      %2267 = vmatpush1.xpose.msra.mxu0 0.0
      %2268 = vmatprep.subr.mxu0 0.0
      %2269 = vmatpush1.xpose.msra.mxu0 0.0
      %2270 = vmatprep.subr.mxu0 0.0
      %2271 = vmatpush1.xpose.msra.mxu0 0.0
      %2272 = vmatprep.subr.mxu0 0.0
      %2273 = vmatpush1.xpose.msra.mxu0 0.0
      %2274 = vmatprep.subr.mxu0 0.0
      %2275 = vmatpush1.xpose.msra.mxu0 0.0
      %2276 = vmatprep.subr.mxu0 0.0
      %2277 = vmatpush1.xpose.msra.mxu0 0.0
      %2278 = vmatprep.subr.mxu0 0.0
      %2279 = vmatpush1.xpose.msra.mxu0 0.0
      %2280 = vmatprep.subr.mxu0 0.0
      %2281 = vmatpush1.xpose.msra.mxu0 0.0
      %2282 = vmatprep.subr.mxu0 0.0
      %2283 = vmatpush1.xpose.msra.mxu0 0.0
      %2284 = vmatprep.subr.mxu0 0.0
      %2285 = vmatpush1.xpose.msra.mxu0 0.0
      %2286 = vmatprep.subr.mxu0 0.0
      %2287 = vmatpush1.xpose.msra.mxu0 0.0
      %2288 = vmatprep.subr.mxu0 0.0
      %2289 = vmatpush1.xpose.msra.mxu0 0.0
      %2290 = vmatprep.mubr.f32.mxu0 0.0
      %2291 = vmatmul.mubr.f32.gmra.mrb[0].mxu0 %v2218
      %v2292 = vpop.f32.mrb[0].mxu0
      %v2293 = vadd.f32 0.0, %v2292
      %v2294 = vpop.f32.mrb[0].mxu0
      %2295 = vmatprep.mubr.f32.mxu0 0.0
      %2296 = vmatmul.mubr.f32.gmra.mrb[0].mxu0 %v2220
      %v2297 = vpop.f32.mrb[0].mxu0
      %v2298 = vadd.f32 0.0, %v2297
      %v2299 = vpop.f32.mrb[0].mxu0
      %2300 = vdwg.mxu0
      %v2301 = vmul.f32 %v2293, 0.35355338
      %v2302 = vmul.f32 %v2298, 0.35355338
      %v2303 = vadd.f32 %v2301, %v558
      %v2304 = vadd.f32 %v2302, %v563
      %v2305 = vsel %vm842, %v2303, -inf
      %2306 = vmax.xlane.f32.xlu0 %v2305
      %v2307 = vpop.xlane.xlu0 %2306
      %v2308 = vsel %vm842, %v2304, -inf
      %2309 = vmax.xlane.f32.xlu0 %v2308
      %v2310 = vpop.xlane.xlu0 %2309
      %v2311 = vsub.f32 %v2303, %v2307
      %v2312 = vsub.f32 %v2304, %v2310
      %v2313 = vmul.f32 %v2311, 1.442695
      %v2314 = vpow.pop %v2313
      %v2315 = vmul.f32 %v2312, 1.442695
      %v2316 = vpow.pop %v2315
      %v2317 = vsel %vm842, %v2314, 0.0
      %2318 = vadd.xlane.f32.xlu0 %v2317
      %v2319 = vpop.xlane.xlu0 %2318
      %v2320 = vsel %vm842, %v2316, 0.0
      %2321 = vadd.xlane.f32.xlu0 %v2320
      %v2322 = vpop.xlane.xlu0 %2321
      %v2323 = vrcp.pop %v2319
      %v2324 = vrcp.pop %v2322
      %v2325 = vmul.f32 %v2314, %v2323
      %v2326 = vmul.f32 %v2316, %v2324
      %2327 = vrot.lane.b32.xlu0 %v649, 80
      %v2328 = vpop.permute.xlu0 %2327
      %2329 = vrot.lane.b32.xlu0 %v654, 80
      %v2330 = vpop.permute.xlu0 %2329
      %v2334 = vsel %vm842, %v2325, 0
      %v2337 = vsel %vm842, %v2326, 0
      %2339 = vmatprep.subr.mxu0 0.0
      %2340 = vmatpush1.msra.mxu0 %v2328
      %2341 = vmatprep.subr.mxu0 0.0
      %2342 = vmatpush1.msra.mxu0 %v2330
      %2343 = vmatprep.subr.mxu0 0.0
      %2344 = vmatpush1.msra.mxu0 0.0
      %2345 = vmatprep.subr.mxu0 0.0
      %2346 = vmatpush1.msra.mxu0 0.0
      %2347 = vmatprep.subr.mxu0 0.0
      %2348 = vmatpush1.msra.mxu0 0.0
      %2349 = vmatprep.subr.mxu0 0.0
      %2350 = vmatpush1.msra.mxu0 0.0
      %2351 = vmatprep.subr.mxu0 0.0
      %2352 = vmatpush1.msra.mxu0 0.0
      %2353 = vmatprep.subr.mxu0 0.0
      %2354 = vmatpush1.msra.mxu0 0.0
      %2355 = vmatprep.subr.mxu0 0.0
      %2356 = vmatpush1.msra.mxu0 0.0
      %2357 = vmatprep.subr.mxu0 0.0
      %2358 = vmatpush1.msra.mxu0 0.0
      %2359 = vmatprep.subr.mxu0 0.0
      %2360 = vmatpush1.msra.mxu0 0.0
      %2361 = vmatprep.subr.mxu0 0.0
      %2362 = vmatpush1.msra.mxu0 0.0
      %2363 = vmatprep.subr.mxu0 0.0
      %2364 = vmatpush1.msra.mxu0 0.0
      %2365 = vmatprep.subr.mxu0 0.0
      %2366 = vmatpush1.msra.mxu0 0.0
      %2367 = vmatprep.subr.mxu0 0.0
      %2368 = vmatpush1.msra.mxu0 0.0
      %2369 = vmatprep.subr.mxu0 0.0
      %2370 = vmatpush1.msra.mxu0 0.0
      %2371 = vmatprep.subr.mxu0 0.0
      %2372 = vmatpush1.msra.mxu0 0.0
      %2373 = vmatprep.subr.mxu0 0.0
      %2374 = vmatpush1.msra.mxu0 0.0
      %2375 = vmatprep.subr.mxu0 0.0
      %2376 = vmatpush1.msra.mxu0 0.0
      %2377 = vmatprep.subr.mxu0 0.0
      %2378 = vmatpush1.msra.mxu0 0.0
      %2379 = vmatprep.subr.mxu0 0.0
      %2380 = vmatpush1.msra.mxu0 0.0
      %2381 = vmatprep.subr.mxu0 0.0
      %2382 = vmatpush1.msra.mxu0 0.0
      %2383 = vmatprep.subr.mxu0 0.0
      %2384 = vmatpush1.msra.mxu0 0.0
      %2385 = vmatprep.subr.mxu0 0.0
      %2386 = vmatpush1.msra.mxu0 0.0
      %2387 = vmatprep.subr.mxu0 0.0
      %2388 = vmatpush1.msra.mxu0 0.0
      %2389 = vmatprep.subr.mxu0 0.0
      %2390 = vmatpush1.msra.mxu0 0.0
      %2391 = vmatprep.subr.mxu0 0.0
      %2392 = vmatpush1.msra.mxu0 0.0
      %2393 = vmatprep.subr.mxu0 0.0
      %2394 = vmatpush1.msra.mxu0 0.0
      %2395 = vmatprep.subr.mxu0 0.0
      %2396 = vmatpush1.msra.mxu0 0.0
      %2397 = vmatprep.subr.mxu0 0.0
      %2398 = vmatpush1.msra.mxu0 0.0
      %2399 = vmatprep.subr.mxu0 0.0
      %2400 = vmatpush1.msra.mxu0 0.0
      %2401 = vmatprep.subr.mxu0 0.0
      %2402 = vmatpush1.msra.mxu0 0.0
      %2403 = vmatprep.mubr.f32.mxu0 0.0
      %2404 = vmatmul.mubr.f32.gmra.mrb[0].mxu0 %v2334
      %v2405 = vpop.f32.mrb[0].mxu0
      %v2406 = vadd.f32 0.0, %v2405
      %v2407 = vpop.f32.mrb[0].mxu0
      %2408 = vmatprep.mubr.f32.mxu0 0.0
      %2409 = vmatmul.mubr.f32.gmra.mrb[0].mxu0 %v2337
      %v2410 = vpop.f32.mrb[0].mxu0
      %v2411 = vadd.f32 0.0, %v2410
      %v2412 = vpop.f32.mrb[0].mxu0
      %2413 = vdwg.mxu0
      %2414 = vrot.lane.b32.xlu0 %v1798, 104
      %v2415 = vpop.permute.xlu0 %2414
      %2416 = vrot.lane.b32.xlu0 %v1803, 104
      %v2417 = vpop.permute.xlu0 %2416
      %2418 = vrot.lane.b32.xlu0 %v649, 104
      %v2419 = vpop.permute.xlu0 %2418
      %2420 = vrot.lane.b32.xlu0 %v654, 104
      %v2421 = vpop.permute.xlu0 %2420
      %v2422 = vsel %vm545, %v2415, 0
      %v2424 = vsel %vm545, %v2417, 0
      %v2426 = vsel %vm545, %v2419, 0
      %v2428 = vsel %vm545, %v2421, 0
      %2430 = vmatprep.subr.mxu0 0.0
      %2431 = vmatpush1.xpose.msra.mxu0 %v2426
      %2432 = vmatprep.subr.mxu0 0.0
      %2433 = vmatpush1.xpose.msra.mxu0 %v2428
      %2434 = vmatprep.subr.mxu0 0.0
      %2435 = vmatpush1.xpose.msra.mxu0 0.0
      %2436 = vmatprep.subr.mxu0 0.0
      %2437 = vmatpush1.xpose.msra.mxu0 0.0
      %2438 = vmatprep.subr.mxu0 0.0
      %2439 = vmatpush1.xpose.msra.mxu0 0.0
      %2440 = vmatprep.subr.mxu0 0.0
      %2441 = vmatpush1.xpose.msra.mxu0 0.0
      %2442 = vmatprep.subr.mxu0 0.0
      %2443 = vmatpush1.xpose.msra.mxu0 0.0
      %2444 = vmatprep.subr.mxu0 0.0
      %2445 = vmatpush1.xpose.msra.mxu0 0.0
      %2446 = vmatprep.subr.mxu0 0.0
      %2447 = vmatpush1.xpose.msra.mxu0 0.0
      %2448 = vmatprep.subr.mxu0 0.0
      %2449 = vmatpush1.xpose.msra.mxu0 0.0
      %2450 = vmatprep.subr.mxu0 0.0
      %2451 = vmatpush1.xpose.msra.mxu0 0.0
      %2452 = vmatprep.subr.mxu0 0.0
      %2453 = vmatpush1.xpose.msra.mxu0 0.0
      %2454 = vmatprep.subr.mxu0 0.0
      %2455 = vmatpush1.xpose.msra.mxu0 0.0
      %2456 = vmatprep.subr.mxu0 0.0
      %2457 = vmatpush1.xpose.msra.mxu0 0.0
      %2458 = vmatprep.subr.mxu0 0.0
      %2459 = vmatpush1.xpose.msra.mxu0 0.0
      %2460 = vmatprep.subr.mxu0 0.0
      %2461 = vmatpush1.xpose.msra.mxu0 0.0
      %2462 = vmatprep.subr.mxu0 0.0
      %2463 = vmatpush1.xpose.msra.mxu0 0.0
      %2464 = vmatprep.subr.mxu0 0.0
      %2465 = vmatpush1.xpose.msra.mxu0 0.0
      %2466 = vmatprep.subr.mxu0 0.0
      %2467 = vmatpush1.xpose.msra.mxu0 0.0
      %2468 = vmatprep.subr.mxu0 0.0
      %2469 = vmatpush1.xpose.msra.mxu0 0.0
      %2470 = vmatprep.subr.mxu0 0.0
      %2471 = vmatpush1.xpose.msra.mxu0 0.0
      %2472 = vmatprep.subr.mxu0 0.0
      %2473 = vmatpush1.xpose.msra.mxu0 0.0
      %2474 = vmatprep.subr.mxu0 0.0
      %2475 = vmatpush1.xpose.msra.mxu0 0.0
      %2476 = vmatprep.subr.mxu0 0.0
      %2477 = vmatpush1.xpose.msra.mxu0 0.0
      %2478 = vmatprep.subr.mxu0 0.0
      %2479 = vmatpush1.xpose.msra.mxu0 0.0
      %2480 = vmatprep.subr.mxu0 0.0
      %2481 = vmatpush1.xpose.msra.mxu0 0.0
      %2482 = vmatprep.subr.mxu0 0.0
      %2483 = vmatpush1.xpose.msra.mxu0 0.0
      %2484 = vmatprep.subr.mxu0 0.0
      %2485 = vmatpush1.xpose.msra.mxu0 0.0
      %2486 = vmatprep.subr.mxu0 0.0
      %2487 = vmatpush1.xpose.msra.mxu0 0.0
      %2488 = vmatprep.subr.mxu0 0.0
      %2489 = vmatpush1.xpose.msra.mxu0 0.0
      %2490 = vmatprep.subr.mxu0 0.0
      %2491 = vmatpush1.xpose.msra.mxu0 0.0
      %2492 = vmatprep.subr.mxu0 0.0
      %2493 = vmatpush1.xpose.msra.mxu0 0.0
      %2494 = vmatprep.mubr.f32.mxu0 0.0
      %2495 = vmatmul.mubr.f32.gmra.mrb[0].mxu0 %v2422
      %v2496 = vpop.f32.mrb[0].mxu0
      %v2497 = vadd.f32 0.0, %v2496
      %v2498 = vpop.f32.mrb[0].mxu0
      %2499 = vmatprep.mubr.f32.mxu0 0.0
      %2500 = vmatmul.mubr.f32.gmra.mrb[0].mxu0 %v2424
      %v2501 = vpop.f32.mrb[0].mxu0
      %v2502 = vadd.f32 0.0, %v2501
      %v2503 = vpop.f32.mrb[0].mxu0
      %2504 = vdwg.mxu0
      %v2505 = vmul.f32 %v2497, 0.35355338
      %v2506 = vmul.f32 %v2502, 0.35355338
      %v2507 = vadd.f32 %v2505, %v558
      %v2508 = vadd.f32 %v2506, %v563
      %v2509 = vsel %vm842, %v2507, -inf
      %2510 = vmax.xlane.f32.xlu0 %v2509
      %v2511 = vpop.xlane.xlu0 %2510
      %v2512 = vsel %vm842, %v2508, -inf
      %2513 = vmax.xlane.f32.xlu0 %v2512
      %v2514 = vpop.xlane.xlu0 %2513
      %v2515 = vsub.f32 %v2507, %v2511
      %v2516 = vsub.f32 %v2508, %v2514
      %v2517 = vmul.f32 %v2515, 1.442695
      %v2518 = vpow.pop %v2517
      %v2519 = vmul.f32 %v2516, 1.442695
      %v2520 = vpow.pop %v2519
      %v2521 = vsel %vm842, %v2518, 0.0
      %2522 = vadd.xlane.f32.xlu0 %v2521
      %v2523 = vpop.xlane.xlu0 %2522
      %v2524 = vsel %vm842, %v2520, 0.0
      %2525 = vadd.xlane.f32.xlu0 %v2524
      %v2526 = vpop.xlane.xlu0 %2525
      %v2527 = vrcp.pop %v2523
      %v2528 = vrcp.pop %v2526
      %v2529 = vmul.f32 %v2518, %v2527
      %v2530 = vmul.f32 %v2520, %v2528
      %2531 = vrot.lane.b32.xlu0 %v649, 72
      %v2532 = vpop.permute.xlu0 %2531
      %2533 = vrot.lane.b32.xlu0 %v654, 72
      %v2534 = vpop.permute.xlu0 %2533
      %v2538 = vsel %vm842, %v2529, 0
      %v2541 = vsel %vm842, %v2530, 0
      %2543 = vmatprep.subr.mxu0 0.0
      %2544 = vmatpush1.msra.mxu0 %v2532
      %2545 = vmatprep.subr.mxu0 0.0
      %2546 = vmatpush1.msra.mxu0 %v2534
      %2547 = vmatprep.subr.mxu0 0.0
      %2548 = vmatpush1.msra.mxu0 0.0
      %2549 = vmatprep.subr.mxu0 0.0
      %2550 = vmatpush1.msra.mxu0 0.0
      %2551 = vmatprep.subr.mxu0 0.0
      %2552 = vmatpush1.msra.mxu0 0.0
      %2553 = vmatprep.subr.mxu0 0.0
      %2554 = vmatpush1.msra.mxu0 0.0
      %2555 = vmatprep.subr.mxu0 0.0
      %2556 = vmatpush1.msra.mxu0 0.0
      %2557 = vmatprep.subr.mxu0 0.0
      %2558 = vmatpush1.msra.mxu0 0.0
      %2559 = vmatprep.subr.mxu0 0.0
      %2560 = vmatpush1.msra.mxu0 0.0
      %2561 = vmatprep.subr.mxu0 0.0
      %2562 = vmatpush1.msra.mxu0 0.0
      %2563 = vmatprep.subr.mxu0 0.0
      %2564 = vmatpush1.msra.mxu0 0.0
      %2565 = vmatprep.subr.mxu0 0.0
      %2566 = vmatpush1.msra.mxu0 0.0
      %2567 = vmatprep.subr.mxu0 0.0
      %2568 = vmatpush1.msra.mxu0 0.0
      %2569 = vmatprep.subr.mxu0 0.0
      %2570 = vmatpush1.msra.mxu0 0.0
      %2571 = vmatprep.subr.mxu0 0.0
      %2572 = vmatpush1.msra.mxu0 0.0
      %2573 = vmatprep.subr.mxu0 0.0
      %2574 = vmatpush1.msra.mxu0 0.0
      %2575 = vmatprep.subr.mxu0 0.0
      %2576 = vmatpush1.msra.mxu0 0.0
      %2577 = vmatprep.subr.mxu0 0.0
      %2578 = vmatpush1.msra.mxu0 0.0
      %2579 = vmatprep.subr.mxu0 0.0
      %2580 = vmatpush1.msra.mxu0 0.0
      %2581 = vmatprep.subr.mxu0 0.0
      %2582 = vmatpush1.msra.mxu0 0.0
      %2583 = vmatprep.subr.mxu0 0.0
      %2584 = vmatpush1.msra.mxu0 0.0
      %2585 = vmatprep.subr.mxu0 0.0
      %2586 = vmatpush1.msra.mxu0 0.0
      %2587 = vmatprep.subr.mxu0 0.0
      %2588 = vmatpush1.msra.mxu0 0.0
      %2589 = vmatprep.subr.mxu0 0.0
      %2590 = vmatpush1.msra.mxu0 0.0
      %2591 = vmatprep.subr.mxu0 0.0
      %2592 = vmatpush1.msra.mxu0 0.0
      %2593 = vmatprep.subr.mxu0 0.0
      %2594 = vmatpush1.msra.mxu0 0.0
      %2595 = vmatprep.subr.mxu0 0.0
      %2596 = vmatpush1.msra.mxu0 0.0
      %2597 = vmatprep.subr.mxu0 0.0
      %2598 = vmatpush1.msra.mxu0 0.0
      %2599 = vmatprep.subr.mxu0 0.0
      %2600 = vmatpush1.msra.mxu0 0.0
      %2601 = vmatprep.subr.mxu0 0.0
      %2602 = vmatpush1.msra.mxu0 0.0
      %2603 = vmatprep.subr.mxu0 0.0
      %2604 = vmatpush1.msra.mxu0 0.0
      %2605 = vmatprep.subr.mxu0 0.0
      %2606 = vmatpush1.msra.mxu0 0.0
      %2607 = vmatprep.mubr.f32.mxu0 0.0
      %2608 = vmatmul.mubr.f32.gmra.mrb[0].mxu0 %v2538
      %v2609 = vpop.f32.mrb[0].mxu0
      %v2610 = vadd.f32 0.0, %v2609
      %v2611 = vpop.f32.mrb[0].mxu0
      %2612 = vmatprep.mubr.f32.mxu0 0.0
      %2613 = vmatmul.mubr.f32.gmra.mrb[0].mxu0 %v2541
      %v2614 = vpop.f32.mrb[0].mxu0
      %v2615 = vadd.f32 0.0, %v2614
      %v2616 = vpop.f32.mrb[0].mxu0
      %2617 = vdwg.mxu0
      %2620 = vrot.lane.b32.xlu0 %v2202, 8
      %v2621 = vpop.permute.xlu0 %2620
      %2622 = vrot.lane.b32.xlu0 %v2207, 8
      %v2623 = vpop.permute.xlu0 %2622
      %2628 = vrot.lane.b32.xlu0 %v2406, 16
      %v2629 = vpop.permute.xlu0 %2628
      %2630 = vrot.lane.b32.xlu0 %v2411, 16
      %v2631 = vpop.permute.xlu0 %2630
      %2636 = vrot.lane.b32.xlu0 %v2610, 24
      %v2637 = vpop.permute.xlu0 %2636
      %2638 = vrot.lane.b32.xlu0 %v2615, 24
      %v2639 = vpop.permute.xlu0 %2638
      %v2642 = vsel %vm545, %v1998, %v2621
      %v2643 = vsel %vm545, %v2003, %v2623
      %v2644 = vsel %vm842, %v2642, %v2629
      %v2645 = vsel %vm842, %v2643, %v2631
      %v2646 = vsel %vm1592, %v2644, %v2637
      %v2647 = vsel %vm1592, %v2645, %v2639
      %v2648 = vlaneseq
      %v2649 = vshrl.u32 %v2648, 7
      %v2650 = vsub.s32 0, %v2649
      %v2651 = vrot.slane %v535, %v2650
      %v2653 = vsel %vm575, %v2646, 0
      %v2656 = vsel %vm575, %v2647, 0
      %2658 = vmatprep.subr.mxu0 0.0
      %2659 = vmatpush1.msra.mxu0 %v529
      %2660 = vmatprep.subr.mxu0 0.0
      %2661 = vmatpush1.msra.mxu0 %v530
      %2662 = vmatprep.subr.mxu0 0.0
      %2663 = vmatpush1.msra.mxu0 %v531
      %2664 = vmatprep.subr.mxu0 0.0
      %2665 = vmatpush1.msra.mxu0 %v532
      %2666 = vmatprep.subr.mxu0 0.0
      %2667 = vmatpush1.msra.mxu0 0.0
      %2668 = vmatprep.subr.mxu0 0.0
      %2669 = vmatpush1.msra.mxu0 0.0
      %2670 = vmatprep.subr.mxu0 0.0
      %2671 = vmatpush1.msra.mxu0 0.0
      %2672 = vmatprep.subr.mxu0 0.0
      %2673 = vmatpush1.msra.mxu0 0.0
      %2674 = vmatprep.subr.mxu0 0.0
      %2675 = vmatpush1.msra.mxu0 0.0
      %2676 = vmatprep.subr.mxu0 0.0
      %2677 = vmatpush1.msra.mxu0 0.0
      %2678 = vmatprep.subr.mxu0 0.0
      %2679 = vmatpush1.msra.mxu0 0.0
      %2680 = vmatprep.subr.mxu0 0.0
      %2681 = vmatpush1.msra.mxu0 0.0
      %2682 = vmatprep.subr.mxu0 0.0
      %2683 = vmatpush1.msra.mxu0 0.0
      %2684 = vmatprep.subr.mxu0 0.0
      %2685 = vmatpush1.msra.mxu0 0.0
      %2686 = vmatprep.subr.mxu0 0.0
      %2687 = vmatpush1.msra.mxu0 0.0
      %2688 = vmatprep.subr.mxu0 0.0
      %2689 = vmatpush1.msra.mxu0 0.0
      %2690 = vmatprep.subr.mxu0 0.0
      %2691 = vmatpush1.msra.mxu0 0.0
      %2692 = vmatprep.subr.mxu0 0.0
      %2693 = vmatpush1.msra.mxu0 0.0
      %2694 = vmatprep.subr.mxu0 0.0
      %2695 = vmatpush1.msra.mxu0 0.0
      %2696 = vmatprep.subr.mxu0 0.0
      %2697 = vmatpush1.msra.mxu0 0.0
      %2698 = vmatprep.subr.mxu0 0.0
      %2699 = vmatpush1.msra.mxu0 0.0
      %2700 = vmatprep.subr.mxu0 0.0
      %2701 = vmatpush1.msra.mxu0 0.0
      %2702 = vmatprep.subr.mxu0 0.0
      %2703 = vmatpush1.msra.mxu0 0.0
      %2704 = vmatprep.subr.mxu0 0.0
      %2705 = vmatpush1.msra.mxu0 0.0
      %2706 = vmatprep.subr.mxu0 0.0
      %2707 = vmatpush1.msra.mxu0 0.0
      %2708 = vmatprep.subr.mxu0 0.0
      %2709 = vmatpush1.msra.mxu0 0.0
      %2710 = vmatprep.subr.mxu0 0.0
      %2711 = vmatpush1.msra.mxu0 0.0
      %2712 = vmatprep.subr.mxu0 0.0
      %2713 = vmatpush1.msra.mxu0 0.0
      %2714 = vmatprep.subr.mxu0 0.0
      %2715 = vmatpush1.msra.mxu0 0.0
      %2716 = vmatprep.subr.mxu0 0.0
      %2717 = vmatpush1.msra.mxu0 0.0
      %2718 = vmatprep.subr.mxu0 0.0
      %2719 = vmatpush1.msra.mxu0 0.0
      %2720 = vmatprep.subr.mxu0 0.0
      %2721 = vmatpush1.msra.mxu0 0.0
      %2722 = vmatprep.mubr.f32.mxu0 0.0
      %2723 = vmatmul.mubr.f32.gmra.mrb[0].mxu0 %v2653
      %v2724 = vpop.f32.mrb[0].mxu0
      %v2725 = vadd.f32 %v2651, %v2724
      %v2726 = vpop.f32.mrb[0].mxu0
      %2727 = vmatprep.mubr.f32.mxu0 0.0
      %2728 = vmatmul.mubr.f32.gmra.mrb[0].mxu0 %v2656
      %v2729 = vpop.f32.mrb[0].mxu0
      %v2730 = vadd.f32 %v2651, %v2729
      %v2731 = vpop.f32.mrb[0].mxu0
      %2732 = vdwg.mxu0
      %v2733 = vadd.f32 %v1719, %v2725
      %v2734 = vadd.f32 %v1720, %v2730
      %v2735 = vsel %vm575, %v2733, 0.0
      %2736 = vadd.xlane.f32.xlu0 %v2735
      %v2737 = vpop.xlane.xlu0 %2736
      %v2738 = vsel %vm575, %v2734, 0.0
      %2739 = vadd.xlane.f32.xlu0 %v2738
      %v2740 = vpop.xlane.xlu0 %2739
      %v2741 = vmul.f32 %v2737, %v1688
      %v2742 = vmul.f32 %v2740, %v1688
      %v2743 = vsub.f32 %v2733, %v2741
      %v2744 = vsub.f32 %v2734, %v2742
      %v2745 = vmul.f32 %v2743, %v2743
      %v2746 = vmul.f32 %v2744, %v2744
      %v2747 = vsel %vm575, %v2745, 0.0
      %2748 = vadd.xlane.f32.xlu0 %v2747
      %v2749 = vpop.xlane.xlu0 %2748
      %v2750 = vsel %vm575, %v2746, 0.0
      %2751 = vadd.xlane.f32.xlu0 %v2750
      %v2752 = vpop.xlane.xlu0 %2751
      %v2753 = vmul.f32 %v2749, %v1688
      %v2754 = vmul.f32 %v2752, %v1688
      %v2755 = vadd.f32 %v2753, 1e-05
      %v2756 = vadd.f32 %v2754, 1e-05
      %v2757 = vrsqrt.pop %v2755
      %v2758 = vrsqrt.pop %v2756
      %v2759 = vmul.f32 %v2743, %v2757
      %v2760 = vmul.f32 %v2744, %v2758
      %v2761 = vmul.f32 %v2759, %v1712
      %v2762 = vmul.f32 %v2760, %v1712
      %v2763 = vadd.f32 %v2761, %v1718
      %v2764 = vadd.f32 %v2762, %v1718
      %v2765 = vld [vmem:[%s10] sm:$0xff]
      %v2766 = vld [vmem:[%s10 + $0x8] sm:$0xff]
      %v2767 = vld [vmem:[%s10 + $0x10] sm:$0xff]
      %v2768 = vld [vmem:[%s10 + $0x18] sm:$0xff]
      %v2769 = vld [vmem:[%s11] sm:$0x1]
      %v2771 = vlaneseq
      %v2772 = vshrl.u32 %v2771, 7
      %v2773 = vsub.s32 0, %v2772
      %v2774 = vrot.slane %v2769, %v2773
      %v2777 = vsel %vm575, %v2763, 0
      %v2780 = vsel %vm575, %v2764, 0
      %2782 = vmatprep.subr.mxu0 0.0
      %2783 = vmatpush1.msra.mxu0 %v2765
      %2784 = vmatprep.subr.mxu0 0.0
      %2785 = vmatpush1.msra.mxu0 %v2766
      %2786 = vmatprep.subr.mxu0 0.0
      %2787 = vmatpush1.msra.mxu0 %v2767
      %2788 = vmatprep.subr.mxu0 0.0
      %2789 = vmatpush1.msra.mxu0 %v2768
      %2790 = vmatprep.subr.mxu0 0.0
      %2791 = vmatpush1.msra.mxu0 0.0
      %2792 = vmatprep.subr.mxu0 0.0
      %2793 = vmatpush1.msra.mxu0 0.0
      %2794 = vmatprep.subr.mxu0 0.0
      %2795 = vmatpush1.msra.mxu0 0.0
      %2796 = vmatprep.subr.mxu0 0.0
      %2797 = vmatpush1.msra.mxu0 0.0
      %2798 = vmatprep.subr.mxu0 0.0
      %2799 = vmatpush1.msra.mxu0 0.0
      %2800 = vmatprep.subr.mxu0 0.0
      %2801 = vmatpush1.msra.mxu0 0.0
      %2802 = vmatprep.subr.mxu0 0.0
      %2803 = vmatpush1.msra.mxu0 0.0
      %2804 = vmatprep.subr.mxu0 0.0
      %2805 = vmatpush1.msra.mxu0 0.0
      %2806 = vmatprep.subr.mxu0 0.0
      %2807 = vmatpush1.msra.mxu0 0.0
      %2808 = vmatprep.subr.mxu0 0.0
      %2809 = vmatpush1.msra.mxu0 0.0
      %2810 = vmatprep.subr.mxu0 0.0
      %2811 = vmatpush1.msra.mxu0 0.0
      %2812 = vmatprep.subr.mxu0 0.0
      %2813 = vmatpush1.msra.mxu0 0.0
      %2814 = vmatprep.subr.mxu0 0.0
      %2815 = vmatpush1.msra.mxu0 0.0
      %2816 = vmatprep.subr.mxu0 0.0
      %2817 = vmatpush1.msra.mxu0 0.0
      %2818 = vmatprep.subr.mxu0 0.0
      %2819 = vmatpush1.msra.mxu0 0.0
      %2820 = vmatprep.subr.mxu0 0.0
      %2821 = vmatpush1.msra.mxu0 0.0
      %2822 = vmatprep.subr.mxu0 0.0
      %2823 = vmatpush1.msra.mxu0 0.0
      %2824 = vmatprep.subr.mxu0 0.0
      %2825 = vmatpush1.msra.mxu0 0.0
      %2826 = vmatprep.subr.mxu0 0.0
      %2827 = vmatpush1.msra.mxu0 0.0
      %2828 = vmatprep.subr.mxu0 0.0
      %2829 = vmatpush1.msra.mxu0 0.0
      %2830 = vmatprep.subr.mxu0 0.0
      %2831 = vmatpush1.msra.mxu0 0.0
      %2832 = vmatprep.subr.mxu0 0.0
      %2833 = vmatpush1.msra.mxu0 0.0
      %2834 = vmatprep.subr.mxu0 0.0
      %2835 = vmatpush1.msra.mxu0 0.0
      %2836 = vmatprep.subr.mxu0 0.0
      %2837 = vmatpush1.msra.mxu0 0.0
      %2838 = vmatprep.subr.mxu0 0.0
      %2839 = vmatpush1.msra.mxu0 0.0
      %2840 = vmatprep.subr.mxu0 0.0
      %2841 = vmatpush1.msra.mxu0 0.0
      %2842 = vmatprep.subr.mxu0 0.0
      %2843 = vmatpush1.msra.mxu0 0.0
      %2844 = vmatprep.subr.mxu0 0.0
      %2845 = vmatpush1.msra.mxu0 0.0
      %2846 = vmatprep.mubr.f32.mxu0 0.0
      %2847 = vmatmul.mubr.f32.gmra.mrb[0].mxu0 %v2777
      %v2848 = vpop.f32.mrb[0].mxu0
      %v2849 = vadd.f32 %v2774, %v2848
      %v2850 = vpop.f32.mrb[0].mxu0
      %2851 = vmatprep.mubr.f32.mxu0 0.0
      %2852 = vmatmul.mubr.f32.gmra.mrb[0].mxu0 %v2780
      %v2853 = vpop.f32.mrb[0].mxu0
      %v2854 = vadd.f32 %v2774, %v2853
      %v2855 = vpop.f32.mrb[0].mxu0
      %2856 = vdwg.mxu0
      %v2857 = vmax.f32 %v2849, 0.0
      %v2858 = vmax.f32 %v2854, 0.0
      %v2859 = vld [vmem:[%s12] sm:$0xff]
      %v2860 = vld [vmem:[%s12 + $0x8] sm:$0xff]
      %v2861 = vld [vmem:[%s12 + $0x10] sm:$0xff]
      %v2862 = vld [vmem:[%s12 + $0x18] sm:$0xff]
      %v2863 = vld [vmem:[%s12 + $0x20] sm:$0xff]
      %v2864 = vld [vmem:[%s12 + $0x28] sm:$0xff]
      %v2865 = vld [vmem:[%s12 + $0x30] sm:$0xff]
      %v2866 = vld [vmem:[%s12 + $0x38] sm:$0xff]
      %v2867 = vlaneseq
      %v2868 = vshrl.u32 %v2867, 7
      %v2869 = vsub.s32 0, %v2868
      %v2870 = vrot.slane %v536, %v2869
      %vm2871 = vcmask 523264
      %v2873 = vsel %vm2871, %v2857, 0
      %v2876 = vsel %vm2871, %v2858, 0
      %2878 = vmatprep.subr.mxu0 0.0
      %2879 = vmatpush1.msra.mxu0 %v2859
      %2880 = vmatprep.subr.mxu0 0.0
      %2881 = vmatpush1.msra.mxu0 %v2860
      %2882 = vmatprep.subr.mxu0 0.0
      %2883 = vmatpush1.msra.mxu0 %v2861
      %2884 = vmatprep.subr.mxu0 0.0
      %2885 = vmatpush1.msra.mxu0 %v2862
      %2886 = vmatprep.subr.mxu0 0.0
      %2887 = vmatpush1.msra.mxu0 %v2863
      %2888 = vmatprep.subr.mxu0 0.0
      %2889 = vmatpush1.msra.mxu0 %v2864
      %2890 = vmatprep.subr.mxu0 0.0
      %2891 = vmatpush1.msra.mxu0 %v2865
      %2892 = vmatprep.subr.mxu0 0.0
      %2893 = vmatpush1.msra.mxu0 %v2866
      %2894 = vmatprep.subr.mxu0 0.0
      %2895 = vmatpush1.msra.mxu0 0.0
      %2896 = vmatprep.subr.mxu0 0.0
      %2897 = vmatpush1.msra.mxu0 0.0
      %2898 = vmatprep.subr.mxu0 0.0
      %2899 = vmatpush1.msra.mxu0 0.0
      %2900 = vmatprep.subr.mxu0 0.0
      %2901 = vmatpush1.msra.mxu0 0.0
      %2902 = vmatprep.subr.mxu0 0.0
      %2903 = vmatpush1.msra.mxu0 0.0
      %2904 = vmatprep.subr.mxu0 0.0
      %2905 = vmatpush1.msra.mxu0 0.0
      %2906 = vmatprep.subr.mxu0 0.0
      %2907 = vmatpush1.msra.mxu0 0.0
      %2908 = vmatprep.subr.mxu0 0.0
      %2909 = vmatpush1.msra.mxu0 0.0
      %2910 = vmatprep.subr.mxu0 0.0
      %2911 = vmatpush1.msra.mxu0 0.0
      %2912 = vmatprep.subr.mxu0 0.0
      %2913 = vmatpush1.msra.mxu0 0.0
      %2914 = vmatprep.subr.mxu0 0.0
      %2915 = vmatpush1.msra.mxu0 0.0
      %2916 = vmatprep.subr.mxu0 0.0
      %2917 = vmatpush1.msra.mxu0 0.0
      %2918 = vmatprep.subr.mxu0 0.0
      %2919 = vmatpush1.msra.mxu0 0.0
      %2920 = vmatprep.subr.mxu0 0.0
      %2921 = vmatpush1.msra.mxu0 0.0
      %2922 = vmatprep.subr.mxu0 0.0
      %2923 = vmatpush1.msra.mxu0 0.0
      %2924 = vmatprep.subr.mxu0 0.0
      %2925 = vmatpush1.msra.mxu0 0.0
      %2926 = vmatprep.subr.mxu0 0.0
      %2927 = vmatpush1.msra.mxu0 0.0
      %2928 = vmatprep.subr.mxu0 0.0
      %2929 = vmatpush1.msra.mxu0 0.0
      %2930 = vmatprep.subr.mxu0 0.0
      %2931 = vmatpush1.msra.mxu0 0.0
      %2932 = vmatprep.subr.mxu0 0.0
      %2933 = vmatpush1.msra.mxu0 0.0
      %2934 = vmatprep.subr.mxu0 0.0
      %2935 = vmatpush1.msra.mxu0 0.0
      %2936 = vmatprep.subr.mxu0 0.0
      %2937 = vmatpush1.msra.mxu0 0.0
      %2938 = vmatprep.subr.mxu0 0.0
      %2939 = vmatpush1.msra.mxu0 0.0
      %2940 = vmatprep.subr.mxu0 0.0
      %2941 = vmatpush1.msra.mxu0 0.0
      %2942 = vmatprep.mubr.f32.mxu0 0.0
      %2943 = vmatmul.mubr.f32.gmra.mrb[0].mxu0 %v2873
      %v2944 = vpop.f32.mrb[0].mxu0
      %v2945 = vadd.f32 %v2870, %v2944
      %v2946 = vpop.f32.mrb[0].mxu0
      %2947 = vmatprep.mubr.f32.mxu0 0.0
      %2948 = vmatmul.mubr.f32.gmra.mrb[0].mxu0 %v2876
      %v2949 = vpop.f32.mrb[0].mxu0
      %v2950 = vadd.f32 %v2870, %v2949
      %v2951 = vpop.f32.mrb[0].mxu0
      %2952 = vdwg.mxu0
      %v2953 = vadd.f32 %v2763, %v2945
      %v2954 = vadd.f32 %v2764, %v2950
      %v2955 = vsel %vm575, %v2953, 0.0
      %2956 = vadd.xlane.f32.xlu0 %v2955
      %v2957 = vpop.xlane.xlu0 %2956
      %v2958 = vsel %vm575, %v2954, 0.0
      %2959 = vadd.xlane.f32.xlu0 %v2958
      %v2960 = vpop.xlane.xlu0 %2959
      %v2961 = vmul.f32 %v2957, %v1688
      %v2962 = vmul.f32 %v2960, %v1688
      %v2963 = vsub.f32 %v2953, %v2961
      %v2964 = vsub.f32 %v2954, %v2962
      %v2965 = vmul.f32 %v2963, %v2963
      %v2966 = vmul.f32 %v2964, %v2964
      %v2967 = vsel %vm575, %v2965, 0.0
      %2968 = vadd.xlane.f32.xlu0 %v2967
      %v2969 = vpop.xlane.xlu0 %2968
      %v2970 = vsel %vm575, %v2966, 0.0
      %2971 = vadd.xlane.f32.xlu0 %v2970
      %v2972 = vpop.xlane.xlu0 %2971
      %v2973 = vmul.f32 %v2969, %v1688
      %v2974 = vmul.f32 %v2972, %v1688
      %v2975 = vadd.f32 %v2973, 1e-05
      %v2976 = vadd.f32 %v2974, 1e-05
      %v2977 = vrsqrt.pop %v2975
      %v2978 = vrsqrt.pop %v2976
      %v2979 = vmul.f32 %v2963, %v2977
      %v2980 = vmul.f32 %v2964, %v2978
      %v2981 = vmul.f32 %v2979, %v1712
      %v2982 = vmul.f32 %v2980, %v1712
      %v2983 = vadd.f32 %v2981, %v1718
      %v2984 = vadd.f32 %v2982, %v1718
      %2985 = vst.msk [vmem:[%s514] sm:$0xff] %vm575, %v2983
      %2986 = vst.msk [vmem:[%s514 + $0x8] sm:$0xff] %vm575, %v2984
      %p2987 = scmp.lt.s32.totalorder %s24, 1
      %s2988 = scalar_select %p2987, %s24, 1
      %s2989 = smul.addr %s2988, 2
      %s2990 = smul.addr %s2989, 8
      %s2991 = scalar_lea.vmem %s13, %s2990
      // Predicated region
      $region73: #{decoder_layer.1} parent=71 // pred_check
        %p2992 = pneg %p339
      $region74: #{decoder_layer.1} parent=71 // pred_check_branch
        %2994 = sbr.rel (%p2992) target = $region76
      $region75: #{decoder_layer.1} parent=71 // pred_region
        _
      $region76: #{decoder_layer.1} parent=71 // pred_fallthru
        _
    $region72: #{decoder_layer.1} parent=5 // pred_fallthru
      _
    %p2995 = scmp.le.s32.totalorder 2, %s19
    // Predicated region
    $region77: #{decoder_layer.1} parent=5 // pred_check
      %p2996 = pneg %p2995
    $region78: #{decoder_layer.1} parent=5 // pred_check_branch
      %2998 = sbr.rel (%p2996) target = $region80
    $region79: #{decoder_layer.1} parent=5 // pred_region
      %s2999 = ssub.s32 %s19, 2
      // Predicated region
      $region81: #{decoder_layer.1} parent=79 // pred_check
        %p3000 = pneg %p345
      $region82: #{decoder_layer.1} parent=79 // pred_check_branch
        %3002 = sbr.rel (%p3000) target = $region84
      $region83: #{decoder_layer.1} parent=79 // pred_region
        %p3003 = scmp.lt.s32.totalorder %s25, 1
        %s3004 = scalar_select %p3003, %s25, 1
        %s3005 = smul.addr %s3004, 2
        %s3006 = smul.addr %s3005, 8
        %s3007 = scalar_lea.vmem %s13, %s3006
      $region84: #{decoder_layer.1} parent=79 // pred_fallthru
        _
    $region80: #{decoder_layer.1} parent=5 // pred_fallthru
      _
  $region6: #{decoder_layer.1} parent=0 // loop_footer
    %s23 = sadd.s32 1, %s19
  $region7: #{decoder_layer.1} parent=0 // loop_footer_branch
    %18 = sbr.rel target = $region3
  $region8: #{decoder_layer.1} parent=0 // loop_exit
    _

</llo_original>
